<compile_context>
chip_gen: v5e
topology: v5e:2x2
jax: 0.10.0
libtpu: 0.0.40
codegen_flags: <defaults>
</compile_context>

<pallas_src>
import functools

import jax
import jax.numpy as jnp
from jax.experimental import pallas as pl
from jax.experimental.pallas import tpu as pltpu


def _conv3d_kernel(x_ref, w_ref, b_ref, o_ref, *,
                   kt, kh, kw, st, sh, sw, dt, dh, dw,
                   t_out, h_out, w_out):
    """One grid step computes the full output volume of one batch element.

    x_ref : (1, Tp, Hp, Wp, C_in)           zero-padded activations (VMEM)
    w_ref : (C_out, kt*kh*kw*C_in)          im2col'd weights
    b_ref : (C_out, 1)                      bias (f32)
    o_ref : (1, C_out, t_out*h_out*w_out)   lane-dense output
    """
    c_in = x_ref.shape[-1]
    m = t_out * h_out * w_out
    span_t = (t_out - 1) * st + 1
    span_h = (h_out - 1) * sh + 1
    span_w = (w_out - 1) * sw + 1

    xv = x_ref[0]                                   # (Tp, Hp, Wp, C_in)

    # im2col: one (m, C_in) slab per kernel tap, concatenated along K.
    # The per-tap reshape only collapses leading dims (minor dim stays C_in),
    # and the single concat + single dot replaces 27 tiny MXU pushes/pops.
    taps = []
    for ikt in range(kt):
        for ikh in range(kh):
            for ikw in range(kw):
                tap = xv[ikt * dt: ikt * dt + span_t: st,
                         ikh * dh: ikh * dh + span_h: sh,
                         ikw * dw: ikw * dw + span_w: sw, :]
                taps.append(tap.reshape(m, c_in))
    patches = jnp.concatenate(taps, axis=1)         # (m, K), K=(ikt,ikh,ikw,ci)

    # (C_out, K) . (m, K)^T -> (C_out, m): one MXU contraction with K=108 and
    # the result's minor dim = m, so the store epilogue is unmasked.
    acc = jax.lax.dot_general(
        w_ref[...], patches,
        dimension_numbers=(((1,), (1,)), ((), ())),
        preferred_element_type=jnp.float32)
    acc = acc + b_ref[...]                          # (C_out, 1) broadcast
    o_ref[0] = acc.astype(o_ref.dtype)


def pad_conv3d(x_ncthw, weight_oikkk, bias, *, stride=1, dilation=1,
               compute_dtype=None):
    """PadConv3d forward (zero "same" padding + Conv3d), PyTorch layouts.

    x_ncthw      : (N, C_in, T, H, W)
    weight_oikkk : (C_out, C_in, KT, KH, KW)
    bias         : (C_out,)
    compute_dtype: optional MXU dtype (e.g. jnp.bfloat16 on v6e/v7x);
                   accumulation is always f32 and the output keeps x's dtype.
    """
    if isinstance(stride, int):
        st = sh = sw = stride
    else:
        st, sh, sw = stride
    if isinstance(dilation, int):
        dt = dh = dw = dilation
    else:
        dt, dh, dw = dilation

    n, c_in, t, h, w = x_ncthw.shape
    c_out, c_in_w, kt, kh, kw = weight_oikkk.shape
    assert c_in == c_in_w
    # TODO(synk): groups > 1 and the spectral_norm path (active when bias=False)
    # are not implemented; defaults (groups=1, bias=True, pad='zeropad') are
    # reproduced exactly.

    pt, ph, pw = (kt // 2) * dt, (kh // 2) * dh, (kw // 2) * dw
    out_dtype = x_ncthw.dtype

    # --- glue: channels-last + zero pad (ZeroPad3d) ---
    x = jnp.transpose(x_ncthw, (0, 2, 3, 4, 1))          # (N, T, H, W, C_in)
    if compute_dtype is not None:
        x = x.astype(compute_dtype)
    # TODO(synk): for large volumes, fuse the pad into the kernel's input DMA
    # (allow_input_fusion / in-kernel border masking) and tile T with a halo
    # so the resident VMEM block stays within v7x's 64 MiB budget.
    x = jnp.pad(x, ((0, 0), (pt, pt), (ph, ph), (pw, pw), (0, 0)))
    tp, hp, wp = t + 2 * pt, h + 2 * ph, w + 2 * pw

    t_out = (tp - (kt - 1) * dt - 1) // st + 1
    h_out = (hp - (kh - 1) * dh - 1) // sh + 1
    w_out = (wp - (kw - 1) * dw - 1) // sw + 1
    m = t_out * h_out * w_out
    k_dim = kt * kh * kw * c_in

    # im2col'd weights: (C_out, KT*KH*KW*C_in) with K ordered (ikt, ikh, ikw, ci)
    w_mat = jnp.transpose(weight_oikkk, (0, 2, 3, 4, 1)).reshape(c_out, k_dim)
    if compute_dtype is not None:
        w_mat = w_mat.astype(compute_dtype)
    b_mat = bias.astype(jnp.float32).reshape(c_out, 1)

    kernel = functools.partial(
        _conv3d_kernel,
        kt=kt, kh=kh, kw=kw, st=st, sh=sh, sw=sw, dt=dt, dh=dh, dw=dw,
        t_out=t_out, h_out=h_out, w_out=w_out)

    out = pl.pallas_call(
        kernel,
        out_shape=jax.ShapeDtypeStruct((n, c_out, m), out_dtype),
        grid=(n,),
        in_specs=[
            pl.BlockSpec((1, tp, hp, wp, c_in), lambda b: (b, 0, 0, 0, 0)),
            pl.BlockSpec((c_out, k_dim), lambda b: (0, 0)),
            pl.BlockSpec((c_out, 1), lambda b: (0, 0)),
        ],
        out_specs=pl.BlockSpec((1, c_out, m), lambda b: (b, 0, 0)),
        compiler_params=pltpu.CompilerParams(
            dimension_semantics=("parallel",)),
    )(x, w_mat, b_mat)

    # (N, C_out, M) -> (N, C_out, T_out, H_out, W_out): pure reshape, the
    # kernel already emits channel-major data — no transpose needed here.
    return out.reshape(n, c_out, t_out, h_out, w_out)


if __name__ == "__main__":
    # Module config: PadConv3d(in_channels=4, out_channels=8, kernel_size=3,
    #                          stride=1, dilation=1, bias=True, groups=1)
    N, C_IN, C_OUT = 2, 4, 8
    T, H, W = 4, 8, 8
    K = 3
    STRIDE, DILATION = 1, 1

    key = jax.random.PRNGKey(0)
    kx, kw_, kb = jax.random.split(key, 3)

    x = jax.random.normal(kx, (N, C_IN, T, H, W), dtype=jnp.float32)
    fan_in = C_IN * K * K * K
    bound = 1.0 / (fan_in ** 0.5)
    weight = jax.random.uniform(kw_, (C_OUT, C_IN, K, K, K),
                                minval=-bound, maxval=bound, dtype=jnp.float32)
    bias = jax.random.uniform(kb, (C_OUT,), minval=-bound, maxval=bound,
                              dtype=jnp.float32)

    # f32 path — tight check against the XLA reference.
    out = pad_conv3d(x, weight, bias, stride=STRIDE, dilation=DILATION)
    out = jax.block_until_ready(out)

    pt = ph = pw = (K // 2) * DILATION
    ref = jax.lax.conv_general_dilated(
        x, weight,
        window_strides=(STRIDE, STRIDE, STRIDE),
        padding=((pt, pt), (ph, ph), (pw, pw)),
        rhs_dilation=(DILATION, DILATION, DILATION),
        dimension_numbers=("NCDHW", "OIDHW", "NCDHW"),
        precision=jax.lax.Precision.HIGHEST,
    ) + bias.reshape(1, C_OUT, 1, 1, 1)

    assert out.shape == ref.shape, (out.shape, ref.shape)
    assert jnp.allclose(out, ref, atol=1e-3, rtol=1e-3), \
        float(jnp.max(jnp.abs(out - ref)))

    # bf16 compute path (bf16-native MXUs on v6e/v7x) — loose check.
    out_bf16 = pad_conv3d(x, weight, bias, stride=STRIDE, dilation=DILATION,
                          compute_dtype=jnp.bfloat16)
    out_bf16 = jax.block_until_ready(out_bf16)
    assert jnp.allclose(out_bf16, ref, atol=1e-1, rtol=1e-1), \
        float(jnp.max(jnp.abs(out_bf16 - ref)))

    print("KERNEL_OK")
</pallas_src>

<mosaic_0001>
module attributes {stable_mosaic.version = 11 : i64} {
  func.func @_conv3d_kernel(%arg0: i32, %arg1: memref<1x6x10x10x4xf32, #tpu.memory_space<vmem>>, %arg2: memref<8x108xf32, #tpu.memory_space<vmem>>, %arg3: memref<8x1xf32, #tpu.memory_space<vmem>>, %arg4: memref<1x8x256xf32, #tpu.memory_space<vmem>>) attributes {dimension_semantics = [#tpu.dimension_semantics<parallel>], iteration_bounds = array<i64: 2>, scalar_prefetch = 0 : i64, scratch_operands = 0 : i64, tpu.core_type = #tpu.core_type<tc>, window_params = [{transform_indices = @transform_0, window_bounds = array<i64: 1, 6, 10, 10, 4>}, {pipeline_mode = #tpu.pipeline_mode<synchronous>, transform_indices = @transform_1, window_bounds = array<i64: 8, 108>}, {pipeline_mode = #tpu.pipeline_mode<synchronous>, transform_indices = @transform_2, window_bounds = array<i64: 8, 1>}, {transform_indices = @transform_3, window_bounds = array<i64: 1, 8, 256>}]} {
    %c0 = arith.constant 0 : index
    %c0_0 = arith.constant 0 : index
    %c0_1 = arith.constant 0 : index
    %c0_2 = arith.constant 0 : index
    %c0_3 = arith.constant 0 : index
    %0 = vector.load %arg1[%c0, %c0_0, %c0_1, %c0_2, %c0_3] : memref<1x6x10x10x4xf32, #tpu.memory_space<vmem>>, vector<1x6x10x10x4xf32>
    %1 = vector.shape_cast %0 : vector<1x6x10x10x4xf32> to vector<6x10x10x4xf32>
    %2 = vector.extract_strided_slice %1 {offsets = [0, 0, 0, 0], sizes = [4, 8, 8, 4], strides = [1, 1, 1, 1]} : vector<6x10x10x4xf32> to vector<4x8x8x4xf32>
    %3 = vector.shape_cast %2 : vector<4x8x8x4xf32> to vector<256x4xf32>
    %4 = vector.extract_strided_slice %1 {offsets = [0, 0, 1, 0], sizes = [4, 8, 8, 4], strides = [1, 1, 1, 1]} : vector<6x10x10x4xf32> to vector<4x8x8x4xf32>
    %5 = vector.shape_cast %4 : vector<4x8x8x4xf32> to vector<256x4xf32>
    %6 = vector.extract_strided_slice %1 {offsets = [0, 0, 2, 0], sizes = [4, 8, 8, 4], strides = [1, 1, 1, 1]} : vector<6x10x10x4xf32> to vector<4x8x8x4xf32>
    %7 = vector.shape_cast %6 : vector<4x8x8x4xf32> to vector<256x4xf32>
    %8 = vector.extract_strided_slice %1 {offsets = [0, 1, 0, 0], sizes = [4, 8, 8, 4], strides = [1, 1, 1, 1]} : vector<6x10x10x4xf32> to vector<4x8x8x4xf32>
    %9 = vector.shape_cast %8 : vector<4x8x8x4xf32> to vector<256x4xf32>
    %10 = vector.extract_strided_slice %1 {offsets = [0, 1, 1, 0], sizes = [4, 8, 8, 4], strides = [1, 1, 1, 1]} : vector<6x10x10x4xf32> to vector<4x8x8x4xf32>
    %11 = vector.shape_cast %10 : vector<4x8x8x4xf32> to vector<256x4xf32>
    %12 = vector.extract_strided_slice %1 {offsets = [0, 1, 2, 0], sizes = [4, 8, 8, 4], strides = [1, 1, 1, 1]} : vector<6x10x10x4xf32> to vector<4x8x8x4xf32>
    %13 = vector.shape_cast %12 : vector<4x8x8x4xf32> to vector<256x4xf32>
    %14 = vector.extract_strided_slice %1 {offsets = [0, 2, 0, 0], sizes = [4, 8, 8, 4], strides = [1, 1, 1, 1]} : vector<6x10x10x4xf32> to vector<4x8x8x4xf32>
    %15 = vector.shape_cast %14 : vector<4x8x8x4xf32> to vector<256x4xf32>
    %16 = vector.extract_strided_slice %1 {offsets = [0, 2, 1, 0], sizes = [4, 8, 8, 4], strides = [1, 1, 1, 1]} : vector<6x10x10x4xf32> to vector<4x8x8x4xf32>
    %17 = vector.shape_cast %16 : vector<4x8x8x4xf32> to vector<256x4xf32>
    %18 = vector.extract_strided_slice %1 {offsets = [0, 2, 2, 0], sizes = [4, 8, 8, 4], strides = [1, 1, 1, 1]} : vector<6x10x10x4xf32> to vector<4x8x8x4xf32>
    %19 = vector.shape_cast %18 : vector<4x8x8x4xf32> to vector<256x4xf32>
    %20 = vector.extract_strided_slice %1 {offsets = [1, 0, 0, 0], sizes = [4, 8, 8, 4], strides = [1, 1, 1, 1]} : vector<6x10x10x4xf32> to vector<4x8x8x4xf32>
    %21 = vector.shape_cast %20 : vector<4x8x8x4xf32> to vector<256x4xf32>
    %22 = vector.extract_strided_slice %1 {offsets = [1, 0, 1, 0], sizes = [4, 8, 8, 4], strides = [1, 1, 1, 1]} : vector<6x10x10x4xf32> to vector<4x8x8x4xf32>
    %23 = vector.shape_cast %22 : vector<4x8x8x4xf32> to vector<256x4xf32>
    %24 = vector.extract_strided_slice %1 {offsets = [1, 0, 2, 0], sizes = [4, 8, 8, 4], strides = [1, 1, 1, 1]} : vector<6x10x10x4xf32> to vector<4x8x8x4xf32>
    %25 = vector.shape_cast %24 : vector<4x8x8x4xf32> to vector<256x4xf32>
    %26 = vector.extract_strided_slice %1 {offsets = [1, 1, 0, 0], sizes = [4, 8, 8, 4], strides = [1, 1, 1, 1]} : vector<6x10x10x4xf32> to vector<4x8x8x4xf32>
    %27 = vector.shape_cast %26 : vector<4x8x8x4xf32> to vector<256x4xf32>
    %28 = vector.extract_strided_slice %1 {offsets = [1, 1, 1, 0], sizes = [4, 8, 8, 4], strides = [1, 1, 1, 1]} : vector<6x10x10x4xf32> to vector<4x8x8x4xf32>
    %29 = vector.shape_cast %28 : vector<4x8x8x4xf32> to vector<256x4xf32>
    %30 = vector.extract_strided_slice %1 {offsets = [1, 1, 2, 0], sizes = [4, 8, 8, 4], strides = [1, 1, 1, 1]} : vector<6x10x10x4xf32> to vector<4x8x8x4xf32>
    %31 = vector.shape_cast %30 : vector<4x8x8x4xf32> to vector<256x4xf32>
    %32 = vector.extract_strided_slice %1 {offsets = [1, 2, 0, 0], sizes = [4, 8, 8, 4], strides = [1, 1, 1, 1]} : vector<6x10x10x4xf32> to vector<4x8x8x4xf32>
    %33 = vector.shape_cast %32 : vector<4x8x8x4xf32> to vector<256x4xf32>
    %34 = vector.extract_strided_slice %1 {offsets = [1, 2, 1, 0], sizes = [4, 8, 8, 4], strides = [1, 1, 1, 1]} : vector<6x10x10x4xf32> to vector<4x8x8x4xf32>
    %35 = vector.shape_cast %34 : vector<4x8x8x4xf32> to vector<256x4xf32>
    %36 = vector.extract_strided_slice %1 {offsets = [1, 2, 2, 0], sizes = [4, 8, 8, 4], strides = [1, 1, 1, 1]} : vector<6x10x10x4xf32> to vector<4x8x8x4xf32>
    %37 = vector.shape_cast %36 : vector<4x8x8x4xf32> to vector<256x4xf32>
    %38 = vector.extract_strided_slice %1 {offsets = [2, 0, 0, 0], sizes = [4, 8, 8, 4], strides = [1, 1, 1, 1]} : vector<6x10x10x4xf32> to vector<4x8x8x4xf32>
    %39 = vector.shape_cast %38 : vector<4x8x8x4xf32> to vector<256x4xf32>
    %40 = vector.extract_strided_slice %1 {offsets = [2, 0, 1, 0], sizes = [4, 8, 8, 4], strides = [1, 1, 1, 1]} : vector<6x10x10x4xf32> to vector<4x8x8x4xf32>
    %41 = vector.shape_cast %40 : vector<4x8x8x4xf32> to vector<256x4xf32>
    %42 = vector.extract_strided_slice %1 {offsets = [2, 0, 2, 0], sizes = [4, 8, 8, 4], strides = [1, 1, 1, 1]} : vector<6x10x10x4xf32> to vector<4x8x8x4xf32>
    %43 = vector.shape_cast %42 : vector<4x8x8x4xf32> to vector<256x4xf32>
    %44 = vector.extract_strided_slice %1 {offsets = [2, 1, 0, 0], sizes = [4, 8, 8, 4], strides = [1, 1, 1, 1]} : vector<6x10x10x4xf32> to vector<4x8x8x4xf32>
    %45 = vector.shape_cast %44 : vector<4x8x8x4xf32> to vector<256x4xf32>
    %46 = vector.extract_strided_slice %1 {offsets = [2, 1, 1, 0], sizes = [4, 8, 8, 4], strides = [1, 1, 1, 1]} : vector<6x10x10x4xf32> to vector<4x8x8x4xf32>
    %47 = vector.shape_cast %46 : vector<4x8x8x4xf32> to vector<256x4xf32>
    %48 = vector.extract_strided_slice %1 {offsets = [2, 1, 2, 0], sizes = [4, 8, 8, 4], strides = [1, 1, 1, 1]} : vector<6x10x10x4xf32> to vector<4x8x8x4xf32>
    %49 = vector.shape_cast %48 : vector<4x8x8x4xf32> to vector<256x4xf32>
    %50 = vector.extract_strided_slice %1 {offsets = [2, 2, 0, 0], sizes = [4, 8, 8, 4], strides = [1, 1, 1, 1]} : vector<6x10x10x4xf32> to vector<4x8x8x4xf32>
    %51 = vector.shape_cast %50 : vector<4x8x8x4xf32> to vector<256x4xf32>
    %52 = vector.extract_strided_slice %1 {offsets = [2, 2, 1, 0], sizes = [4, 8, 8, 4], strides = [1, 1, 1, 1]} : vector<6x10x10x4xf32> to vector<4x8x8x4xf32>
    %53 = vector.shape_cast %52 : vector<4x8x8x4xf32> to vector<256x4xf32>
    %54 = vector.extract_strided_slice %1 {offsets = [2, 2, 2, 0], sizes = [4, 8, 8, 4], strides = [1, 1, 1, 1]} : vector<6x10x10x4xf32> to vector<4x8x8x4xf32>
    %55 = vector.shape_cast %54 : vector<4x8x8x4xf32> to vector<256x4xf32>
    %56 = tpu.concatenate %3, %5, %7, %9, %11, %13, %15, %17, %19, %21, %23, %25, %27, %29, %31, %33 in 1 : vector<256x4xf32>, vector<256x4xf32>, vector<256x4xf32>, vector<256x4xf32>, vector<256x4xf32>, vector<256x4xf32>, vector<256x4xf32>, vector<256x4xf32>, vector<256x4xf32>, vector<256x4xf32>, vector<256x4xf32>, vector<256x4xf32>, vector<256x4xf32>, vector<256x4xf32>, vector<256x4xf32>, vector<256x4xf32> -> vector<256x64xf32>
    %57 = tpu.concatenate %35, %37, %39, %41, %43, %45, %47, %49, %51, %53, %55 in 1 : vector<256x4xf32>, vector<256x4xf32>, vector<256x4xf32>, vector<256x4xf32>, vector<256x4xf32>, vector<256x4xf32>, vector<256x4xf32>, vector<256x4xf32>, vector<256x4xf32>, vector<256x4xf32>, vector<256x4xf32> -> vector<256x44xf32>
    %58 = tpu.concatenate %56, %57 in 1 : vector<256x64xf32>, vector<256x44xf32> -> vector<256x108xf32>
    %c0_4 = arith.constant 0 : index
    %c0_5 = arith.constant 0 : index
    %59 = vector.load %arg2[%c0_4, %c0_5] : memref<8x108xf32, #tpu.memory_space<vmem>>, vector<8x108xf32>
    %cst = arith.constant dense<0.000000e+00> : vector<8x256xf32>
    %60 = tpu.matmul %59, %58, %cst {dimension_numbers = #tpu.dot_dimension_numbers<[1], [1], [0], [0], [0, 0, 1, 0], [], []>} : vector<8x108xf32>, vector<256x108xf32>, vector<8x256xf32> -> vector<8x256xf32>
    %c0_6 = arith.constant 0 : index
    %c0_7 = arith.constant 0 : index
    %61 = vector.load %arg3[%c0_6, %c0_7] : memref<8x1xf32, #tpu.memory_space<vmem>>, vector<8x1xf32>
    %62 = vector.broadcast %61 : vector<8x1xf32> to vector<8x256xf32>
    %63 = arith.addf %60, %62 : vector<8x256xf32>
    %c0_8 = arith.constant 0 : index
    %c0_9 = arith.constant 0 : index
    %c0_10 = arith.constant 0 : index
    %64 = vector.load %arg4[%c0_8, %c0_9, %c0_10] : memref<1x8x256xf32, #tpu.memory_space<vmem>>, vector<1x8x256xf32>
    %65 = vector.shape_cast %64 : vector<1x8x256xf32> to vector<8x256xf32>
    %66 = vector.shape_cast %63 : vector<8x256xf32> to vector<1x8x256xf32>
    tpu.vector_store %arg4[%c0_8, %c0_9, %c0_10], %66 {strides = array<i32>} : memref<1x8x256xf32, #tpu.memory_space<vmem>>, vector<1x8x256xf32>,
    return
  }
  func.func @transform_0(%arg0: i32) -> (i32, i32, i32, i32, i32) {
    %c0_i32 = arith.constant 0 : i32
    %c0_i32_0 = arith.constant 0 : i32
    %c0_i32_1 = arith.constant 0 : i32
    %c0_i32_2 = arith.constant 0 : i32
    %c0_i32_3 = arith.constant 0 : i32
    return %arg0, %c0_i32, %c0_i32_0, %c0_i32_1, %c0_i32_2 : i32, i32, i32, i32, i32
  }
  func.func @transform_1(%arg0: i32) -> (i32, i32) {
    %c0_i32 = arith.constant 0 : i32
    %c0_i32_0 = arith.constant 0 : i32
    %c0_i32_1 = arith.constant 0 : i32
    return %c0_i32, %c0_i32_0 : i32, i32
  }
  func.func @transform_2(%arg0: i32) -> (i32, i32) {
    %c0_i32 = arith.constant 0 : i32
    %c0_i32_0 = arith.constant 0 : i32
    %c0_i32_1 = arith.constant 0 : i32
    return %c0_i32, %c0_i32_0 : i32, i32
  }
  func.func @transform_3(%arg0: i32) -> (i32, i32, i32) {
    %c0_i32 = arith.constant 0 : i32
    %c0_i32_0 = arith.constant 0 : i32
    %c0_i32_1 = arith.constant 0 : i32
    return %arg0, %c0_i32, %c0_i32_0 : i32, i32, i32
  }
}

</mosaic_0001>

<llo_original>
// kernel: tpu_custom_call.1
$region0: #{tpu_custom_call.1}
  #allocation0 [shape = 'u32[]', space=smem, size = 0x4, offset = 0x4, fixed_abs, tag = 'smem constant byte address 0x4 - core index']
  #allocation1 [shape = 'u32[72,128]{1,0:T(1,128)}', space=vmem, size = 0x9000, scoped, tag = 'internal scratch']
  %s0 = inlined_call_operand.vmem [shape: f32[2,6,10,10,4], index: 0, kind: input, shape index: {}]
  %s1 = inlined_call_operand.vmem [shape: f32[8,108], index: 1, kind: input, shape index: {}]
  %s2 = inlined_call_operand.vmem [shape: f32[8,1], index: 2, kind: input, shape index: {}]
  %s3 = inlined_call_operand.hbm [shape: f32[2,8,256], index: 3, kind: output, shape index: {}]
  %s4 = sld [smem:[#allocation0]]
  $region45: #{tpu_custom_call.1} parent=0
    _
  %s6 = ssub.s32 1, %s4
  %s7 = scalar_select 0, %s6, %s4
  $region1: #{tpu_custom_call.1} parent=0
    #allocation2 [shape = 'u8[16384]{0}', space=vmem, size = 0x4000, scoped, tag = 'output window, operand 0']
    #allocation3 [shape = 's32[2]{0}', space=sflag, size = 0x8, scoped, tag = 'scoped memory for tpu_custom_call.1']
    %8 = vsyncpa [#allocation3], 0
    %s9 = scalar_lea.sflag [#allocation3], 1
    %10 = vsyncpa %s9, 0
    loop: start=0, step=1, limit=4
    $region2: #{tpu_custom_call.1} parent=1 // loop_pre_header
      _
    $region3: #{tpu_custom_call.1} parent=1 // loop_header
      %s12 = sphi 0, %s16
      %p13 = scmp.ge.s32.totalorder %s12, 4
      %s22 = sphi 0, %s24
      %s25 = sphi 0, %s22
      %s26 = sphi 0, %s25
      %s42 = sphi 0, %s26
      %s46 = sphi 0, %s46
      %s48 = sphi 0, %s46
      %s49 = sphi 0, %s48
      %s63 = sphi 0, %s49
      %s67 = sphi 0, %s67
      %s69 = sphi 0, %s67
      %s70 = sphi 0, %s69
      %s84 = sphi 0, %s70
      %s90 = sphi 0, %s92
      %s93 = sphi 0, %s90
      %s94 = sphi 0, %s93
      %s110 = sphi 0, %s94
    $region4: #{tpu_custom_call.1} parent=1 // loop_header_branch
      %15 = sbr.rel (%p13) target = $region8
    $region5: #{tpu_custom_call.1} parent=1 // loop_body
      %s17 = ssub.s32 %s12, 1
      %s18 = ssub.s32 %s12, 2
      %s19 = sadd.s32 %s12, 1
      %s20 = ssub.s32 %s12, %s19
      %p21 = scmp.eq.s32.totalorder %s20, 0
      %s23 = sadd.s32 %s22, 1
      %s24 = scalar_select %p21, %s22, %s23
      %p27 = pneg %p21
      %p28 = scmp.eq.s32.totalorder %s12, 1
      %p29 = por %p27, %p28
      %p30 = scmp.ne.s32.totalorder %s22, %s25
      %p31 = scmp.eq.s32.totalorder %s12, 0
      %p32 = por %p30, %p31
      %p33 = scmp.ne.s32.totalorder %s22, %s25
      %p34 = scmp.eq.s32.totalorder %s17, 1
      %p35 = por %p33, %p34
      %p36 = scmp.ne.s32.totalorder %s25, %s26
      %p37 = scmp.eq.s32.totalorder %s17, 0
      %p38 = por %p36, %p37
      %p39 = scmp.ne.s32.totalorder %s25, %s26
      %p40 = scmp.eq.s32.totalorder %s18, 1
      %p41 = por %p39, %p40
      %p43 = scmp.ne.s32.totalorder %s26, %s42
      %p44 = scmp.eq.s32.totalorder %s18, 0
      %p45 = por %p43, %p44
      %s47 = sadd.s32 %s46, 1
      %p50 = scmp.eq.s32.totalorder %s12, 1
      %p51 = scmp.ne.s32.totalorder %s46, %s48
      %p52 = scmp.eq.s32.totalorder %s12, 0
      %p53 = por %p51, %p52
      %p54 = scmp.ne.s32.totalorder %s46, %s48
      %p55 = scmp.eq.s32.totalorder %s17, 1
      %p56 = por %p54, %p55
      %p57 = scmp.ne.s32.totalorder %s48, %s49
      %p58 = scmp.eq.s32.totalorder %s17, 0
      %p59 = por %p57, %p58
      %p60 = scmp.ne.s32.totalorder %s48, %s49
      %p61 = scmp.eq.s32.totalorder %s18, 1
      %p62 = por %p60, %p61
      %p64 = scmp.ne.s32.totalorder %s49, %s63
      %p65 = scmp.eq.s32.totalorder %s18, 0
      %p66 = por %p64, %p65
      %s68 = sadd.s32 %s67, 1
      %p71 = scmp.eq.s32.totalorder %s12, 1
      %p72 = scmp.ne.s32.totalorder %s67, %s69
      %p73 = scmp.eq.s32.totalorder %s12, 0
      %p74 = por %p72, %p73
      %p75 = scmp.ne.s32.totalorder %s67, %s69
      %p76 = scmp.eq.s32.totalorder %s17, 1
      %p77 = por %p75, %p76
      %p78 = scmp.ne.s32.totalorder %s69, %s70
      %p79 = scmp.eq.s32.totalorder %s17, 0
      %p80 = por %p78, %p79
      %p81 = scmp.ne.s32.totalorder %s69, %s70
      %p82 = scmp.eq.s32.totalorder %s18, 1
      %p83 = por %p81, %p82
      %p85 = scmp.ne.s32.totalorder %s70, %s84
      %p86 = scmp.eq.s32.totalorder %s18, 0
      %p87 = por %p85, %p86
      %s88 = ssub.s32 %s12, %s19
      %p89 = scmp.eq.s32.totalorder %s88, 0
      %s91 = sadd.s32 %s90, 1
      %s92 = scalar_select %p89, %s90, %s91
      %p95 = pneg %p89
      %p96 = scmp.eq.s32.totalorder %s12, 1
      %p97 = por %p95, %p96
      %p98 = scmp.ne.s32.totalorder %s90, %s93
      %p99 = scmp.eq.s32.totalorder %s12, 0
      %p100 = por %p98, %p99
      %p101 = scmp.ne.s32.totalorder %s90, %s93
      %p102 = scmp.eq.s32.totalorder %s17, 1
      %p103 = por %p101, %p102
      %p104 = scmp.ne.s32.totalorder %s93, %s94
      %p105 = scmp.eq.s32.totalorder %s17, 0
      %p106 = por %p104, %p105
      %p107 = scmp.ne.s32.totalorder %s93, %s94
      %p108 = scmp.eq.s32.totalorder %s18, 1
      %p109 = por %p107, %p108
      %p111 = scmp.ne.s32.totalorder %s94, %s110
      %p112 = scmp.eq.s32.totalorder %s18, 0
      %p113 = por %p111, %p112
      %p114 = scmp.le.s32.totalorder 1, %s12
      %p115 = scmp.lt.s32.totalorder %s12, 3
      %p116 = pnand %p114, %p115
      %p117 = pneg %p116
      // Predicated region
      $region9: #{tpu_custom_call.1} parent=5 // pred_check
        _
      $region10: #{tpu_custom_call.1} parent=5 // pred_check_branch
        %119 = sbr.rel (%p116) target = $region12
      $region11: #{tpu_custom_call.1} parent=5 // pred_region
        %s120 = ssub.s32 %s12, 1
        // Predicated region
        $region13: #{tpu_custom_call.1} parent=11 // pred_check
          %p121 = pneg %p59
        $region14: #{tpu_custom_call.1} parent=11 // pred_check_branch
          %123 = sbr.rel (%p121) target = $region16
        $region15: #{tpu_custom_call.1} parent=11 // pred_region
          _
        $region16: #{tpu_custom_call.1} parent=11 // pred_fallthru
          _
        // Predicated region
        $region17: #{tpu_custom_call.1} parent=11 // pred_check
          %p124 = pneg %p80
        $region18: #{tpu_custom_call.1} parent=11 // pred_check_branch
          %126 = sbr.rel (%p124) target = $region20
        $region19: #{tpu_custom_call.1} parent=11 // pred_region
          _
        $region20: #{tpu_custom_call.1} parent=11 // pred_fallthru
          _
      $region12: #{tpu_custom_call.1} parent=5 // pred_fallthru
        _
      %p127 = scmp.lt.s32.totalorder %s12, 2
      // Predicated region
      $region21: #{tpu_custom_call.1} parent=5 // pred_check
        %p128 = pneg %p127
      $region22: #{tpu_custom_call.1} parent=5 // pred_check_branch
        %130 = sbr.rel (%p128) target = $region24
      $region23: #{tpu_custom_call.1} parent=5 // pred_region
        // Predicated region
        $region25: #{tpu_custom_call.1} parent=23 // pred_check
          %p131 = pneg %p32
        $region26: #{tpu_custom_call.1} parent=23 // pred_check_branch
          %133 = sbr.rel (%p131) target = $region28
        $region27: #{tpu_custom_call.1} parent=23 // pred_region
          %p134 = scmp.lt.s32.totalorder %s12, 1
          %s135 = scalar_select %p134, %s12, 1
          %s136 = smul.addr %s135, 120
          %s137 = smul.addr %s136, 8
          %s138 = scalar_lea.vmem %s0, %s137
        $region28: #{tpu_custom_call.1} parent=23 // pred_fallthru
          _
      $region24: #{tpu_custom_call.1} parent=5 // pred_fallthru
        _
      %p139 = scmp.le.s32.totalorder 1, %s12
      %p140 = scmp.lt.s32.totalorder %s12, 3
      %p141 = pnand %p139, %p140
      %p142 = pneg %p141
      // Predicated region
      $region29: #{tpu_custom_call.1} parent=5 // pred_check
        _
      $region30: #{tpu_custom_call.1} parent=5 // pred_check_branch
        %144 = sbr.rel (%p141) target = $region32
      $region31: #{tpu_custom_call.1} parent=5 // pred_region
        %s145 = ssub.s32 %s12, 1
        %p146 = scmp.lt.s32.totalorder %s17, 1
        %s147 = scalar_select %p146, %s17, 1
        %s148 = smul.addr %s147, 120
        %s149 = smul.addr %s148, 8
        %s150 = scalar_lea.vmem %s0, %s149
        %p151 = pneg %p38
        %p152 = pneg %p35
        %p153 = pneg %p59
        %p154 = pneg %p56
        %p155 = pneg %p80
        %p156 = pneg %p77
        %p157 = pneg %p106
        %p158 = pneg %p103
        %s159 = sand.u32 %s93, 1
        %s160 = scalar_lea.sflag [#allocation3], %s159
        %s161 = sand.u32 %s93, 1
        %s162 = smul.addr %s161, 16
        %s163 = scalar_lea.vmem [#allocation2], %s162
        %p164 = scmp.lt.s32.totalorder %s17, 1
        %s165 = scalar_select %p164, %s17, 1
        %s166 = smul.addr %s165, 120
        %s167 = smul.addr %s166, 8
        %s168 = scalar_lea.vmem %s0, %s167
        %v169 = vld [vmem:[%s168] sm:$0xff]
        %v170 = vld [vmem:[%s168 + $0x8] sm:$0x3]
        %v171 = vld [vmem:[%s168 + $0x10] sm:$0xff]
        %v172 = vld [vmem:[%s168 + $0x18] sm:$0x3]
        %v173 = vld [vmem:[%s168 + $0x20] sm:$0xff]
        %v174 = vld [vmem:[%s168 + $0x28] sm:$0x3]
        %v175 = vld [vmem:[%s168 + $0x30] sm:$0xff]
        %v176 = vld [vmem:[%s168 + $0x38] sm:$0x3]
        %v177 = vld [vmem:[%s168 + $0x40] sm:$0xff]
        %v178 = vld [vmem:[%s168 + $0x48] sm:$0x3]
        %v179 = vld [vmem:[%s168 + $0x50] sm:$0xff]
        %v180 = vld [vmem:[%s168 + $0x58] sm:$0x3]
        %v181 = vld [vmem:[%s168 + $0x60] sm:$0xff]
        %v182 = vld [vmem:[%s168 + $0x68] sm:$0x3]
        %v183 = vld [vmem:[%s168 + $0x70] sm:$0xff]
        %v184 = vld [vmem:[%s168 + $0x78] sm:$0x3]
        %v185 = vld [vmem:[%s168 + $0x80] sm:$0xff]
        %v186 = vld [vmem:[%s168 + $0x88] sm:$0x3]
        %v187 = vld [vmem:[%s168 + $0x90] sm:$0xff]
        %v188 = vld [vmem:[%s168 + $0x98] sm:$0x3]
        %v189 = vld [vmem:[%s168 + $0xa0] sm:$0xff]
        %v190 = vld [vmem:[%s168 + $0xa8] sm:$0x3]
        %v191 = vld [vmem:[%s168 + $0xb0] sm:$0xff]
        %v192 = vld [vmem:[%s168 + $0xb8] sm:$0x3]
        %v193 = vld [vmem:[%s168 + $0xc0] sm:$0xff]
        %v194 = vld [vmem:[%s168 + $0xc8] sm:$0x3]
        %v195 = vld [vmem:[%s168 + $0xd0] sm:$0xff]
        %v196 = vld [vmem:[%s168 + $0xd8] sm:$0x3]
        %v197 = vld [vmem:[%s168 + $0xe0] sm:$0xff]
        %v198 = vld [vmem:[%s168 + $0xe8] sm:$0x3]
        %v199 = vld [vmem:[%s168 + $0xf0] sm:$0xff]
        %v200 = vld [vmem:[%s168 + $0xf8] sm:$0x3]
        %v201 = vld [vmem:[%s168 + $0x100] sm:$0xff]
        %v202 = vld [vmem:[%s168 + $0x108] sm:$0x3]
        %v203 = vld [vmem:[%s168 + $0x110] sm:$0xff]
        %v204 = vld [vmem:[%s168 + $0x118] sm:$0x3]
        %v205 = vld [vmem:[%s168 + $0x120] sm:$0xff]
        %v206 = vld [vmem:[%s168 + $0x128] sm:$0x3]
        %v207 = vld [vmem:[%s168 + $0x130] sm:$0xff]
        %v208 = vld [vmem:[%s168 + $0x138] sm:$0x3]
        %v209 = vld [vmem:[%s168 + $0x140] sm:$0xff]
        %v210 = vld [vmem:[%s168 + $0x148] sm:$0x3]
        %v211 = vld [vmem:[%s168 + $0x150] sm:$0xff]
        %v212 = vld [vmem:[%s168 + $0x158] sm:$0x3]
        %v213 = vld [vmem:[%s168 + $0x160] sm:$0xff]
        %v214 = vld [vmem:[%s168 + $0x168] sm:$0x3]
        %v215 = vld [vmem:[%s168 + $0x170] sm:$0xff]
        %v216 = vld [vmem:[%s168 + $0x178] sm:$0x3]
        %v217 = vld [vmem:[%s168 + $0x180] sm:$0xff]
        %v218 = vld [vmem:[%s168 + $0x188] sm:$0x3]
        %v219 = vld [vmem:[%s168 + $0x190] sm:$0xff]
        %v220 = vld [vmem:[%s168 + $0x198] sm:$0x3]
        %v221 = vld [vmem:[%s168 + $0x1a0] sm:$0xff]
        %v222 = vld [vmem:[%s168 + $0x1a8] sm:$0x3]
        %v223 = vld [vmem:[%s168 + $0x1b0] sm:$0xff]
        %v224 = vld [vmem:[%s168 + $0x1b8] sm:$0x3]
        %v225 = vld [vmem:[%s168 + $0x1c0] sm:$0xff]
        %v226 = vld [vmem:[%s168 + $0x1c8] sm:$0x3]
        %v227 = vld [vmem:[%s168 + $0x1d0] sm:$0xff]
        %v228 = vld [vmem:[%s168 + $0x1d8] sm:$0x3]
        %v229 = vld [vmem:[%s168 + $0x1e0] sm:$0xff]
        %v230 = vld [vmem:[%s168 + $0x1e8] sm:$0x3]
        %v231 = vld [vmem:[%s168 + $0x1f0] sm:$0xff]
        %v232 = vld [vmem:[%s168 + $0x1f8] sm:$0x3]
        %v233 = vld [vmem:[%s168 + $0x200] sm:$0xff]
        %v234 = vld [vmem:[%s168 + $0x208] sm:$0x3]
        %v235 = vld [vmem:[%s168 + $0x210] sm:$0xff]
        %v236 = vld [vmem:[%s168 + $0x218] sm:$0x3]
        %v237 = vld [vmem:[%s168 + $0x220] sm:$0xff]
        %v238 = vld [vmem:[%s168 + $0x228] sm:$0x3]
        %v239 = vld [vmem:[%s168 + $0x230] sm:$0xff]
        %v240 = vld [vmem:[%s168 + $0x238] sm:$0x3]
        %v241 = vld [vmem:[%s168 + $0x240] sm:$0xff]
        %v242 = vld [vmem:[%s168 + $0x248] sm:$0x3]
        %v243 = vld [vmem:[%s168 + $0x250] sm:$0xff]
        %v244 = vld [vmem:[%s168 + $0x258] sm:$0x3]
        %v245 = vld [vmem:[%s168 + $0x260] sm:$0xff]
        %v246 = vld [vmem:[%s168 + $0x268] sm:$0x3]
        %v247 = vld [vmem:[%s168 + $0x270] sm:$0xff]
        %v248 = vld [vmem:[%s168 + $0x278] sm:$0x3]
        %v249 = vld [vmem:[%s168 + $0x280] sm:$0xff]
        %v250 = vld [vmem:[%s168 + $0x288] sm:$0x3]
        %v251 = vld [vmem:[%s168 + $0x290] sm:$0xff]
        %v252 = vld [vmem:[%s168 + $0x298] sm:$0x3]
        %v253 = vld [vmem:[%s168 + $0x2a0] sm:$0xff]
        %v254 = vld [vmem:[%s168 + $0x2a8] sm:$0x3]
        %v255 = vld [vmem:[%s168 + $0x2b0] sm:$0xff]
        %v256 = vld [vmem:[%s168 + $0x2b8] sm:$0x3]
        %v257 = vld [vmem:[%s168 + $0x2c0] sm:$0xff]
        %v258 = vld [vmem:[%s168 + $0x2c8] sm:$0x3]
        %v259 = vld [vmem:[%s168 + $0x2d0] sm:$0xff]
        %v260 = vld [vmem:[%s168 + $0x2d8] sm:$0x3]
        %v261 = vld [vmem:[%s168 + $0x2e0] sm:$0xff]
        %v262 = vld [vmem:[%s168 + $0x2e8] sm:$0x3]
        %v263 = vld [vmem:[%s168 + $0x2f0] sm:$0xff]
        %v264 = vld [vmem:[%s168 + $0x2f8] sm:$0x3]
        %v265 = vld [vmem:[%s168 + $0x300] sm:$0xff]
        %v266 = vld [vmem:[%s168 + $0x308] sm:$0x3]
        %v267 = vld [vmem:[%s168 + $0x310] sm:$0xff]
        %v268 = vld [vmem:[%s168 + $0x318] sm:$0x3]
        %v269 = vld [vmem:[%s168 + $0x320] sm:$0xff]
        %v270 = vld [vmem:[%s168 + $0x328] sm:$0x3]
        %v271 = vld [vmem:[%s168 + $0x330] sm:$0xff]
        %v272 = vld [vmem:[%s168 + $0x338] sm:$0x3]
        %v273 = vld [vmem:[%s168 + $0x340] sm:$0xff]
        %v274 = vld [vmem:[%s168 + $0x348] sm:$0x3]
        %v275 = vld [vmem:[%s168 + $0x350] sm:$0xff]
        %v276 = vld [vmem:[%s168 + $0x358] sm:$0x3]
        %v277 = vld [vmem:[%s168 + $0x360] sm:$0xff]
        %v278 = vld [vmem:[%s168 + $0x368] sm:$0x3]
        %v279 = vld [vmem:[%s168 + $0x370] sm:$0xff]
        %v280 = vld [vmem:[%s168 + $0x378] sm:$0x3]
        %v281 = vld [vmem:[%s168 + $0x380] sm:$0xff]
        %v282 = vld [vmem:[%s168 + $0x388] sm:$0x3]
        %v283 = vld [vmem:[%s168 + $0x390] sm:$0xff]
        %v284 = vld [vmem:[%s168 + $0x398] sm:$0x3]
        %v285 = vld [vmem:[%s168 + $0x3a0] sm:$0xff]
        %v286 = vld [vmem:[%s168 + $0x3a8] sm:$0x3]
        %v287 = vld [vmem:[%s168 + $0x3b0] sm:$0xff]
        %v288 = vld [vmem:[%s168 + $0x3b8] sm:$0x3]
        %vm353 = vcmask 1046528
        %v354 = vrot.slane %v169, 1
        %v355 = vrot.slane %v170, 1
        %v356 = vsel %vm353, %v354, %v355
        %v357 = vrot.slane %v171, 1
        %v358 = vrot.slane %v172, 1
        %v359 = vsel %vm353, %v357, %v358
        %v360 = vrot.slane %v173, 1
        %v361 = vrot.slane %v174, 1
        %v362 = vsel %vm353, %v360, %v361
        %v363 = vrot.slane %v175, 1
        %v364 = vrot.slane %v176, 1
        %v365 = vsel %vm353, %v363, %v364
        %v366 = vrot.slane %v177, 1
        %v367 = vrot.slane %v178, 1
        %v368 = vsel %vm353, %v366, %v367
        %v369 = vrot.slane %v179, 1
        %v370 = vrot.slane %v180, 1
        %v371 = vsel %vm353, %v369, %v370
        %v372 = vrot.slane %v181, 1
        %v373 = vrot.slane %v182, 1
        %v374 = vsel %vm353, %v372, %v373
        %v375 = vrot.slane %v183, 1
        %v376 = vrot.slane %v184, 1
        %v377 = vsel %vm353, %v375, %v376
        %v378 = vrot.slane %v189, 1
        %v379 = vrot.slane %v190, 1
        %v380 = vsel %vm353, %v378, %v379
        %v381 = vrot.slane %v191, 1
        %v382 = vrot.slane %v192, 1
        %v383 = vsel %vm353, %v381, %v382
        %v384 = vrot.slane %v193, 1
        %v385 = vrot.slane %v194, 1
        %v386 = vsel %vm353, %v384, %v385
        %v387 = vrot.slane %v195, 1
        %v388 = vrot.slane %v196, 1
        %v389 = vsel %vm353, %v387, %v388
        %v390 = vrot.slane %v197, 1
        %v391 = vrot.slane %v198, 1
        %v392 = vsel %vm353, %v390, %v391
        %v393 = vrot.slane %v199, 1
        %v394 = vrot.slane %v200, 1
        %v395 = vsel %vm353, %v393, %v394
        %v396 = vrot.slane %v201, 1
        %v397 = vrot.slane %v202, 1
        %v398 = vsel %vm353, %v396, %v397
        %v399 = vrot.slane %v203, 1
        %v400 = vrot.slane %v204, 1
        %v401 = vsel %vm353, %v399, %v400
        %v402 = vrot.slane %v209, 1
        %v403 = vrot.slane %v210, 1
        %v404 = vsel %vm353, %v402, %v403
        %v405 = vrot.slane %v211, 1
        %v406 = vrot.slane %v212, 1
        %v407 = vsel %vm353, %v405, %v406
        %v408 = vrot.slane %v213, 1
        %v409 = vrot.slane %v214, 1
        %v410 = vsel %vm353, %v408, %v409
        %v411 = vrot.slane %v215, 1
        %v412 = vrot.slane %v216, 1
        %v413 = vsel %vm353, %v411, %v412
        %v414 = vrot.slane %v217, 1
        %v415 = vrot.slane %v218, 1
        %v416 = vsel %vm353, %v414, %v415
        %v417 = vrot.slane %v219, 1
        %v418 = vrot.slane %v220, 1
        %v419 = vsel %vm353, %v417, %v418
        %v420 = vrot.slane %v221, 1
        %v421 = vrot.slane %v222, 1
        %v422 = vsel %vm353, %v420, %v421
        %v423 = vrot.slane %v223, 1
        %v424 = vrot.slane %v224, 1
        %v425 = vsel %vm353, %v423, %v424
        %v426 = vrot.slane %v229, 1
        %v427 = vrot.slane %v230, 1
        %v428 = vsel %vm353, %v426, %v427
        %v429 = vrot.slane %v231, 1
        %v430 = vrot.slane %v232, 1
        %v431 = vsel %vm353, %v429, %v430
        %v432 = vrot.slane %v233, 1
        %v433 = vrot.slane %v234, 1
        %v434 = vsel %vm353, %v432, %v433
        %v435 = vrot.slane %v235, 1
        %v436 = vrot.slane %v236, 1
        %v437 = vsel %vm353, %v435, %v436
        %v438 = vrot.slane %v237, 1
        %v439 = vrot.slane %v238, 1
        %v440 = vsel %vm353, %v438, %v439
        %v441 = vrot.slane %v239, 1
        %v442 = vrot.slane %v240, 1
        %v443 = vsel %vm353, %v441, %v442
        %v444 = vrot.slane %v241, 1
        %v445 = vrot.slane %v242, 1
        %v446 = vsel %vm353, %v444, %v445
        %v447 = vrot.slane %v243, 1
        %v448 = vrot.slane %v244, 1
        %v449 = vsel %vm353, %v447, %v448
        %vm450 = vcmask 1045504
        %v451 = vrot.slane %v169, 2
        %v452 = vrot.slane %v170, 2
        %v453 = vsel %vm450, %v451, %v452
        %v454 = vrot.slane %v171, 2
        %v455 = vrot.slane %v172, 2
        %v456 = vsel %vm450, %v454, %v455
        %v457 = vrot.slane %v173, 2
        %v458 = vrot.slane %v174, 2
        %v459 = vsel %vm450, %v457, %v458
        %v460 = vrot.slane %v175, 2
        %v461 = vrot.slane %v176, 2
        %v462 = vsel %vm450, %v460, %v461
        %v463 = vrot.slane %v177, 2
        %v464 = vrot.slane %v178, 2
        %v465 = vsel %vm450, %v463, %v464
        %v466 = vrot.slane %v179, 2
        %v467 = vrot.slane %v180, 2
        %v468 = vsel %vm450, %v466, %v467
        %v469 = vrot.slane %v181, 2
        %v470 = vrot.slane %v182, 2
        %v471 = vsel %vm450, %v469, %v470
        %v472 = vrot.slane %v183, 2
        %v473 = vrot.slane %v184, 2
        %v474 = vsel %vm450, %v472, %v473
        %v475 = vrot.slane %v189, 2
        %v476 = vrot.slane %v190, 2
        %v477 = vsel %vm450, %v475, %v476
        %v478 = vrot.slane %v191, 2
        %v479 = vrot.slane %v192, 2
        %v480 = vsel %vm450, %v478, %v479
        %v481 = vrot.slane %v193, 2
        %v482 = vrot.slane %v194, 2
        %v483 = vsel %vm450, %v481, %v482
        %v484 = vrot.slane %v195, 2
        %v485 = vrot.slane %v196, 2
        %v486 = vsel %vm450, %v484, %v485
        %v487 = vrot.slane %v197, 2
        %v488 = vrot.slane %v198, 2
        %v489 = vsel %vm450, %v487, %v488
        %v490 = vrot.slane %v199, 2
        %v491 = vrot.slane %v200, 2
        %v492 = vsel %vm450, %v490, %v491
        %v493 = vrot.slane %v201, 2
        %v494 = vrot.slane %v202, 2
        %v495 = vsel %vm450, %v493, %v494
        %v496 = vrot.slane %v203, 2
        %v497 = vrot.slane %v204, 2
        %v498 = vsel %vm450, %v496, %v497
        %v499 = vrot.slane %v209, 2
        %v500 = vrot.slane %v210, 2
        %v501 = vsel %vm450, %v499, %v500
        %v502 = vrot.slane %v211, 2
        %v503 = vrot.slane %v212, 2
        %v504 = vsel %vm450, %v502, %v503
        %v505 = vrot.slane %v213, 2
        %v506 = vrot.slane %v214, 2
        %v507 = vsel %vm450, %v505, %v506
        %v508 = vrot.slane %v215, 2
        %v509 = vrot.slane %v216, 2
        %v510 = vsel %vm450, %v508, %v509
        %v511 = vrot.slane %v217, 2
        %v512 = vrot.slane %v218, 2
        %v513 = vsel %vm450, %v511, %v512
        %v514 = vrot.slane %v219, 2
        %v515 = vrot.slane %v220, 2
        %v516 = vsel %vm450, %v514, %v515
        %v517 = vrot.slane %v221, 2
        %v518 = vrot.slane %v222, 2
        %v519 = vsel %vm450, %v517, %v518
        %v520 = vrot.slane %v223, 2
        %v521 = vrot.slane %v224, 2
        %v522 = vsel %vm450, %v520, %v521
        %v523 = vrot.slane %v229, 2
        %v524 = vrot.slane %v230, 2
        %v525 = vsel %vm450, %v523, %v524
        %v526 = vrot.slane %v231, 2
        %v527 = vrot.slane %v232, 2
        %v528 = vsel %vm450, %v526, %v527
        %v529 = vrot.slane %v233, 2
        %v530 = vrot.slane %v234, 2
        %v531 = vsel %vm450, %v529, %v530
        %v532 = vrot.slane %v235, 2
        %v533 = vrot.slane %v236, 2
        %v534 = vsel %vm450, %v532, %v533
        %v535 = vrot.slane %v237, 2
        %v536 = vrot.slane %v238, 2
        %v537 = vsel %vm450, %v535, %v536
        %v538 = vrot.slane %v239, 2
        %v539 = vrot.slane %v240, 2
        %v540 = vsel %vm450, %v538, %v539
        %v541 = vrot.slane %v241, 2
        %v542 = vrot.slane %v242, 2
        %v543 = vsel %vm450, %v541, %v542
        %v544 = vrot.slane %v243, 2
        %v545 = vrot.slane %v244, 2
        %v546 = vsel %vm450, %v544, %v545
        %v555 = vrot.slane %v185, 1
        %v556 = vrot.slane %v186, 1
        %v557 = vsel %vm353, %v555, %v556
        %v558 = vrot.slane %v205, 1
        %v559 = vrot.slane %v206, 1
        %v560 = vsel %vm353, %v558, %v559
        %v561 = vrot.slane %v225, 1
        %v562 = vrot.slane %v226, 1
        %v563 = vsel %vm353, %v561, %v562
        %v564 = vrot.slane %v245, 1
        %v565 = vrot.slane %v246, 1
        %v566 = vsel %vm353, %v564, %v565
        %v567 = vrot.slane %v185, 2
        %v568 = vrot.slane %v186, 2
        %v569 = vsel %vm450, %v567, %v568
        %v570 = vrot.slane %v205, 2
        %v571 = vrot.slane %v206, 2
        %v572 = vsel %vm450, %v570, %v571
        %v573 = vrot.slane %v225, 2
        %v574 = vrot.slane %v226, 2
        %v575 = vsel %vm450, %v573, %v574
        %v576 = vrot.slane %v245, 2
        %v577 = vrot.slane %v246, 2
        %v578 = vsel %vm450, %v576, %v577
        %v587 = vrot.slane %v187, 1
        %v588 = vrot.slane %v188, 1
        %v589 = vsel %vm353, %v587, %v588
        %v590 = vrot.slane %v207, 1
        %v591 = vrot.slane %v208, 1
        %v592 = vsel %vm353, %v590, %v591
        %v593 = vrot.slane %v227, 1
        %v594 = vrot.slane %v228, 1
        %v595 = vsel %vm353, %v593, %v594
        %v596 = vrot.slane %v247, 1
        %v597 = vrot.slane %v248, 1
        %v598 = vsel %vm353, %v596, %v597
        %v599 = vrot.slane %v187, 2
        %v600 = vrot.slane %v188, 2
        %v601 = vsel %vm450, %v599, %v600
        %v602 = vrot.slane %v207, 2
        %v603 = vrot.slane %v208, 2
        %v604 = vsel %vm450, %v602, %v603
        %v605 = vrot.slane %v227, 2
        %v606 = vrot.slane %v228, 2
        %v607 = vsel %vm450, %v605, %v606
        %v608 = vrot.slane %v247, 2
        %v609 = vrot.slane %v248, 2
        %v610 = vsel %vm450, %v608, %v609
        %v627 = vrot.slane %v249, 1
        %v628 = vrot.slane %v250, 1
        %v629 = vsel %vm353, %v627, %v628
        %v630 = vrot.slane %v251, 1
        %v631 = vrot.slane %v252, 1
        %v632 = vsel %vm353, %v630, %v631
        %v633 = vrot.slane %v253, 1
        %v634 = vrot.slane %v254, 1
        %v635 = vsel %vm353, %v633, %v634
        %v636 = vrot.slane %v255, 1
        %v637 = vrot.slane %v256, 1
        %v638 = vsel %vm353, %v636, %v637
        %v639 = vrot.slane %v257, 1
        %v640 = vrot.slane %v258, 1
        %v641 = vsel %vm353, %v639, %v640
        %v642 = vrot.slane %v259, 1
        %v643 = vrot.slane %v260, 1
        %v644 = vsel %vm353, %v642, %v643
        %v645 = vrot.slane %v261, 1
        %v646 = vrot.slane %v262, 1
        %v647 = vsel %vm353, %v645, %v646
        %v648 = vrot.slane %v263, 1
        %v649 = vrot.slane %v264, 1
        %v650 = vsel %vm353, %v648, %v649
        %v651 = vrot.slane %v249, 2
        %v652 = vrot.slane %v250, 2
        %v653 = vsel %vm450, %v651, %v652
        %v654 = vrot.slane %v251, 2
        %v655 = vrot.slane %v252, 2
        %v656 = vsel %vm450, %v654, %v655
        %v657 = vrot.slane %v253, 2
        %v658 = vrot.slane %v254, 2
        %v659 = vsel %vm450, %v657, %v658
        %v660 = vrot.slane %v255, 2
        %v661 = vrot.slane %v256, 2
        %v662 = vsel %vm450, %v660, %v661
        %v663 = vrot.slane %v257, 2
        %v664 = vrot.slane %v258, 2
        %v665 = vsel %vm450, %v663, %v664
        %v666 = vrot.slane %v259, 2
        %v667 = vrot.slane %v260, 2
        %v668 = vsel %vm450, %v666, %v667
        %v669 = vrot.slane %v261, 2
        %v670 = vrot.slane %v262, 2
        %v671 = vsel %vm450, %v669, %v670
        %v672 = vrot.slane %v263, 2
        %v673 = vrot.slane %v264, 2
        %v674 = vsel %vm450, %v672, %v673
        %v677 = vrot.slane %v265, 1
        %v678 = vrot.slane %v266, 1
        %v679 = vsel %vm353, %v677, %v678
        %v680 = vrot.slane %v265, 2
        %v681 = vrot.slane %v266, 2
        %v682 = vsel %vm450, %v680, %v681
        %v685 = vrot.slane %v267, 1
        %v686 = vrot.slane %v268, 1
        %v687 = vsel %vm353, %v685, %v686
        %v720 = vrot.slane %v267, 2
        %v721 = vrot.slane %v268, 2
        %v722 = vsel %vm450, %v720, %v721
        %v739 = vrot.slane %v269, 1
        %v740 = vrot.slane %v270, 1
        %v741 = vsel %vm353, %v739, %v740
        %v742 = vrot.slane %v271, 1
        %v743 = vrot.slane %v272, 1
        %v744 = vsel %vm353, %v742, %v743
        %v745 = vrot.slane %v273, 1
        %v746 = vrot.slane %v274, 1
        %v747 = vsel %vm353, %v745, %v746
        %v748 = vrot.slane %v275, 1
        %v749 = vrot.slane %v276, 1
        %v750 = vsel %vm353, %v748, %v749
        %v751 = vrot.slane %v277, 1
        %v752 = vrot.slane %v278, 1
        %v753 = vsel %vm353, %v751, %v752
        %v754 = vrot.slane %v279, 1
        %v755 = vrot.slane %v280, 1
        %v756 = vsel %vm353, %v754, %v755
        %v757 = vrot.slane %v281, 1
        %v758 = vrot.slane %v282, 1
        %v759 = vsel %vm353, %v757, %v758
        %v760 = vrot.slane %v283, 1
        %v761 = vrot.slane %v284, 1
        %v762 = vsel %vm353, %v760, %v761
        %v763 = vrot.slane %v269, 2
        %v764 = vrot.slane %v270, 2
        %v765 = vsel %vm450, %v763, %v764
        %v766 = vrot.slane %v271, 2
        %v767 = vrot.slane %v272, 2
        %v768 = vsel %vm450, %v766, %v767
        %v769 = vrot.slane %v273, 2
        %v770 = vrot.slane %v274, 2
        %v771 = vsel %vm450, %v769, %v770
        %v772 = vrot.slane %v275, 2
        %v773 = vrot.slane %v276, 2
        %v774 = vsel %vm450, %v772, %v773
        %v775 = vrot.slane %v277, 2
        %v776 = vrot.slane %v278, 2
        %v777 = vsel %vm450, %v775, %v776
        %v778 = vrot.slane %v279, 2
        %v779 = vrot.slane %v280, 2
        %v780 = vsel %vm450, %v778, %v779
        %v781 = vrot.slane %v281, 2
        %v782 = vrot.slane %v282, 2
        %v783 = vsel %vm450, %v781, %v782
        %v784 = vrot.slane %v283, 2
        %v785 = vrot.slane %v284, 2
        %v786 = vsel %vm450, %v784, %v785
        %v789 = vrot.slane %v285, 1
        %v790 = vrot.slane %v286, 1
        %v791 = vsel %vm353, %v789, %v790
        %v792 = vrot.slane %v285, 2
        %v793 = vrot.slane %v286, 2
        %v794 = vsel %vm450, %v792, %v793
        %v797 = vrot.slane %v287, 1
        %v798 = vrot.slane %v288, 1
        %v799 = vsel %vm353, %v797, %v798
        %v800 = vrot.slane %v287, 2
        %v801 = vrot.slane %v288, 2
        %v802 = vsel %vm450, %v800, %v801
        %803 = vrot.lane.b32.xlu0 %v356, 4
        %v804 = vpop.permute.xlu0 %803
        %805 = vrot.lane.b32.xlu0 %v359, 4
        %v806 = vpop.permute.xlu0 %805
        %807 = vrot.lane.b32.xlu0 %v362, 4
        %v808 = vpop.permute.xlu0 %807
        %809 = vrot.lane.b32.xlu0 %v365, 4
        %v810 = vpop.permute.xlu0 %809
        %811 = vrot.lane.b32.xlu0 %v368, 4
        %v812 = vpop.permute.xlu0 %811
        %813 = vrot.lane.b32.xlu0 %v371, 4
        %v814 = vpop.permute.xlu0 %813
        %815 = vrot.lane.b32.xlu0 %v374, 4
        %v816 = vpop.permute.xlu0 %815
        %817 = vrot.lane.b32.xlu0 %v377, 4
        %v818 = vpop.permute.xlu0 %817
        %819 = vrot.lane.b32.xlu0 %v380, 4
        %v820 = vpop.permute.xlu0 %819
        %821 = vrot.lane.b32.xlu0 %v383, 4
        %v822 = vpop.permute.xlu0 %821
        %823 = vrot.lane.b32.xlu0 %v386, 4
        %v824 = vpop.permute.xlu0 %823
        %825 = vrot.lane.b32.xlu0 %v389, 4
        %v826 = vpop.permute.xlu0 %825
        %827 = vrot.lane.b32.xlu0 %v392, 4
        %v828 = vpop.permute.xlu0 %827
        %829 = vrot.lane.b32.xlu0 %v395, 4
        %v830 = vpop.permute.xlu0 %829
        %831 = vrot.lane.b32.xlu0 %v398, 4
        %v832 = vpop.permute.xlu0 %831
        %833 = vrot.lane.b32.xlu0 %v401, 4
        %v834 = vpop.permute.xlu0 %833
        %835 = vrot.lane.b32.xlu0 %v404, 4
        %v836 = vpop.permute.xlu0 %835
        %837 = vrot.lane.b32.xlu0 %v407, 4
        %v838 = vpop.permute.xlu0 %837
        %839 = vrot.lane.b32.xlu0 %v410, 4
        %v840 = vpop.permute.xlu0 %839
        %841 = vrot.lane.b32.xlu0 %v413, 4
        %v842 = vpop.permute.xlu0 %841
        %843 = vrot.lane.b32.xlu0 %v416, 4
        %v844 = vpop.permute.xlu0 %843
        %845 = vrot.lane.b32.xlu0 %v419, 4
        %v846 = vpop.permute.xlu0 %845
        %847 = vrot.lane.b32.xlu0 %v422, 4
        %v848 = vpop.permute.xlu0 %847
        %849 = vrot.lane.b32.xlu0 %v425, 4
        %v850 = vpop.permute.xlu0 %849
        %851 = vrot.lane.b32.xlu0 %v428, 4
        %v852 = vpop.permute.xlu0 %851
        %853 = vrot.lane.b32.xlu0 %v431, 4
        %v854 = vpop.permute.xlu0 %853
        %855 = vrot.lane.b32.xlu0 %v434, 4
        %v856 = vpop.permute.xlu0 %855
        %857 = vrot.lane.b32.xlu0 %v437, 4
        %v858 = vpop.permute.xlu0 %857
        %859 = vrot.lane.b32.xlu0 %v440, 4
        %v860 = vpop.permute.xlu0 %859
        %861 = vrot.lane.b32.xlu0 %v443, 4
        %v862 = vpop.permute.xlu0 %861
        %863 = vrot.lane.b32.xlu0 %v446, 4
        %v864 = vpop.permute.xlu0 %863
        %865 = vrot.lane.b32.xlu0 %v449, 4
        %v866 = vpop.permute.xlu0 %865
        %899 = vrot.lane.b32.xlu0 %v453, 8
        %v900 = vpop.permute.xlu0 %899
        %901 = vrot.lane.b32.xlu0 %v456, 8
        %v902 = vpop.permute.xlu0 %901
        %903 = vrot.lane.b32.xlu0 %v459, 8
        %v904 = vpop.permute.xlu0 %903
        %905 = vrot.lane.b32.xlu0 %v462, 8
        %v906 = vpop.permute.xlu0 %905
        %907 = vrot.lane.b32.xlu0 %v465, 8
        %v908 = vpop.permute.xlu0 %907
        %909 = vrot.lane.b32.xlu0 %v468, 8
        %v910 = vpop.permute.xlu0 %909
        %911 = vrot.lane.b32.xlu0 %v471, 8
        %v912 = vpop.permute.xlu0 %911
        %913 = vrot.lane.b32.xlu0 %v474, 8
        %v914 = vpop.permute.xlu0 %913
        %915 = vrot.lane.b32.xlu0 %v477, 8
        %v916 = vpop.permute.xlu0 %915
        %917 = vrot.lane.b32.xlu0 %v480, 8
        %v918 = vpop.permute.xlu0 %917
        %919 = vrot.lane.b32.xlu0 %v483, 8
        %v920 = vpop.permute.xlu0 %919
        %921 = vrot.lane.b32.xlu0 %v486, 8
        %v922 = vpop.permute.xlu0 %921
        %923 = vrot.lane.b32.xlu0 %v489, 8
        %v924 = vpop.permute.xlu0 %923
        %925 = vrot.lane.b32.xlu0 %v492, 8
        %v926 = vpop.permute.xlu0 %925
        %927 = vrot.lane.b32.xlu0 %v495, 8
        %v928 = vpop.permute.xlu0 %927
        %929 = vrot.lane.b32.xlu0 %v498, 8
        %v930 = vpop.permute.xlu0 %929
        %931 = vrot.lane.b32.xlu0 %v501, 8
        %v932 = vpop.permute.xlu0 %931
        %933 = vrot.lane.b32.xlu0 %v504, 8
        %v934 = vpop.permute.xlu0 %933
        %935 = vrot.lane.b32.xlu0 %v507, 8
        %v936 = vpop.permute.xlu0 %935
        %937 = vrot.lane.b32.xlu0 %v510, 8
        %v938 = vpop.permute.xlu0 %937
        %939 = vrot.lane.b32.xlu0 %v513, 8
        %v940 = vpop.permute.xlu0 %939
        %941 = vrot.lane.b32.xlu0 %v516, 8
        %v942 = vpop.permute.xlu0 %941
        %943 = vrot.lane.b32.xlu0 %v519, 8
        %v944 = vpop.permute.xlu0 %943
        %945 = vrot.lane.b32.xlu0 %v522, 8
        %v946 = vpop.permute.xlu0 %945
        %947 = vrot.lane.b32.xlu0 %v525, 8
        %v948 = vpop.permute.xlu0 %947
        %949 = vrot.lane.b32.xlu0 %v528, 8
        %v950 = vpop.permute.xlu0 %949
        %951 = vrot.lane.b32.xlu0 %v531, 8
        %v952 = vpop.permute.xlu0 %951
        %953 = vrot.lane.b32.xlu0 %v534, 8
        %v954 = vpop.permute.xlu0 %953
        %955 = vrot.lane.b32.xlu0 %v537, 8
        %v956 = vpop.permute.xlu0 %955
        %957 = vrot.lane.b32.xlu0 %v540, 8
        %v958 = vpop.permute.xlu0 %957
        %959 = vrot.lane.b32.xlu0 %v543, 8
        %v960 = vpop.permute.xlu0 %959
        %961 = vrot.lane.b32.xlu0 %v546, 8
        %v962 = vpop.permute.xlu0 %961
        %995 = vrot.lane.b32.xlu0 %v171, 12
        %v996 = vpop.permute.xlu0 %995
        %997 = vrot.lane.b32.xlu0 %v173, 12
        %v998 = vpop.permute.xlu0 %997
        %999 = vrot.lane.b32.xlu0 %v175, 12
        %v1000 = vpop.permute.xlu0 %999
        %1001 = vrot.lane.b32.xlu0 %v177, 12
        %v1002 = vpop.permute.xlu0 %1001
        %1003 = vrot.lane.b32.xlu0 %v179, 12
        %v1004 = vpop.permute.xlu0 %1003
        %1005 = vrot.lane.b32.xlu0 %v181, 12
        %v1006 = vpop.permute.xlu0 %1005
        %1007 = vrot.lane.b32.xlu0 %v183, 12
        %v1008 = vpop.permute.xlu0 %1007
        %1009 = vrot.lane.b32.xlu0 %v185, 12
        %v1010 = vpop.permute.xlu0 %1009
        %1011 = vrot.lane.b32.xlu0 %v191, 12
        %v1012 = vpop.permute.xlu0 %1011
        %1013 = vrot.lane.b32.xlu0 %v193, 12
        %v1014 = vpop.permute.xlu0 %1013
        %1015 = vrot.lane.b32.xlu0 %v195, 12
        %v1016 = vpop.permute.xlu0 %1015
        %1017 = vrot.lane.b32.xlu0 %v197, 12
        %v1018 = vpop.permute.xlu0 %1017
        %1019 = vrot.lane.b32.xlu0 %v199, 12
        %v1020 = vpop.permute.xlu0 %1019
        %1021 = vrot.lane.b32.xlu0 %v201, 12
        %v1022 = vpop.permute.xlu0 %1021
        %1023 = vrot.lane.b32.xlu0 %v203, 12
        %v1024 = vpop.permute.xlu0 %1023
        %1025 = vrot.lane.b32.xlu0 %v205, 12
        %v1026 = vpop.permute.xlu0 %1025
        %1027 = vrot.lane.b32.xlu0 %v211, 12
        %v1028 = vpop.permute.xlu0 %1027
        %1029 = vrot.lane.b32.xlu0 %v213, 12
        %v1030 = vpop.permute.xlu0 %1029
        %1031 = vrot.lane.b32.xlu0 %v215, 12
        %v1032 = vpop.permute.xlu0 %1031
        %1033 = vrot.lane.b32.xlu0 %v217, 12
        %v1034 = vpop.permute.xlu0 %1033
        %1035 = vrot.lane.b32.xlu0 %v219, 12
        %v1036 = vpop.permute.xlu0 %1035
        %1037 = vrot.lane.b32.xlu0 %v221, 12
        %v1038 = vpop.permute.xlu0 %1037
        %1039 = vrot.lane.b32.xlu0 %v223, 12
        %v1040 = vpop.permute.xlu0 %1039
        %1041 = vrot.lane.b32.xlu0 %v225, 12
        %v1042 = vpop.permute.xlu0 %1041
        %1043 = vrot.lane.b32.xlu0 %v231, 12
        %v1044 = vpop.permute.xlu0 %1043
        %1045 = vrot.lane.b32.xlu0 %v233, 12
        %v1046 = vpop.permute.xlu0 %1045
        %1047 = vrot.lane.b32.xlu0 %v235, 12
        %v1048 = vpop.permute.xlu0 %1047
        %1049 = vrot.lane.b32.xlu0 %v237, 12
        %v1050 = vpop.permute.xlu0 %1049
        %1051 = vrot.lane.b32.xlu0 %v239, 12
        %v1052 = vpop.permute.xlu0 %1051
        %1053 = vrot.lane.b32.xlu0 %v241, 12
        %v1054 = vpop.permute.xlu0 %1053
        %1055 = vrot.lane.b32.xlu0 %v243, 12
        %v1056 = vpop.permute.xlu0 %1055
        %1057 = vrot.lane.b32.xlu0 %v245, 12
        %v1058 = vpop.permute.xlu0 %1057
        %1091 = vrot.lane.b32.xlu0 %v359, 16
        %v1092 = vpop.permute.xlu0 %1091
        %1093 = vrot.lane.b32.xlu0 %v362, 16
        %v1094 = vpop.permute.xlu0 %1093
        %1095 = vrot.lane.b32.xlu0 %v365, 16
        %v1096 = vpop.permute.xlu0 %1095
        %1097 = vrot.lane.b32.xlu0 %v368, 16
        %v1098 = vpop.permute.xlu0 %1097
        %1099 = vrot.lane.b32.xlu0 %v371, 16
        %v1100 = vpop.permute.xlu0 %1099
        %1101 = vrot.lane.b32.xlu0 %v374, 16
        %v1102 = vpop.permute.xlu0 %1101
        %1103 = vrot.lane.b32.xlu0 %v377, 16
        %v1104 = vpop.permute.xlu0 %1103
        %1105 = vrot.lane.b32.xlu0 %v557, 16
        %v1106 = vpop.permute.xlu0 %1105
        %1107 = vrot.lane.b32.xlu0 %v383, 16
        %v1108 = vpop.permute.xlu0 %1107
        %1109 = vrot.lane.b32.xlu0 %v386, 16
        %v1110 = vpop.permute.xlu0 %1109
        %1111 = vrot.lane.b32.xlu0 %v389, 16
        %v1112 = vpop.permute.xlu0 %1111
        %1113 = vrot.lane.b32.xlu0 %v392, 16
        %v1114 = vpop.permute.xlu0 %1113
        %1115 = vrot.lane.b32.xlu0 %v395, 16
        %v1116 = vpop.permute.xlu0 %1115
        %1117 = vrot.lane.b32.xlu0 %v398, 16
        %v1118 = vpop.permute.xlu0 %1117
        %1119 = vrot.lane.b32.xlu0 %v401, 16
        %v1120 = vpop.permute.xlu0 %1119
        %1121 = vrot.lane.b32.xlu0 %v560, 16
        %v1122 = vpop.permute.xlu0 %1121
        %1123 = vrot.lane.b32.xlu0 %v407, 16
        %v1124 = vpop.permute.xlu0 %1123
        %1125 = vrot.lane.b32.xlu0 %v410, 16
        %v1126 = vpop.permute.xlu0 %1125
        %1127 = vrot.lane.b32.xlu0 %v413, 16
        %v1128 = vpop.permute.xlu0 %1127
        %1129 = vrot.lane.b32.xlu0 %v416, 16
        %v1130 = vpop.permute.xlu0 %1129
        %1131 = vrot.lane.b32.xlu0 %v419, 16
        %v1132 = vpop.permute.xlu0 %1131
        %1133 = vrot.lane.b32.xlu0 %v422, 16
        %v1134 = vpop.permute.xlu0 %1133
        %1135 = vrot.lane.b32.xlu0 %v425, 16
        %v1136 = vpop.permute.xlu0 %1135
        %1137 = vrot.lane.b32.xlu0 %v563, 16
        %v1138 = vpop.permute.xlu0 %1137
        %1139 = vrot.lane.b32.xlu0 %v431, 16
        %v1140 = vpop.permute.xlu0 %1139
        %1141 = vrot.lane.b32.xlu0 %v434, 16
        %v1142 = vpop.permute.xlu0 %1141
        %1143 = vrot.lane.b32.xlu0 %v437, 16
        %v1144 = vpop.permute.xlu0 %1143
        %1145 = vrot.lane.b32.xlu0 %v440, 16
        %v1146 = vpop.permute.xlu0 %1145
        %1147 = vrot.lane.b32.xlu0 %v443, 16
        %v1148 = vpop.permute.xlu0 %1147
        %1149 = vrot.lane.b32.xlu0 %v446, 16
        %v1150 = vpop.permute.xlu0 %1149
        %1151 = vrot.lane.b32.xlu0 %v449, 16
        %v1152 = vpop.permute.xlu0 %1151
        %1153 = vrot.lane.b32.xlu0 %v566, 16
        %v1154 = vpop.permute.xlu0 %1153
        %1187 = vrot.lane.b32.xlu0 %v456, 20
        %v1188 = vpop.permute.xlu0 %1187
        %1189 = vrot.lane.b32.xlu0 %v459, 20
        %v1190 = vpop.permute.xlu0 %1189
        %1191 = vrot.lane.b32.xlu0 %v462, 20
        %v1192 = vpop.permute.xlu0 %1191
        %1193 = vrot.lane.b32.xlu0 %v465, 20
        %v1194 = vpop.permute.xlu0 %1193
        %1195 = vrot.lane.b32.xlu0 %v468, 20
        %v1196 = vpop.permute.xlu0 %1195
        %1197 = vrot.lane.b32.xlu0 %v471, 20
        %v1198 = vpop.permute.xlu0 %1197
        %1199 = vrot.lane.b32.xlu0 %v474, 20
        %v1200 = vpop.permute.xlu0 %1199
        %1201 = vrot.lane.b32.xlu0 %v569, 20
        %v1202 = vpop.permute.xlu0 %1201
        %1203 = vrot.lane.b32.xlu0 %v480, 20
        %v1204 = vpop.permute.xlu0 %1203
        %1205 = vrot.lane.b32.xlu0 %v483, 20
        %v1206 = vpop.permute.xlu0 %1205
        %1207 = vrot.lane.b32.xlu0 %v486, 20
        %v1208 = vpop.permute.xlu0 %1207
        %1209 = vrot.lane.b32.xlu0 %v489, 20
        %v1210 = vpop.permute.xlu0 %1209
        %1211 = vrot.lane.b32.xlu0 %v492, 20
        %v1212 = vpop.permute.xlu0 %1211
        %1213 = vrot.lane.b32.xlu0 %v495, 20
        %v1214 = vpop.permute.xlu0 %1213
        %1215 = vrot.lane.b32.xlu0 %v498, 20
        %v1216 = vpop.permute.xlu0 %1215
        %1217 = vrot.lane.b32.xlu0 %v572, 20
        %v1218 = vpop.permute.xlu0 %1217
        %1219 = vrot.lane.b32.xlu0 %v504, 20
        %v1220 = vpop.permute.xlu0 %1219
        %1221 = vrot.lane.b32.xlu0 %v507, 20
        %v1222 = vpop.permute.xlu0 %1221
        %1223 = vrot.lane.b32.xlu0 %v510, 20
        %v1224 = vpop.permute.xlu0 %1223
        %1225 = vrot.lane.b32.xlu0 %v513, 20
        %v1226 = vpop.permute.xlu0 %1225
        %1227 = vrot.lane.b32.xlu0 %v516, 20
        %v1228 = vpop.permute.xlu0 %1227
        %1229 = vrot.lane.b32.xlu0 %v519, 20
        %v1230 = vpop.permute.xlu0 %1229
        %1231 = vrot.lane.b32.xlu0 %v522, 20
        %v1232 = vpop.permute.xlu0 %1231
        %1233 = vrot.lane.b32.xlu0 %v575, 20
        %v1234 = vpop.permute.xlu0 %1233
        %1235 = vrot.lane.b32.xlu0 %v528, 20
        %v1236 = vpop.permute.xlu0 %1235
        %1237 = vrot.lane.b32.xlu0 %v531, 20
        %v1238 = vpop.permute.xlu0 %1237
        %1239 = vrot.lane.b32.xlu0 %v534, 20
        %v1240 = vpop.permute.xlu0 %1239
        %1241 = vrot.lane.b32.xlu0 %v537, 20
        %v1242 = vpop.permute.xlu0 %1241
        %1243 = vrot.lane.b32.xlu0 %v540, 20
        %v1244 = vpop.permute.xlu0 %1243
        %1245 = vrot.lane.b32.xlu0 %v543, 20
        %v1246 = vpop.permute.xlu0 %1245
        %1247 = vrot.lane.b32.xlu0 %v546, 20
        %v1248 = vpop.permute.xlu0 %1247
        %1249 = vrot.lane.b32.xlu0 %v578, 20
        %v1250 = vpop.permute.xlu0 %1249
        %1283 = vrot.lane.b32.xlu0 %v173, 24
        %v1284 = vpop.permute.xlu0 %1283
        %1285 = vrot.lane.b32.xlu0 %v175, 24
        %v1286 = vpop.permute.xlu0 %1285
        %1287 = vrot.lane.b32.xlu0 %v177, 24
        %v1288 = vpop.permute.xlu0 %1287
        %1289 = vrot.lane.b32.xlu0 %v179, 24
        %v1290 = vpop.permute.xlu0 %1289
        %1291 = vrot.lane.b32.xlu0 %v181, 24
        %v1292 = vpop.permute.xlu0 %1291
        %1293 = vrot.lane.b32.xlu0 %v183, 24
        %v1294 = vpop.permute.xlu0 %1293
        %1295 = vrot.lane.b32.xlu0 %v185, 24
        %v1296 = vpop.permute.xlu0 %1295
        %1297 = vrot.lane.b32.xlu0 %v187, 24
        %v1298 = vpop.permute.xlu0 %1297
        %1299 = vrot.lane.b32.xlu0 %v193, 24
        %v1300 = vpop.permute.xlu0 %1299
        %1301 = vrot.lane.b32.xlu0 %v195, 24
        %v1302 = vpop.permute.xlu0 %1301
        %1303 = vrot.lane.b32.xlu0 %v197, 24
        %v1304 = vpop.permute.xlu0 %1303
        %1305 = vrot.lane.b32.xlu0 %v199, 24
        %v1306 = vpop.permute.xlu0 %1305
        %1307 = vrot.lane.b32.xlu0 %v201, 24
        %v1308 = vpop.permute.xlu0 %1307
        %1309 = vrot.lane.b32.xlu0 %v203, 24
        %v1310 = vpop.permute.xlu0 %1309
        %1311 = vrot.lane.b32.xlu0 %v205, 24
        %v1312 = vpop.permute.xlu0 %1311
        %1313 = vrot.lane.b32.xlu0 %v207, 24
        %v1314 = vpop.permute.xlu0 %1313
        %1315 = vrot.lane.b32.xlu0 %v213, 24
        %v1316 = vpop.permute.xlu0 %1315
        %1317 = vrot.lane.b32.xlu0 %v215, 24
        %v1318 = vpop.permute.xlu0 %1317
        %1319 = vrot.lane.b32.xlu0 %v217, 24
        %v1320 = vpop.permute.xlu0 %1319
        %1321 = vrot.lane.b32.xlu0 %v219, 24
        %v1322 = vpop.permute.xlu0 %1321
        %1323 = vrot.lane.b32.xlu0 %v221, 24
        %v1324 = vpop.permute.xlu0 %1323
        %1325 = vrot.lane.b32.xlu0 %v223, 24
        %v1326 = vpop.permute.xlu0 %1325
        %1327 = vrot.lane.b32.xlu0 %v225, 24
        %v1328 = vpop.permute.xlu0 %1327
        %1329 = vrot.lane.b32.xlu0 %v227, 24
        %v1330 = vpop.permute.xlu0 %1329
        %1331 = vrot.lane.b32.xlu0 %v233, 24
        %v1332 = vpop.permute.xlu0 %1331
        %1333 = vrot.lane.b32.xlu0 %v235, 24
        %v1334 = vpop.permute.xlu0 %1333
        %1335 = vrot.lane.b32.xlu0 %v237, 24
        %v1336 = vpop.permute.xlu0 %1335
        %1337 = vrot.lane.b32.xlu0 %v239, 24
        %v1338 = vpop.permute.xlu0 %1337
        %1339 = vrot.lane.b32.xlu0 %v241, 24
        %v1340 = vpop.permute.xlu0 %1339
        %1341 = vrot.lane.b32.xlu0 %v243, 24
        %v1342 = vpop.permute.xlu0 %1341
        %1343 = vrot.lane.b32.xlu0 %v245, 24
        %v1344 = vpop.permute.xlu0 %1343
        %1345 = vrot.lane.b32.xlu0 %v247, 24
        %v1346 = vpop.permute.xlu0 %1345
        %1379 = vrot.lane.b32.xlu0 %v362, 28
        %v1380 = vpop.permute.xlu0 %1379
        %1381 = vrot.lane.b32.xlu0 %v365, 28
        %v1382 = vpop.permute.xlu0 %1381
        %1383 = vrot.lane.b32.xlu0 %v368, 28
        %v1384 = vpop.permute.xlu0 %1383
        %1385 = vrot.lane.b32.xlu0 %v371, 28
        %v1386 = vpop.permute.xlu0 %1385
        %1387 = vrot.lane.b32.xlu0 %v374, 28
        %v1388 = vpop.permute.xlu0 %1387
        %1389 = vrot.lane.b32.xlu0 %v377, 28
        %v1390 = vpop.permute.xlu0 %1389
        %1391 = vrot.lane.b32.xlu0 %v557, 28
        %v1392 = vpop.permute.xlu0 %1391
        %1393 = vrot.lane.b32.xlu0 %v589, 28
        %v1394 = vpop.permute.xlu0 %1393
        %1395 = vrot.lane.b32.xlu0 %v386, 28
        %v1396 = vpop.permute.xlu0 %1395
        %1397 = vrot.lane.b32.xlu0 %v389, 28
        %v1398 = vpop.permute.xlu0 %1397
        %1399 = vrot.lane.b32.xlu0 %v392, 28
        %v1400 = vpop.permute.xlu0 %1399
        %1401 = vrot.lane.b32.xlu0 %v395, 28
        %v1402 = vpop.permute.xlu0 %1401
        %1403 = vrot.lane.b32.xlu0 %v398, 28
        %v1404 = vpop.permute.xlu0 %1403
        %1405 = vrot.lane.b32.xlu0 %v401, 28
        %v1406 = vpop.permute.xlu0 %1405
        %1407 = vrot.lane.b32.xlu0 %v560, 28
        %v1408 = vpop.permute.xlu0 %1407
        %1409 = vrot.lane.b32.xlu0 %v592, 28
        %v1410 = vpop.permute.xlu0 %1409
        %1411 = vrot.lane.b32.xlu0 %v410, 28
        %v1412 = vpop.permute.xlu0 %1411
        %1413 = vrot.lane.b32.xlu0 %v413, 28
        %v1414 = vpop.permute.xlu0 %1413
        %1415 = vrot.lane.b32.xlu0 %v416, 28
        %v1416 = vpop.permute.xlu0 %1415
        %1417 = vrot.lane.b32.xlu0 %v419, 28
        %v1418 = vpop.permute.xlu0 %1417
        %1419 = vrot.lane.b32.xlu0 %v422, 28
        %v1420 = vpop.permute.xlu0 %1419
        %1421 = vrot.lane.b32.xlu0 %v425, 28
        %v1422 = vpop.permute.xlu0 %1421
        %1423 = vrot.lane.b32.xlu0 %v563, 28
        %v1424 = vpop.permute.xlu0 %1423
        %1425 = vrot.lane.b32.xlu0 %v595, 28
        %v1426 = vpop.permute.xlu0 %1425
        %1427 = vrot.lane.b32.xlu0 %v434, 28
        %v1428 = vpop.permute.xlu0 %1427
        %1429 = vrot.lane.b32.xlu0 %v437, 28
        %v1430 = vpop.permute.xlu0 %1429
        %1431 = vrot.lane.b32.xlu0 %v440, 28
        %v1432 = vpop.permute.xlu0 %1431
        %1433 = vrot.lane.b32.xlu0 %v443, 28
        %v1434 = vpop.permute.xlu0 %1433
        %1435 = vrot.lane.b32.xlu0 %v446, 28
        %v1436 = vpop.permute.xlu0 %1435
        %1437 = vrot.lane.b32.xlu0 %v449, 28
        %v1438 = vpop.permute.xlu0 %1437
        %1439 = vrot.lane.b32.xlu0 %v566, 28
        %v1440 = vpop.permute.xlu0 %1439
        %1441 = vrot.lane.b32.xlu0 %v598, 28
        %v1442 = vpop.permute.xlu0 %1441
        %1475 = vrot.lane.b32.xlu0 %v459, 32
        %v1476 = vpop.permute.xlu0 %1475
        %1477 = vrot.lane.b32.xlu0 %v462, 32
        %v1478 = vpop.permute.xlu0 %1477
        %1479 = vrot.lane.b32.xlu0 %v465, 32
        %v1480 = vpop.permute.xlu0 %1479
        %1481 = vrot.lane.b32.xlu0 %v468, 32
        %v1482 = vpop.permute.xlu0 %1481
        %1483 = vrot.lane.b32.xlu0 %v471, 32
        %v1484 = vpop.permute.xlu0 %1483
        %1485 = vrot.lane.b32.xlu0 %v474, 32
        %v1486 = vpop.permute.xlu0 %1485
        %1487 = vrot.lane.b32.xlu0 %v569, 32
        %v1488 = vpop.permute.xlu0 %1487
        %1489 = vrot.lane.b32.xlu0 %v601, 32
        %v1490 = vpop.permute.xlu0 %1489
        %1491 = vrot.lane.b32.xlu0 %v483, 32
        %v1492 = vpop.permute.xlu0 %1491
        %1493 = vrot.lane.b32.xlu0 %v486, 32
        %v1494 = vpop.permute.xlu0 %1493
        %1495 = vrot.lane.b32.xlu0 %v489, 32
        %v1496 = vpop.permute.xlu0 %1495
        %1497 = vrot.lane.b32.xlu0 %v492, 32
        %v1498 = vpop.permute.xlu0 %1497
        %1499 = vrot.lane.b32.xlu0 %v495, 32
        %v1500 = vpop.permute.xlu0 %1499
        %1501 = vrot.lane.b32.xlu0 %v498, 32
        %v1502 = vpop.permute.xlu0 %1501
        %1503 = vrot.lane.b32.xlu0 %v572, 32
        %v1504 = vpop.permute.xlu0 %1503
        %1505 = vrot.lane.b32.xlu0 %v604, 32
        %v1506 = vpop.permute.xlu0 %1505
        %1507 = vrot.lane.b32.xlu0 %v507, 32
        %v1508 = vpop.permute.xlu0 %1507
        %1509 = vrot.lane.b32.xlu0 %v510, 32
        %v1510 = vpop.permute.xlu0 %1509
        %1511 = vrot.lane.b32.xlu0 %v513, 32
        %v1512 = vpop.permute.xlu0 %1511
        %1513 = vrot.lane.b32.xlu0 %v516, 32
        %v1514 = vpop.permute.xlu0 %1513
        %1515 = vrot.lane.b32.xlu0 %v519, 32
        %v1516 = vpop.permute.xlu0 %1515
        %1517 = vrot.lane.b32.xlu0 %v522, 32
        %v1518 = vpop.permute.xlu0 %1517
        %1519 = vrot.lane.b32.xlu0 %v575, 32
        %v1520 = vpop.permute.xlu0 %1519
        %1521 = vrot.lane.b32.xlu0 %v607, 32
        %v1522 = vpop.permute.xlu0 %1521
        %1523 = vrot.lane.b32.xlu0 %v531, 32
        %v1524 = vpop.permute.xlu0 %1523
        %1525 = vrot.lane.b32.xlu0 %v534, 32
        %v1526 = vpop.permute.xlu0 %1525
        %1527 = vrot.lane.b32.xlu0 %v537, 32
        %v1528 = vpop.permute.xlu0 %1527
        %1529 = vrot.lane.b32.xlu0 %v540, 32
        %v1530 = vpop.permute.xlu0 %1529
        %1531 = vrot.lane.b32.xlu0 %v543, 32
        %v1532 = vpop.permute.xlu0 %1531
        %1533 = vrot.lane.b32.xlu0 %v546, 32
        %v1534 = vpop.permute.xlu0 %1533
        %1535 = vrot.lane.b32.xlu0 %v578, 32
        %v1536 = vpop.permute.xlu0 %1535
        %1537 = vrot.lane.b32.xlu0 %v610, 32
        %v1538 = vpop.permute.xlu0 %1537
        %1571 = vrot.lane.b32.xlu0 %v189, 36
        %v1572 = vpop.permute.xlu0 %1571
        %1573 = vrot.lane.b32.xlu0 %v191, 36
        %v1574 = vpop.permute.xlu0 %1573
        %1575 = vrot.lane.b32.xlu0 %v193, 36
        %v1576 = vpop.permute.xlu0 %1575
        %1577 = vrot.lane.b32.xlu0 %v195, 36
        %v1578 = vpop.permute.xlu0 %1577
        %1579 = vrot.lane.b32.xlu0 %v197, 36
        %v1580 = vpop.permute.xlu0 %1579
        %1581 = vrot.lane.b32.xlu0 %v199, 36
        %v1582 = vpop.permute.xlu0 %1581
        %1583 = vrot.lane.b32.xlu0 %v201, 36
        %v1584 = vpop.permute.xlu0 %1583
        %1585 = vrot.lane.b32.xlu0 %v203, 36
        %v1586 = vpop.permute.xlu0 %1585
        %1587 = vrot.lane.b32.xlu0 %v209, 36
        %v1588 = vpop.permute.xlu0 %1587
        %1589 = vrot.lane.b32.xlu0 %v211, 36
        %v1590 = vpop.permute.xlu0 %1589
        %1591 = vrot.lane.b32.xlu0 %v213, 36
        %v1592 = vpop.permute.xlu0 %1591
        %1593 = vrot.lane.b32.xlu0 %v215, 36
        %v1594 = vpop.permute.xlu0 %1593
        %1595 = vrot.lane.b32.xlu0 %v217, 36
        %v1596 = vpop.permute.xlu0 %1595
        %1597 = vrot.lane.b32.xlu0 %v219, 36
        %v1598 = vpop.permute.xlu0 %1597
        %1599 = vrot.lane.b32.xlu0 %v221, 36
        %v1600 = vpop.permute.xlu0 %1599
        %1601 = vrot.lane.b32.xlu0 %v223, 36
        %v1602 = vpop.permute.xlu0 %1601
        %1603 = vrot.lane.b32.xlu0 %v229, 36
        %v1604 = vpop.permute.xlu0 %1603
        %1605 = vrot.lane.b32.xlu0 %v231, 36
        %v1606 = vpop.permute.xlu0 %1605
        %1607 = vrot.lane.b32.xlu0 %v233, 36
        %v1608 = vpop.permute.xlu0 %1607
        %1609 = vrot.lane.b32.xlu0 %v235, 36
        %v1610 = vpop.permute.xlu0 %1609
        %1611 = vrot.lane.b32.xlu0 %v237, 36
        %v1612 = vpop.permute.xlu0 %1611
        %1613 = vrot.lane.b32.xlu0 %v239, 36
        %v1614 = vpop.permute.xlu0 %1613
        %1615 = vrot.lane.b32.xlu0 %v241, 36
        %v1616 = vpop.permute.xlu0 %1615
        %1617 = vrot.lane.b32.xlu0 %v243, 36
        %v1618 = vpop.permute.xlu0 %1617
        %1619 = vrot.lane.b32.xlu0 %v249, 36
        %v1620 = vpop.permute.xlu0 %1619
        %1621 = vrot.lane.b32.xlu0 %v251, 36
        %v1622 = vpop.permute.xlu0 %1621
        %1623 = vrot.lane.b32.xlu0 %v253, 36
        %v1624 = vpop.permute.xlu0 %1623
        %1625 = vrot.lane.b32.xlu0 %v255, 36
        %v1626 = vpop.permute.xlu0 %1625
        %1627 = vrot.lane.b32.xlu0 %v257, 36
        %v1628 = vpop.permute.xlu0 %1627
        %1629 = vrot.lane.b32.xlu0 %v259, 36
        %v1630 = vpop.permute.xlu0 %1629
        %1631 = vrot.lane.b32.xlu0 %v261, 36
        %v1632 = vpop.permute.xlu0 %1631
        %1633 = vrot.lane.b32.xlu0 %v263, 36
        %v1634 = vpop.permute.xlu0 %1633
        %1667 = vrot.lane.b32.xlu0 %v380, 40
        %v1668 = vpop.permute.xlu0 %1667
        %1669 = vrot.lane.b32.xlu0 %v383, 40
        %v1670 = vpop.permute.xlu0 %1669
        %1671 = vrot.lane.b32.xlu0 %v386, 40
        %v1672 = vpop.permute.xlu0 %1671
        %1673 = vrot.lane.b32.xlu0 %v389, 40
        %v1674 = vpop.permute.xlu0 %1673
        %1675 = vrot.lane.b32.xlu0 %v392, 40
        %v1676 = vpop.permute.xlu0 %1675
        %1677 = vrot.lane.b32.xlu0 %v395, 40
        %v1678 = vpop.permute.xlu0 %1677
        %1679 = vrot.lane.b32.xlu0 %v398, 40
        %v1680 = vpop.permute.xlu0 %1679
        %1681 = vrot.lane.b32.xlu0 %v401, 40
        %v1682 = vpop.permute.xlu0 %1681
        %1683 = vrot.lane.b32.xlu0 %v404, 40
        %v1684 = vpop.permute.xlu0 %1683
        %1685 = vrot.lane.b32.xlu0 %v407, 40
        %v1686 = vpop.permute.xlu0 %1685
        %1687 = vrot.lane.b32.xlu0 %v410, 40
        %v1688 = vpop.permute.xlu0 %1687
        %1689 = vrot.lane.b32.xlu0 %v413, 40
        %v1690 = vpop.permute.xlu0 %1689
        %1691 = vrot.lane.b32.xlu0 %v416, 40
        %v1692 = vpop.permute.xlu0 %1691
        %1693 = vrot.lane.b32.xlu0 %v419, 40
        %v1694 = vpop.permute.xlu0 %1693
        %1695 = vrot.lane.b32.xlu0 %v422, 40
        %v1696 = vpop.permute.xlu0 %1695
        %1697 = vrot.lane.b32.xlu0 %v425, 40
        %v1698 = vpop.permute.xlu0 %1697
        %1699 = vrot.lane.b32.xlu0 %v428, 40
        %v1700 = vpop.permute.xlu0 %1699
        %1701 = vrot.lane.b32.xlu0 %v431, 40
        %v1702 = vpop.permute.xlu0 %1701
        %1703 = vrot.lane.b32.xlu0 %v434, 40
        %v1704 = vpop.permute.xlu0 %1703
        %1705 = vrot.lane.b32.xlu0 %v437, 40
        %v1706 = vpop.permute.xlu0 %1705
        %1707 = vrot.lane.b32.xlu0 %v440, 40
        %v1708 = vpop.permute.xlu0 %1707
        %1709 = vrot.lane.b32.xlu0 %v443, 40
        %v1710 = vpop.permute.xlu0 %1709
        %1711 = vrot.lane.b32.xlu0 %v446, 40
        %v1712 = vpop.permute.xlu0 %1711
        %1713 = vrot.lane.b32.xlu0 %v449, 40
        %v1714 = vpop.permute.xlu0 %1713
        %1715 = vrot.lane.b32.xlu0 %v629, 40
        %v1716 = vpop.permute.xlu0 %1715
        %1717 = vrot.lane.b32.xlu0 %v632, 40
        %v1718 = vpop.permute.xlu0 %1717
        %1719 = vrot.lane.b32.xlu0 %v635, 40
        %v1720 = vpop.permute.xlu0 %1719
        %1721 = vrot.lane.b32.xlu0 %v638, 40
        %v1722 = vpop.permute.xlu0 %1721
        %1723 = vrot.lane.b32.xlu0 %v641, 40
        %v1724 = vpop.permute.xlu0 %1723
        %1725 = vrot.lane.b32.xlu0 %v644, 40
        %v1726 = vpop.permute.xlu0 %1725
        %1727 = vrot.lane.b32.xlu0 %v647, 40
        %v1728 = vpop.permute.xlu0 %1727
        %1729 = vrot.lane.b32.xlu0 %v650, 40
        %v1730 = vpop.permute.xlu0 %1729
        %1763 = vrot.lane.b32.xlu0 %v477, 44
        %v1764 = vpop.permute.xlu0 %1763
        %1765 = vrot.lane.b32.xlu0 %v480, 44
        %v1766 = vpop.permute.xlu0 %1765
        %1767 = vrot.lane.b32.xlu0 %v483, 44
        %v1768 = vpop.permute.xlu0 %1767
        %1769 = vrot.lane.b32.xlu0 %v486, 44
        %v1770 = vpop.permute.xlu0 %1769
        %1771 = vrot.lane.b32.xlu0 %v489, 44
        %v1772 = vpop.permute.xlu0 %1771
        %1773 = vrot.lane.b32.xlu0 %v492, 44
        %v1774 = vpop.permute.xlu0 %1773
        %1775 = vrot.lane.b32.xlu0 %v495, 44
        %v1776 = vpop.permute.xlu0 %1775
        %1777 = vrot.lane.b32.xlu0 %v498, 44
        %v1778 = vpop.permute.xlu0 %1777
        %1779 = vrot.lane.b32.xlu0 %v501, 44
        %v1780 = vpop.permute.xlu0 %1779
        %1781 = vrot.lane.b32.xlu0 %v504, 44
        %v1782 = vpop.permute.xlu0 %1781
        %1783 = vrot.lane.b32.xlu0 %v507, 44
        %v1784 = vpop.permute.xlu0 %1783
        %1785 = vrot.lane.b32.xlu0 %v510, 44
        %v1786 = vpop.permute.xlu0 %1785
        %1787 = vrot.lane.b32.xlu0 %v513, 44
        %v1788 = vpop.permute.xlu0 %1787
        %1789 = vrot.lane.b32.xlu0 %v516, 44
        %v1790 = vpop.permute.xlu0 %1789
        %1791 = vrot.lane.b32.xlu0 %v519, 44
        %v1792 = vpop.permute.xlu0 %1791
        %1793 = vrot.lane.b32.xlu0 %v522, 44
        %v1794 = vpop.permute.xlu0 %1793
        %1795 = vrot.lane.b32.xlu0 %v525, 44
        %v1796 = vpop.permute.xlu0 %1795
        %1797 = vrot.lane.b32.xlu0 %v528, 44
        %v1798 = vpop.permute.xlu0 %1797
        %1799 = vrot.lane.b32.xlu0 %v531, 44
        %v1800 = vpop.permute.xlu0 %1799
        %1801 = vrot.lane.b32.xlu0 %v534, 44
        %v1802 = vpop.permute.xlu0 %1801
        %1803 = vrot.lane.b32.xlu0 %v537, 44
        %v1804 = vpop.permute.xlu0 %1803
        %1805 = vrot.lane.b32.xlu0 %v540, 44
        %v1806 = vpop.permute.xlu0 %1805
        %1807 = vrot.lane.b32.xlu0 %v543, 44
        %v1808 = vpop.permute.xlu0 %1807
        %1809 = vrot.lane.b32.xlu0 %v546, 44
        %v1810 = vpop.permute.xlu0 %1809
        %1811 = vrot.lane.b32.xlu0 %v653, 44
        %v1812 = vpop.permute.xlu0 %1811
        %1813 = vrot.lane.b32.xlu0 %v656, 44
        %v1814 = vpop.permute.xlu0 %1813
        %1815 = vrot.lane.b32.xlu0 %v659, 44
        %v1816 = vpop.permute.xlu0 %1815
        %1817 = vrot.lane.b32.xlu0 %v662, 44
        %v1818 = vpop.permute.xlu0 %1817
        %1819 = vrot.lane.b32.xlu0 %v665, 44
        %v1820 = vpop.permute.xlu0 %1819
        %1821 = vrot.lane.b32.xlu0 %v668, 44
        %v1822 = vpop.permute.xlu0 %1821
        %1823 = vrot.lane.b32.xlu0 %v671, 44
        %v1824 = vpop.permute.xlu0 %1823
        %1825 = vrot.lane.b32.xlu0 %v674, 44
        %v1826 = vpop.permute.xlu0 %1825
        %1859 = vrot.lane.b32.xlu0 %v191, 48
        %v1860 = vpop.permute.xlu0 %1859
        %1861 = vrot.lane.b32.xlu0 %v193, 48
        %v1862 = vpop.permute.xlu0 %1861
        %1863 = vrot.lane.b32.xlu0 %v195, 48
        %v1864 = vpop.permute.xlu0 %1863
        %1865 = vrot.lane.b32.xlu0 %v197, 48
        %v1866 = vpop.permute.xlu0 %1865
        %1867 = vrot.lane.b32.xlu0 %v199, 48
        %v1868 = vpop.permute.xlu0 %1867
        %1869 = vrot.lane.b32.xlu0 %v201, 48
        %v1870 = vpop.permute.xlu0 %1869
        %1871 = vrot.lane.b32.xlu0 %v203, 48
        %v1872 = vpop.permute.xlu0 %1871
        %1873 = vrot.lane.b32.xlu0 %v205, 48
        %v1874 = vpop.permute.xlu0 %1873
        %1875 = vrot.lane.b32.xlu0 %v211, 48
        %v1876 = vpop.permute.xlu0 %1875
        %1877 = vrot.lane.b32.xlu0 %v213, 48
        %v1878 = vpop.permute.xlu0 %1877
        %1879 = vrot.lane.b32.xlu0 %v215, 48
        %v1880 = vpop.permute.xlu0 %1879
        %1881 = vrot.lane.b32.xlu0 %v217, 48
        %v1882 = vpop.permute.xlu0 %1881
        %1883 = vrot.lane.b32.xlu0 %v219, 48
        %v1884 = vpop.permute.xlu0 %1883
        %1885 = vrot.lane.b32.xlu0 %v221, 48
        %v1886 = vpop.permute.xlu0 %1885
        %1887 = vrot.lane.b32.xlu0 %v223, 48
        %v1888 = vpop.permute.xlu0 %1887
        %1889 = vrot.lane.b32.xlu0 %v225, 48
        %v1890 = vpop.permute.xlu0 %1889
        %1891 = vrot.lane.b32.xlu0 %v231, 48
        %v1892 = vpop.permute.xlu0 %1891
        %1893 = vrot.lane.b32.xlu0 %v233, 48
        %v1894 = vpop.permute.xlu0 %1893
        %1895 = vrot.lane.b32.xlu0 %v235, 48
        %v1896 = vpop.permute.xlu0 %1895
        %1897 = vrot.lane.b32.xlu0 %v237, 48
        %v1898 = vpop.permute.xlu0 %1897
        %1899 = vrot.lane.b32.xlu0 %v239, 48
        %v1900 = vpop.permute.xlu0 %1899
        %1901 = vrot.lane.b32.xlu0 %v241, 48
        %v1902 = vpop.permute.xlu0 %1901
        %1903 = vrot.lane.b32.xlu0 %v243, 48
        %v1904 = vpop.permute.xlu0 %1903
        %1905 = vrot.lane.b32.xlu0 %v245, 48
        %v1906 = vpop.permute.xlu0 %1905
        %1907 = vrot.lane.b32.xlu0 %v251, 48
        %v1908 = vpop.permute.xlu0 %1907
        %1909 = vrot.lane.b32.xlu0 %v253, 48
        %v1910 = vpop.permute.xlu0 %1909
        %1911 = vrot.lane.b32.xlu0 %v255, 48
        %v1912 = vpop.permute.xlu0 %1911
        %1913 = vrot.lane.b32.xlu0 %v257, 48
        %v1914 = vpop.permute.xlu0 %1913
        %1915 = vrot.lane.b32.xlu0 %v259, 48
        %v1916 = vpop.permute.xlu0 %1915
        %1917 = vrot.lane.b32.xlu0 %v261, 48
        %v1918 = vpop.permute.xlu0 %1917
        %1919 = vrot.lane.b32.xlu0 %v263, 48
        %v1920 = vpop.permute.xlu0 %1919
        %1921 = vrot.lane.b32.xlu0 %v265, 48
        %v1922 = vpop.permute.xlu0 %1921
        %1955 = vrot.lane.b32.xlu0 %v383, 52
        %v1956 = vpop.permute.xlu0 %1955
        %1957 = vrot.lane.b32.xlu0 %v386, 52
        %v1958 = vpop.permute.xlu0 %1957
        %1959 = vrot.lane.b32.xlu0 %v389, 52
        %v1960 = vpop.permute.xlu0 %1959
        %1961 = vrot.lane.b32.xlu0 %v392, 52
        %v1962 = vpop.permute.xlu0 %1961
        %1963 = vrot.lane.b32.xlu0 %v395, 52
        %v1964 = vpop.permute.xlu0 %1963
        %1965 = vrot.lane.b32.xlu0 %v398, 52
        %v1966 = vpop.permute.xlu0 %1965
        %1967 = vrot.lane.b32.xlu0 %v401, 52
        %v1968 = vpop.permute.xlu0 %1967
        %1969 = vrot.lane.b32.xlu0 %v560, 52
        %v1970 = vpop.permute.xlu0 %1969
        %1971 = vrot.lane.b32.xlu0 %v407, 52
        %v1972 = vpop.permute.xlu0 %1971
        %1973 = vrot.lane.b32.xlu0 %v410, 52
        %v1974 = vpop.permute.xlu0 %1973
        %1975 = vrot.lane.b32.xlu0 %v413, 52
        %v1976 = vpop.permute.xlu0 %1975
        %1977 = vrot.lane.b32.xlu0 %v416, 52
        %v1978 = vpop.permute.xlu0 %1977
        %1979 = vrot.lane.b32.xlu0 %v419, 52
        %v1980 = vpop.permute.xlu0 %1979
        %1981 = vrot.lane.b32.xlu0 %v422, 52
        %v1982 = vpop.permute.xlu0 %1981
        %1983 = vrot.lane.b32.xlu0 %v425, 52
        %v1984 = vpop.permute.xlu0 %1983
        %1985 = vrot.lane.b32.xlu0 %v563, 52
        %v1986 = vpop.permute.xlu0 %1985
        %1987 = vrot.lane.b32.xlu0 %v431, 52
        %v1988 = vpop.permute.xlu0 %1987
        %1989 = vrot.lane.b32.xlu0 %v434, 52
        %v1990 = vpop.permute.xlu0 %1989
        %1991 = vrot.lane.b32.xlu0 %v437, 52
        %v1992 = vpop.permute.xlu0 %1991
        %1993 = vrot.lane.b32.xlu0 %v440, 52
        %v1994 = vpop.permute.xlu0 %1993
        %1995 = vrot.lane.b32.xlu0 %v443, 52
        %v1996 = vpop.permute.xlu0 %1995
        %1997 = vrot.lane.b32.xlu0 %v446, 52
        %v1998 = vpop.permute.xlu0 %1997
        %1999 = vrot.lane.b32.xlu0 %v449, 52
        %v2000 = vpop.permute.xlu0 %1999
        %2001 = vrot.lane.b32.xlu0 %v566, 52
        %v2002 = vpop.permute.xlu0 %2001
        %2003 = vrot.lane.b32.xlu0 %v632, 52
        %v2004 = vpop.permute.xlu0 %2003
        %2005 = vrot.lane.b32.xlu0 %v635, 52
        %v2006 = vpop.permute.xlu0 %2005
        %2007 = vrot.lane.b32.xlu0 %v638, 52
        %v2008 = vpop.permute.xlu0 %2007
        %2009 = vrot.lane.b32.xlu0 %v641, 52
        %v2010 = vpop.permute.xlu0 %2009
        %2011 = vrot.lane.b32.xlu0 %v644, 52
        %v2012 = vpop.permute.xlu0 %2011
        %2013 = vrot.lane.b32.xlu0 %v647, 52
        %v2014 = vpop.permute.xlu0 %2013
        %2015 = vrot.lane.b32.xlu0 %v650, 52
        %v2016 = vpop.permute.xlu0 %2015
        %2017 = vrot.lane.b32.xlu0 %v679, 52
        %v2018 = vpop.permute.xlu0 %2017
        %2051 = vrot.lane.b32.xlu0 %v480, 56
        %v2052 = vpop.permute.xlu0 %2051
        %2053 = vrot.lane.b32.xlu0 %v483, 56
        %v2054 = vpop.permute.xlu0 %2053
        %2055 = vrot.lane.b32.xlu0 %v486, 56
        %v2056 = vpop.permute.xlu0 %2055
        %2057 = vrot.lane.b32.xlu0 %v489, 56
        %v2058 = vpop.permute.xlu0 %2057
        %2059 = vrot.lane.b32.xlu0 %v492, 56
        %v2060 = vpop.permute.xlu0 %2059
        %2061 = vrot.lane.b32.xlu0 %v495, 56
        %v2062 = vpop.permute.xlu0 %2061
        %2063 = vrot.lane.b32.xlu0 %v498, 56
        %v2064 = vpop.permute.xlu0 %2063
        %2065 = vrot.lane.b32.xlu0 %v572, 56
        %v2066 = vpop.permute.xlu0 %2065
        %2067 = vrot.lane.b32.xlu0 %v504, 56
        %v2068 = vpop.permute.xlu0 %2067
        %2069 = vrot.lane.b32.xlu0 %v507, 56
        %v2070 = vpop.permute.xlu0 %2069
        %2071 = vrot.lane.b32.xlu0 %v510, 56
        %v2072 = vpop.permute.xlu0 %2071
        %2073 = vrot.lane.b32.xlu0 %v513, 56
        %v2074 = vpop.permute.xlu0 %2073
        %2075 = vrot.lane.b32.xlu0 %v516, 56
        %v2076 = vpop.permute.xlu0 %2075
        %2077 = vrot.lane.b32.xlu0 %v519, 56
        %v2078 = vpop.permute.xlu0 %2077
        %2079 = vrot.lane.b32.xlu0 %v522, 56
        %v2080 = vpop.permute.xlu0 %2079
        %2081 = vrot.lane.b32.xlu0 %v575, 56
        %v2082 = vpop.permute.xlu0 %2081
        %2083 = vrot.lane.b32.xlu0 %v528, 56
        %v2084 = vpop.permute.xlu0 %2083
        %2085 = vrot.lane.b32.xlu0 %v531, 56
        %v2086 = vpop.permute.xlu0 %2085
        %2087 = vrot.lane.b32.xlu0 %v534, 56
        %v2088 = vpop.permute.xlu0 %2087
        %2089 = vrot.lane.b32.xlu0 %v537, 56
        %v2090 = vpop.permute.xlu0 %2089
        %2091 = vrot.lane.b32.xlu0 %v540, 56
        %v2092 = vpop.permute.xlu0 %2091
        %2093 = vrot.lane.b32.xlu0 %v543, 56
        %v2094 = vpop.permute.xlu0 %2093
        %2095 = vrot.lane.b32.xlu0 %v546, 56
        %v2096 = vpop.permute.xlu0 %2095
        %2097 = vrot.lane.b32.xlu0 %v578, 56
        %v2098 = vpop.permute.xlu0 %2097
        %2099 = vrot.lane.b32.xlu0 %v656, 56
        %v2100 = vpop.permute.xlu0 %2099
        %2101 = vrot.lane.b32.xlu0 %v659, 56
        %v2102 = vpop.permute.xlu0 %2101
        %2103 = vrot.lane.b32.xlu0 %v662, 56
        %v2104 = vpop.permute.xlu0 %2103
        %2105 = vrot.lane.b32.xlu0 %v665, 56
        %v2106 = vpop.permute.xlu0 %2105
        %2107 = vrot.lane.b32.xlu0 %v668, 56
        %v2108 = vpop.permute.xlu0 %2107
        %2109 = vrot.lane.b32.xlu0 %v671, 56
        %v2110 = vpop.permute.xlu0 %2109
        %2111 = vrot.lane.b32.xlu0 %v674, 56
        %v2112 = vpop.permute.xlu0 %2111
        %2113 = vrot.lane.b32.xlu0 %v682, 56
        %v2114 = vpop.permute.xlu0 %2113
        %2147 = vrot.lane.b32.xlu0 %v193, 60
        %v2148 = vpop.permute.xlu0 %2147
        %2149 = vrot.lane.b32.xlu0 %v195, 60
        %v2150 = vpop.permute.xlu0 %2149
        %2151 = vrot.lane.b32.xlu0 %v197, 60
        %v2152 = vpop.permute.xlu0 %2151
        %2153 = vrot.lane.b32.xlu0 %v199, 60
        %v2154 = vpop.permute.xlu0 %2153
        %2155 = vrot.lane.b32.xlu0 %v201, 60
        %v2156 = vpop.permute.xlu0 %2155
        %2157 = vrot.lane.b32.xlu0 %v203, 60
        %v2158 = vpop.permute.xlu0 %2157
        %2159 = vrot.lane.b32.xlu0 %v205, 60
        %v2160 = vpop.permute.xlu0 %2159
        %2161 = vrot.lane.b32.xlu0 %v207, 60
        %v2162 = vpop.permute.xlu0 %2161
        %2163 = vrot.lane.b32.xlu0 %v213, 60
        %v2164 = vpop.permute.xlu0 %2163
        %2165 = vrot.lane.b32.xlu0 %v215, 60
        %v2166 = vpop.permute.xlu0 %2165
        %2167 = vrot.lane.b32.xlu0 %v217, 60
        %v2168 = vpop.permute.xlu0 %2167
        %2169 = vrot.lane.b32.xlu0 %v219, 60
        %v2170 = vpop.permute.xlu0 %2169
        %2171 = vrot.lane.b32.xlu0 %v221, 60
        %v2172 = vpop.permute.xlu0 %2171
        %2173 = vrot.lane.b32.xlu0 %v223, 60
        %v2174 = vpop.permute.xlu0 %2173
        %2175 = vrot.lane.b32.xlu0 %v225, 60
        %v2176 = vpop.permute.xlu0 %2175
        %2177 = vrot.lane.b32.xlu0 %v227, 60
        %v2178 = vpop.permute.xlu0 %2177
        %2179 = vrot.lane.b32.xlu0 %v233, 60
        %v2180 = vpop.permute.xlu0 %2179
        %2181 = vrot.lane.b32.xlu0 %v235, 60
        %v2182 = vpop.permute.xlu0 %2181
        %2183 = vrot.lane.b32.xlu0 %v237, 60
        %v2184 = vpop.permute.xlu0 %2183
        %2185 = vrot.lane.b32.xlu0 %v239, 60
        %v2186 = vpop.permute.xlu0 %2185
        %2187 = vrot.lane.b32.xlu0 %v241, 60
        %v2188 = vpop.permute.xlu0 %2187
        %2189 = vrot.lane.b32.xlu0 %v243, 60
        %v2190 = vpop.permute.xlu0 %2189
        %2191 = vrot.lane.b32.xlu0 %v245, 60
        %v2192 = vpop.permute.xlu0 %2191
        %2193 = vrot.lane.b32.xlu0 %v247, 60
        %v2194 = vpop.permute.xlu0 %2193
        %2195 = vrot.lane.b32.xlu0 %v253, 60
        %v2196 = vpop.permute.xlu0 %2195
        %2197 = vrot.lane.b32.xlu0 %v255, 60
        %v2198 = vpop.permute.xlu0 %2197
        %2199 = vrot.lane.b32.xlu0 %v257, 60
        %v2200 = vpop.permute.xlu0 %2199
        %2201 = vrot.lane.b32.xlu0 %v259, 60
        %v2202 = vpop.permute.xlu0 %2201
        %2203 = vrot.lane.b32.xlu0 %v261, 60
        %v2204 = vpop.permute.xlu0 %2203
        %2205 = vrot.lane.b32.xlu0 %v263, 60
        %v2206 = vpop.permute.xlu0 %2205
        %2207 = vrot.lane.b32.xlu0 %v265, 60
        %v2208 = vpop.permute.xlu0 %2207
        %2209 = vrot.lane.b32.xlu0 %v267, 60
        %v2210 = vpop.permute.xlu0 %2209
        %vm2243 = vcmask 31744
        %v2244 = vsel %vm2243, %v169, %v804
        %v2245 = vsel %vm2243, %v171, %v806
        %v2246 = vsel %vm2243, %v173, %v808
        %v2247 = vsel %vm2243, %v175, %v810
        %v2248 = vsel %vm2243, %v177, %v812
        %v2249 = vsel %vm2243, %v179, %v814
        %v2250 = vsel %vm2243, %v181, %v816
        %v2251 = vsel %vm2243, %v183, %v818
        %v2252 = vsel %vm2243, %v189, %v820
        %v2253 = vsel %vm2243, %v191, %v822
        %v2254 = vsel %vm2243, %v193, %v824
        %v2255 = vsel %vm2243, %v195, %v826
        %v2256 = vsel %vm2243, %v197, %v828
        %v2257 = vsel %vm2243, %v199, %v830
        %v2258 = vsel %vm2243, %v201, %v832
        %v2259 = vsel %vm2243, %v203, %v834
        %v2260 = vsel %vm2243, %v209, %v836
        %v2261 = vsel %vm2243, %v211, %v838
        %v2262 = vsel %vm2243, %v213, %v840
        %v2263 = vsel %vm2243, %v215, %v842
        %v2264 = vsel %vm2243, %v217, %v844
        %v2265 = vsel %vm2243, %v219, %v846
        %v2266 = vsel %vm2243, %v221, %v848
        %v2267 = vsel %vm2243, %v223, %v850
        %v2268 = vsel %vm2243, %v229, %v852
        %v2269 = vsel %vm2243, %v231, %v854
        %v2270 = vsel %vm2243, %v233, %v856
        %v2271 = vsel %vm2243, %v235, %v858
        %v2272 = vsel %vm2243, %v237, %v860
        %v2273 = vsel %vm2243, %v239, %v862
        %v2274 = vsel %vm2243, %v241, %v864
        %v2275 = vsel %vm2243, %v243, %v866
        %vm2276 = vcmask 64512
        %v2277 = vsel %vm2276, %v2244, %v900
        %v2278 = vsel %vm2276, %v2245, %v902
        %v2279 = vsel %vm2276, %v2246, %v904
        %v2280 = vsel %vm2276, %v2247, %v906
        %v2281 = vsel %vm2276, %v2248, %v908
        %v2282 = vsel %vm2276, %v2249, %v910
        %v2283 = vsel %vm2276, %v2250, %v912
        %v2284 = vsel %vm2276, %v2251, %v914
        %v2285 = vsel %vm2276, %v2252, %v916
        %v2286 = vsel %vm2276, %v2253, %v918
        %v2287 = vsel %vm2276, %v2254, %v920
        %v2288 = vsel %vm2276, %v2255, %v922
        %v2289 = vsel %vm2276, %v2256, %v924
        %v2290 = vsel %vm2276, %v2257, %v926
        %v2291 = vsel %vm2276, %v2258, %v928
        %v2292 = vsel %vm2276, %v2259, %v930
        %v2293 = vsel %vm2276, %v2260, %v932
        %v2294 = vsel %vm2276, %v2261, %v934
        %v2295 = vsel %vm2276, %v2262, %v936
        %v2296 = vsel %vm2276, %v2263, %v938
        %v2297 = vsel %vm2276, %v2264, %v940
        %v2298 = vsel %vm2276, %v2265, %v942
        %v2299 = vsel %vm2276, %v2266, %v944
        %v2300 = vsel %vm2276, %v2267, %v946
        %v2301 = vsel %vm2276, %v2268, %v948
        %v2302 = vsel %vm2276, %v2269, %v950
        %v2303 = vsel %vm2276, %v2270, %v952
        %v2304 = vsel %vm2276, %v2271, %v954
        %v2305 = vsel %vm2276, %v2272, %v956
        %v2306 = vsel %vm2276, %v2273, %v958
        %v2307 = vsel %vm2276, %v2274, %v960
        %v2308 = vsel %vm2276, %v2275, %v962
        %vm2309 = vcmask 97280
        %v2310 = vsel %vm2309, %v2277, %v996
        %v2311 = vsel %vm2309, %v2278, %v998
        %v2312 = vsel %vm2309, %v2279, %v1000
        %v2313 = vsel %vm2309, %v2280, %v1002
        %v2314 = vsel %vm2309, %v2281, %v1004
        %v2315 = vsel %vm2309, %v2282, %v1006
        %v2316 = vsel %vm2309, %v2283, %v1008
        %v2317 = vsel %vm2309, %v2284, %v1010
        %v2318 = vsel %vm2309, %v2285, %v1012
        %v2319 = vsel %vm2309, %v2286, %v1014
        %v2320 = vsel %vm2309, %v2287, %v1016
        %v2321 = vsel %vm2309, %v2288, %v1018
        %v2322 = vsel %vm2309, %v2289, %v1020
        %v2323 = vsel %vm2309, %v2290, %v1022
        %v2324 = vsel %vm2309, %v2291, %v1024
        %v2325 = vsel %vm2309, %v2292, %v1026
        %v2326 = vsel %vm2309, %v2293, %v1028
        %v2327 = vsel %vm2309, %v2294, %v1030
        %v2328 = vsel %vm2309, %v2295, %v1032
        %v2329 = vsel %vm2309, %v2296, %v1034
        %v2330 = vsel %vm2309, %v2297, %v1036
        %v2331 = vsel %vm2309, %v2298, %v1038
        %v2332 = vsel %vm2309, %v2299, %v1040
        %v2333 = vsel %vm2309, %v2300, %v1042
        %v2334 = vsel %vm2309, %v2301, %v1044
        %v2335 = vsel %vm2309, %v2302, %v1046
        %v2336 = vsel %vm2309, %v2303, %v1048
        %v2337 = vsel %vm2309, %v2304, %v1050
        %v2338 = vsel %vm2309, %v2305, %v1052
        %v2339 = vsel %vm2309, %v2306, %v1054
        %v2340 = vsel %vm2309, %v2307, %v1056
        %v2341 = vsel %vm2309, %v2308, %v1058
        %vm2342 = vcmask 130048
        %v2343 = vsel %vm2342, %v2310, %v1092
        %v2344 = vsel %vm2342, %v2311, %v1094
        %v2345 = vsel %vm2342, %v2312, %v1096
        %v2346 = vsel %vm2342, %v2313, %v1098
        %v2347 = vsel %vm2342, %v2314, %v1100
        %v2348 = vsel %vm2342, %v2315, %v1102
        %v2349 = vsel %vm2342, %v2316, %v1104
        %v2350 = vsel %vm2342, %v2317, %v1106
        %v2351 = vsel %vm2342, %v2318, %v1108
        %v2352 = vsel %vm2342, %v2319, %v1110
        %v2353 = vsel %vm2342, %v2320, %v1112
        %v2354 = vsel %vm2342, %v2321, %v1114
        %v2355 = vsel %vm2342, %v2322, %v1116
        %v2356 = vsel %vm2342, %v2323, %v1118
        %v2357 = vsel %vm2342, %v2324, %v1120
        %v2358 = vsel %vm2342, %v2325, %v1122
        %v2359 = vsel %vm2342, %v2326, %v1124
        %v2360 = vsel %vm2342, %v2327, %v1126
        %v2361 = vsel %vm2342, %v2328, %v1128
        %v2362 = vsel %vm2342, %v2329, %v1130
        %v2363 = vsel %vm2342, %v2330, %v1132
        %v2364 = vsel %vm2342, %v2331, %v1134
        %v2365 = vsel %vm2342, %v2332, %v1136
        %v2366 = vsel %vm2342, %v2333, %v1138
        %v2367 = vsel %vm2342, %v2334, %v1140
        %v2368 = vsel %vm2342, %v2335, %v1142
        %v2369 = vsel %vm2342, %v2336, %v1144
        %v2370 = vsel %vm2342, %v2337, %v1146
        %v2371 = vsel %vm2342, %v2338, %v1148
        %v2372 = vsel %vm2342, %v2339, %v1150
        %v2373 = vsel %vm2342, %v2340, %v1152
        %v2374 = vsel %vm2342, %v2341, %v1154
        %vm2375 = vcmask 162816
        %v2376 = vsel %vm2375, %v2343, %v1188
        %v2377 = vsel %vm2375, %v2344, %v1190
        %v2378 = vsel %vm2375, %v2345, %v1192
        %v2379 = vsel %vm2375, %v2346, %v1194
        %v2380 = vsel %vm2375, %v2347, %v1196
        %v2381 = vsel %vm2375, %v2348, %v1198
        %v2382 = vsel %vm2375, %v2349, %v1200
        %v2383 = vsel %vm2375, %v2350, %v1202
        %v2384 = vsel %vm2375, %v2351, %v1204
        %v2385 = vsel %vm2375, %v2352, %v1206
        %v2386 = vsel %vm2375, %v2353, %v1208
        %v2387 = vsel %vm2375, %v2354, %v1210
        %v2388 = vsel %vm2375, %v2355, %v1212
        %v2389 = vsel %vm2375, %v2356, %v1214
        %v2390 = vsel %vm2375, %v2357, %v1216
        %v2391 = vsel %vm2375, %v2358, %v1218
        %v2392 = vsel %vm2375, %v2359, %v1220
        %v2393 = vsel %vm2375, %v2360, %v1222
        %v2394 = vsel %vm2375, %v2361, %v1224
        %v2395 = vsel %vm2375, %v2362, %v1226
        %v2396 = vsel %vm2375, %v2363, %v1228
        %v2397 = vsel %vm2375, %v2364, %v1230
        %v2398 = vsel %vm2375, %v2365, %v1232
        %v2399 = vsel %vm2375, %v2366, %v1234
        %v2400 = vsel %vm2375, %v2367, %v1236
        %v2401 = vsel %vm2375, %v2368, %v1238
        %v2402 = vsel %vm2375, %v2369, %v1240
        %v2403 = vsel %vm2375, %v2370, %v1242
        %v2404 = vsel %vm2375, %v2371, %v1244
        %v2405 = vsel %vm2375, %v2372, %v1246
        %v2406 = vsel %vm2375, %v2373, %v1248
        %v2407 = vsel %vm2375, %v2374, %v1250
        %vm2408 = vcmask 195584
        %v2409 = vsel %vm2408, %v2376, %v1284
        %v2410 = vsel %vm2408, %v2377, %v1286
        %v2411 = vsel %vm2408, %v2378, %v1288
        %v2412 = vsel %vm2408, %v2379, %v1290
        %v2413 = vsel %vm2408, %v2380, %v1292
        %v2414 = vsel %vm2408, %v2381, %v1294
        %v2415 = vsel %vm2408, %v2382, %v1296
        %v2416 = vsel %vm2408, %v2383, %v1298
        %v2417 = vsel %vm2408, %v2384, %v1300
        %v2418 = vsel %vm2408, %v2385, %v1302
        %v2419 = vsel %vm2408, %v2386, %v1304
        %v2420 = vsel %vm2408, %v2387, %v1306
        %v2421 = vsel %vm2408, %v2388, %v1308
        %v2422 = vsel %vm2408, %v2389, %v1310
        %v2423 = vsel %vm2408, %v2390, %v1312
        %v2424 = vsel %vm2408, %v2391, %v1314
        %v2425 = vsel %vm2408, %v2392, %v1316
        %v2426 = vsel %vm2408, %v2393, %v1318
        %v2427 = vsel %vm2408, %v2394, %v1320
        %v2428 = vsel %vm2408, %v2395, %v1322
        %v2429 = vsel %vm2408, %v2396, %v1324
        %v2430 = vsel %vm2408, %v2397, %v1326
        %v2431 = vsel %vm2408, %v2398, %v1328
        %v2432 = vsel %vm2408, %v2399, %v1330
        %v2433 = vsel %vm2408, %v2400, %v1332
        %v2434 = vsel %vm2408, %v2401, %v1334
        %v2435 = vsel %vm2408, %v2402, %v1336
        %v2436 = vsel %vm2408, %v2403, %v1338
        %v2437 = vsel %vm2408, %v2404, %v1340
        %v2438 = vsel %vm2408, %v2405, %v1342
        %v2439 = vsel %vm2408, %v2406, %v1344
        %v2440 = vsel %vm2408, %v2407, %v1346
        %vm2441 = vcmask 228352
        %v2442 = vsel %vm2441, %v2409, %v1380
        %v2443 = vsel %vm2441, %v2410, %v1382
        %v2444 = vsel %vm2441, %v2411, %v1384
        %v2445 = vsel %vm2441, %v2412, %v1386
        %v2446 = vsel %vm2441, %v2413, %v1388
        %v2447 = vsel %vm2441, %v2414, %v1390
        %v2448 = vsel %vm2441, %v2415, %v1392
        %v2449 = vsel %vm2441, %v2416, %v1394
        %v2450 = vsel %vm2441, %v2417, %v1396
        %v2451 = vsel %vm2441, %v2418, %v1398
        %v2452 = vsel %vm2441, %v2419, %v1400
        %v2453 = vsel %vm2441, %v2420, %v1402
        %v2454 = vsel %vm2441, %v2421, %v1404
        %v2455 = vsel %vm2441, %v2422, %v1406
        %v2456 = vsel %vm2441, %v2423, %v1408
        %v2457 = vsel %vm2441, %v2424, %v1410
        %v2458 = vsel %vm2441, %v2425, %v1412
        %v2459 = vsel %vm2441, %v2426, %v1414
        %v2460 = vsel %vm2441, %v2427, %v1416
        %v2461 = vsel %vm2441, %v2428, %v1418
        %v2462 = vsel %vm2441, %v2429, %v1420
        %v2463 = vsel %vm2441, %v2430, %v1422
        %v2464 = vsel %vm2441, %v2431, %v1424
        %v2465 = vsel %vm2441, %v2432, %v1426
        %v2466 = vsel %vm2441, %v2433, %v1428
        %v2467 = vsel %vm2441, %v2434, %v1430
        %v2468 = vsel %vm2441, %v2435, %v1432
        %v2469 = vsel %vm2441, %v2436, %v1434
        %v2470 = vsel %vm2441, %v2437, %v1436
        %v2471 = vsel %vm2441, %v2438, %v1438
        %v2472 = vsel %vm2441, %v2439, %v1440
        %v2473 = vsel %vm2441, %v2440, %v1442
        %vm2474 = vcmask 261120
        %v2475 = vsel %vm2474, %v2442, %v1476
        %v2476 = vsel %vm2474, %v2443, %v1478
        %v2477 = vsel %vm2474, %v2444, %v1480
        %v2478 = vsel %vm2474, %v2445, %v1482
        %v2479 = vsel %vm2474, %v2446, %v1484
        %v2480 = vsel %vm2474, %v2447, %v1486
        %v2481 = vsel %vm2474, %v2448, %v1488
        %v2482 = vsel %vm2474, %v2449, %v1490
        %v2483 = vsel %vm2474, %v2450, %v1492
        %v2484 = vsel %vm2474, %v2451, %v1494
        %v2485 = vsel %vm2474, %v2452, %v1496
        %v2486 = vsel %vm2474, %v2453, %v1498
        %v2487 = vsel %vm2474, %v2454, %v1500
        %v2488 = vsel %vm2474, %v2455, %v1502
        %v2489 = vsel %vm2474, %v2456, %v1504
        %v2490 = vsel %vm2474, %v2457, %v1506
        %v2491 = vsel %vm2474, %v2458, %v1508
        %v2492 = vsel %vm2474, %v2459, %v1510
        %v2493 = vsel %vm2474, %v2460, %v1512
        %v2494 = vsel %vm2474, %v2461, %v1514
        %v2495 = vsel %vm2474, %v2462, %v1516
        %v2496 = vsel %vm2474, %v2463, %v1518
        %v2497 = vsel %vm2474, %v2464, %v1520
        %v2498 = vsel %vm2474, %v2465, %v1522
        %v2499 = vsel %vm2474, %v2466, %v1524
        %v2500 = vsel %vm2474, %v2467, %v1526
        %v2501 = vsel %vm2474, %v2468, %v1528
        %v2502 = vsel %vm2474, %v2469, %v1530
        %v2503 = vsel %vm2474, %v2470, %v1532
        %v2504 = vsel %vm2474, %v2471, %v1534
        %v2505 = vsel %vm2474, %v2472, %v1536
        %v2506 = vsel %vm2474, %v2473, %v1538
        %vm2507 = vcmask 293888
        %v2508 = vsel %vm2507, %v2475, %v1572
        %v2509 = vsel %vm2507, %v2476, %v1574
        %v2510 = vsel %vm2507, %v2477, %v1576
        %v2511 = vsel %vm2507, %v2478, %v1578
        %v2512 = vsel %vm2507, %v2479, %v1580
        %v2513 = vsel %vm2507, %v2480, %v1582
        %v2514 = vsel %vm2507, %v2481, %v1584
        %v2515 = vsel %vm2507, %v2482, %v1586
        %v2516 = vsel %vm2507, %v2483, %v1588
        %v2517 = vsel %vm2507, %v2484, %v1590
        %v2518 = vsel %vm2507, %v2485, %v1592
        %v2519 = vsel %vm2507, %v2486, %v1594
        %v2520 = vsel %vm2507, %v2487, %v1596
        %v2521 = vsel %vm2507, %v2488, %v1598
        %v2522 = vsel %vm2507, %v2489, %v1600
        %v2523 = vsel %vm2507, %v2490, %v1602
        %v2524 = vsel %vm2507, %v2491, %v1604
        %v2525 = vsel %vm2507, %v2492, %v1606
        %v2526 = vsel %vm2507, %v2493, %v1608
        %v2527 = vsel %vm2507, %v2494, %v1610
        %v2528 = vsel %vm2507, %v2495, %v1612
        %v2529 = vsel %vm2507, %v2496, %v1614
        %v2530 = vsel %vm2507, %v2497, %v1616
        %v2531 = vsel %vm2507, %v2498, %v1618
        %v2532 = vsel %vm2507, %v2499, %v1620
        %v2533 = vsel %vm2507, %v2500, %v1622
        %v2534 = vsel %vm2507, %v2501, %v1624
        %v2535 = vsel %vm2507, %v2502, %v1626
        %v2536 = vsel %vm2507, %v2503, %v1628
        %v2537 = vsel %vm2507, %v2504, %v1630
        %v2538 = vsel %vm2507, %v2505, %v1632
        %v2539 = vsel %vm2507, %v2506, %v1634
        %vm2540 = vcmask 326656
        %v2541 = vsel %vm2540, %v2508, %v1668
        %v2542 = vsel %vm2540, %v2509, %v1670
        %v2543 = vsel %vm2540, %v2510, %v1672
        %v2544 = vsel %vm2540, %v2511, %v1674
        %v2545 = vsel %vm2540, %v2512, %v1676
        %v2546 = vsel %vm2540, %v2513, %v1678
        %v2547 = vsel %vm2540, %v2514, %v1680
        %v2548 = vsel %vm2540, %v2515, %v1682
        %v2549 = vsel %vm2540, %v2516, %v1684
        %v2550 = vsel %vm2540, %v2517, %v1686
        %v2551 = vsel %vm2540, %v2518, %v1688
        %v2552 = vsel %vm2540, %v2519, %v1690
        %v2553 = vsel %vm2540, %v2520, %v1692
        %v2554 = vsel %vm2540, %v2521, %v1694
        %v2555 = vsel %vm2540, %v2522, %v1696
        %v2556 = vsel %vm2540, %v2523, %v1698
        %v2557 = vsel %vm2540, %v2524, %v1700
        %v2558 = vsel %vm2540, %v2525, %v1702
        %v2559 = vsel %vm2540, %v2526, %v1704
        %v2560 = vsel %vm2540, %v2527, %v1706
        %v2561 = vsel %vm2540, %v2528, %v1708
        %v2562 = vsel %vm2540, %v2529, %v1710
        %v2563 = vsel %vm2540, %v2530, %v1712
        %v2564 = vsel %vm2540, %v2531, %v1714
        %v2565 = vsel %vm2540, %v2532, %v1716
        %v2566 = vsel %vm2540, %v2533, %v1718
        %v2567 = vsel %vm2540, %v2534, %v1720
        %v2568 = vsel %vm2540, %v2535, %v1722
        %v2569 = vsel %vm2540, %v2536, %v1724
        %v2570 = vsel %vm2540, %v2537, %v1726
        %v2571 = vsel %vm2540, %v2538, %v1728
        %v2572 = vsel %vm2540, %v2539, %v1730
        %vm2573 = vcmask 359424
        %v2574 = vsel %vm2573, %v2541, %v1764
        %v2575 = vsel %vm2573, %v2542, %v1766
        %v2576 = vsel %vm2573, %v2543, %v1768
        %v2577 = vsel %vm2573, %v2544, %v1770
        %v2578 = vsel %vm2573, %v2545, %v1772
        %v2579 = vsel %vm2573, %v2546, %v1774
        %v2580 = vsel %vm2573, %v2547, %v1776
        %v2581 = vsel %vm2573, %v2548, %v1778
        %v2582 = vsel %vm2573, %v2549, %v1780
        %v2583 = vsel %vm2573, %v2550, %v1782
        %v2584 = vsel %vm2573, %v2551, %v1784
        %v2585 = vsel %vm2573, %v2552, %v1786
        %v2586 = vsel %vm2573, %v2553, %v1788
        %v2587 = vsel %vm2573, %v2554, %v1790
        %v2588 = vsel %vm2573, %v2555, %v1792
        %v2589 = vsel %vm2573, %v2556, %v1794
        %v2590 = vsel %vm2573, %v2557, %v1796
        %v2591 = vsel %vm2573, %v2558, %v1798
        %v2592 = vsel %vm2573, %v2559, %v1800
        %v2593 = vsel %vm2573, %v2560, %v1802
        %v2594 = vsel %vm2573, %v2561, %v1804
        %v2595 = vsel %vm2573, %v2562, %v1806
        %v2596 = vsel %vm2573, %v2563, %v1808
        %v2597 = vsel %vm2573, %v2564, %v1810
        %v2598 = vsel %vm2573, %v2565, %v1812
        %v2599 = vsel %vm2573, %v2566, %v1814
        %v2600 = vsel %vm2573, %v2567, %v1816
        %v2601 = vsel %vm2573, %v2568, %v1818
        %v2602 = vsel %vm2573, %v2569, %v1820
        %v2603 = vsel %vm2573, %v2570, %v1822
        %v2604 = vsel %vm2573, %v2571, %v1824
        %v2605 = vsel %vm2573, %v2572, %v1826
        %vm2606 = vcmask 392192
        %v2607 = vsel %vm2606, %v2574, %v1860
        %v2608 = vsel %vm2606, %v2575, %v1862
        %v2609 = vsel %vm2606, %v2576, %v1864
        %v2610 = vsel %vm2606, %v2577, %v1866
        %v2611 = vsel %vm2606, %v2578, %v1868
        %v2612 = vsel %vm2606, %v2579, %v1870
        %v2613 = vsel %vm2606, %v2580, %v1872
        %v2614 = vsel %vm2606, %v2581, %v1874
        %v2615 = vsel %vm2606, %v2582, %v1876
        %v2616 = vsel %vm2606, %v2583, %v1878
        %v2617 = vsel %vm2606, %v2584, %v1880
        %v2618 = vsel %vm2606, %v2585, %v1882
        %v2619 = vsel %vm2606, %v2586, %v1884
        %v2620 = vsel %vm2606, %v2587, %v1886
        %v2621 = vsel %vm2606, %v2588, %v1888
        %v2622 = vsel %vm2606, %v2589, %v1890
        %v2623 = vsel %vm2606, %v2590, %v1892
        %v2624 = vsel %vm2606, %v2591, %v1894
        %v2625 = vsel %vm2606, %v2592, %v1896
        %v2626 = vsel %vm2606, %v2593, %v1898
        %v2627 = vsel %vm2606, %v2594, %v1900
        %v2628 = vsel %vm2606, %v2595, %v1902
        %v2629 = vsel %vm2606, %v2596, %v1904
        %v2630 = vsel %vm2606, %v2597, %v1906
        %v2631 = vsel %vm2606, %v2598, %v1908
        %v2632 = vsel %vm2606, %v2599, %v1910
        %v2633 = vsel %vm2606, %v2600, %v1912
        %v2634 = vsel %vm2606, %v2601, %v1914
        %v2635 = vsel %vm2606, %v2602, %v1916
        %v2636 = vsel %vm2606, %v2603, %v1918
        %v2637 = vsel %vm2606, %v2604, %v1920
        %v2638 = vsel %vm2606, %v2605, %v1922
        %vm2639 = vcmask 424960
        %v2640 = vsel %vm2639, %v2607, %v1956
        %v2641 = vsel %vm2639, %v2608, %v1958
        %v2642 = vsel %vm2639, %v2609, %v1960
        %v2643 = vsel %vm2639, %v2610, %v1962
        %v2644 = vsel %vm2639, %v2611, %v1964
        %v2645 = vsel %vm2639, %v2612, %v1966
        %v2646 = vsel %vm2639, %v2613, %v1968
        %v2647 = vsel %vm2639, %v2614, %v1970
        %v2648 = vsel %vm2639, %v2615, %v1972
        %v2649 = vsel %vm2639, %v2616, %v1974
        %v2650 = vsel %vm2639, %v2617, %v1976
        %v2651 = vsel %vm2639, %v2618, %v1978
        %v2652 = vsel %vm2639, %v2619, %v1980
        %v2653 = vsel %vm2639, %v2620, %v1982
        %v2654 = vsel %vm2639, %v2621, %v1984
        %v2655 = vsel %vm2639, %v2622, %v1986
        %v2656 = vsel %vm2639, %v2623, %v1988
        %v2657 = vsel %vm2639, %v2624, %v1990
        %v2658 = vsel %vm2639, %v2625, %v1992
        %v2659 = vsel %vm2639, %v2626, %v1994
        %v2660 = vsel %vm2639, %v2627, %v1996
        %v2661 = vsel %vm2639, %v2628, %v1998
        %v2662 = vsel %vm2639, %v2629, %v2000
        %v2663 = vsel %vm2639, %v2630, %v2002
        %v2664 = vsel %vm2639, %v2631, %v2004
        %v2665 = vsel %vm2639, %v2632, %v2006
        %v2666 = vsel %vm2639, %v2633, %v2008
        %v2667 = vsel %vm2639, %v2634, %v2010
        %v2668 = vsel %vm2639, %v2635, %v2012
        %v2669 = vsel %vm2639, %v2636, %v2014
        %v2670 = vsel %vm2639, %v2637, %v2016
        %v2671 = vsel %vm2639, %v2638, %v2018
        %vm2672 = vcmask 457728
        %v2673 = vsel %vm2672, %v2640, %v2052
        %v2674 = vsel %vm2672, %v2641, %v2054
        %v2675 = vsel %vm2672, %v2642, %v2056
        %v2676 = vsel %vm2672, %v2643, %v2058
        %v2677 = vsel %vm2672, %v2644, %v2060
        %v2678 = vsel %vm2672, %v2645, %v2062
        %v2679 = vsel %vm2672, %v2646, %v2064
        %v2680 = vsel %vm2672, %v2647, %v2066
        %v2681 = vsel %vm2672, %v2648, %v2068
        %v2682 = vsel %vm2672, %v2649, %v2070
        %v2683 = vsel %vm2672, %v2650, %v2072
        %v2684 = vsel %vm2672, %v2651, %v2074
        %v2685 = vsel %vm2672, %v2652, %v2076
        %v2686 = vsel %vm2672, %v2653, %v2078
        %v2687 = vsel %vm2672, %v2654, %v2080
        %v2688 = vsel %vm2672, %v2655, %v2082
        %v2689 = vsel %vm2672, %v2656, %v2084
        %v2690 = vsel %vm2672, %v2657, %v2086
        %v2691 = vsel %vm2672, %v2658, %v2088
        %v2692 = vsel %vm2672, %v2659, %v2090
        %v2693 = vsel %vm2672, %v2660, %v2092
        %v2694 = vsel %vm2672, %v2661, %v2094
        %v2695 = vsel %vm2672, %v2662, %v2096
        %v2696 = vsel %vm2672, %v2663, %v2098
        %v2697 = vsel %vm2672, %v2664, %v2100
        %v2698 = vsel %vm2672, %v2665, %v2102
        %v2699 = vsel %vm2672, %v2666, %v2104
        %v2700 = vsel %vm2672, %v2667, %v2106
        %v2701 = vsel %vm2672, %v2668, %v2108
        %v2702 = vsel %vm2672, %v2669, %v2110
        %v2703 = vsel %vm2672, %v2670, %v2112
        %v2704 = vsel %vm2672, %v2671, %v2114
        %vm2705 = vcmask 490496
        %v2706 = vsel %vm2705, %v2673, %v2148
        %v2707 = vsel %vm2705, %v2674, %v2150
        %v2708 = vsel %vm2705, %v2675, %v2152
        %v2709 = vsel %vm2705, %v2676, %v2154
        %v2710 = vsel %vm2705, %v2677, %v2156
        %v2711 = vsel %vm2705, %v2678, %v2158
        %v2712 = vsel %vm2705, %v2679, %v2160
        %v2713 = vsel %vm2705, %v2680, %v2162
        %v2714 = vsel %vm2705, %v2681, %v2164
        %v2715 = vsel %vm2705, %v2682, %v2166
        %v2716 = vsel %vm2705, %v2683, %v2168
        %v2717 = vsel %vm2705, %v2684, %v2170
        %v2718 = vsel %vm2705, %v2685, %v2172
        %v2719 = vsel %vm2705, %v2686, %v2174
        %v2720 = vsel %vm2705, %v2687, %v2176
        %v2721 = vsel %vm2705, %v2688, %v2178
        %v2722 = vsel %vm2705, %v2689, %v2180
        %v2723 = vsel %vm2705, %v2690, %v2182
        %v2724 = vsel %vm2705, %v2691, %v2184
        %v2725 = vsel %vm2705, %v2692, %v2186
        %v2726 = vsel %vm2705, %v2693, %v2188
        %v2727 = vsel %vm2705, %v2694, %v2190
        %v2728 = vsel %vm2705, %v2695, %v2192
        %v2729 = vsel %vm2705, %v2696, %v2194
        %v2730 = vsel %vm2705, %v2697, %v2196
        %v2731 = vsel %vm2705, %v2698, %v2198
        %v2732 = vsel %vm2705, %v2699, %v2200
        %v2733 = vsel %vm2705, %v2700, %v2202
        %v2734 = vsel %vm2705, %v2701, %v2204
        %v2735 = vsel %vm2705, %v2702, %v2206
        %v2736 = vsel %vm2705, %v2703, %v2208
        %v2737 = vsel %vm2705, %v2704, %v2210
        %2738 = vrot.lane.b32.xlu0 %v483, 4
        %v2739 = vpop.permute.xlu0 %2738
        %2740 = vrot.lane.b32.xlu0 %v486, 4
        %v2741 = vpop.permute.xlu0 %2740
        %2742 = vrot.lane.b32.xlu0 %v489, 4
        %v2743 = vpop.permute.xlu0 %2742
        %2744 = vrot.lane.b32.xlu0 %v492, 4
        %v2745 = vpop.permute.xlu0 %2744
        %2746 = vrot.lane.b32.xlu0 %v495, 4
        %v2747 = vpop.permute.xlu0 %2746
        %2748 = vrot.lane.b32.xlu0 %v498, 4
        %v2749 = vpop.permute.xlu0 %2748
        %2750 = vrot.lane.b32.xlu0 %v572, 4
        %v2751 = vpop.permute.xlu0 %2750
        %2752 = vrot.lane.b32.xlu0 %v604, 4
        %v2753 = vpop.permute.xlu0 %2752
        %2754 = vrot.lane.b32.xlu0 %v507, 4
        %v2755 = vpop.permute.xlu0 %2754
        %2756 = vrot.lane.b32.xlu0 %v510, 4
        %v2757 = vpop.permute.xlu0 %2756
        %2758 = vrot.lane.b32.xlu0 %v513, 4
        %v2759 = vpop.permute.xlu0 %2758
        %2760 = vrot.lane.b32.xlu0 %v516, 4
        %v2761 = vpop.permute.xlu0 %2760
        %2762 = vrot.lane.b32.xlu0 %v519, 4
        %v2763 = vpop.permute.xlu0 %2762
        %2764 = vrot.lane.b32.xlu0 %v522, 4
        %v2765 = vpop.permute.xlu0 %2764
        %2766 = vrot.lane.b32.xlu0 %v575, 4
        %v2767 = vpop.permute.xlu0 %2766
        %2768 = vrot.lane.b32.xlu0 %v607, 4
        %v2769 = vpop.permute.xlu0 %2768
        %2770 = vrot.lane.b32.xlu0 %v531, 4
        %v2771 = vpop.permute.xlu0 %2770
        %2772 = vrot.lane.b32.xlu0 %v534, 4
        %v2773 = vpop.permute.xlu0 %2772
        %2774 = vrot.lane.b32.xlu0 %v537, 4
        %v2775 = vpop.permute.xlu0 %2774
        %2776 = vrot.lane.b32.xlu0 %v540, 4
        %v2777 = vpop.permute.xlu0 %2776
        %2778 = vrot.lane.b32.xlu0 %v543, 4
        %v2779 = vpop.permute.xlu0 %2778
        %2780 = vrot.lane.b32.xlu0 %v546, 4
        %v2781 = vpop.permute.xlu0 %2780
        %2782 = vrot.lane.b32.xlu0 %v578, 4
        %v2783 = vpop.permute.xlu0 %2782
        %2784 = vrot.lane.b32.xlu0 %v610, 4
        %v2785 = vpop.permute.xlu0 %2784
        %2786 = vrot.lane.b32.xlu0 %v659, 4
        %v2787 = vpop.permute.xlu0 %2786
        %2788 = vrot.lane.b32.xlu0 %v662, 4
        %v2789 = vpop.permute.xlu0 %2788
        %2790 = vrot.lane.b32.xlu0 %v665, 4
        %v2791 = vpop.permute.xlu0 %2790
        %2792 = vrot.lane.b32.xlu0 %v668, 4
        %v2793 = vpop.permute.xlu0 %2792
        %2794 = vrot.lane.b32.xlu0 %v671, 4
        %v2795 = vpop.permute.xlu0 %2794
        %2796 = vrot.lane.b32.xlu0 %v674, 4
        %v2797 = vpop.permute.xlu0 %2796
        %2798 = vrot.lane.b32.xlu0 %v682, 4
        %v2799 = vpop.permute.xlu0 %2798
        %2800 = vrot.lane.b32.xlu0 %v722, 4
        %v2801 = vpop.permute.xlu0 %2800
        %2834 = vrot.lane.b32.xlu0 %v209, 8
        %v2835 = vpop.permute.xlu0 %2834
        %2836 = vrot.lane.b32.xlu0 %v211, 8
        %v2837 = vpop.permute.xlu0 %2836
        %2838 = vrot.lane.b32.xlu0 %v213, 8
        %v2839 = vpop.permute.xlu0 %2838
        %2840 = vrot.lane.b32.xlu0 %v215, 8
        %v2841 = vpop.permute.xlu0 %2840
        %2842 = vrot.lane.b32.xlu0 %v217, 8
        %v2843 = vpop.permute.xlu0 %2842
        %2844 = vrot.lane.b32.xlu0 %v219, 8
        %v2845 = vpop.permute.xlu0 %2844
        %2846 = vrot.lane.b32.xlu0 %v221, 8
        %v2847 = vpop.permute.xlu0 %2846
        %2848 = vrot.lane.b32.xlu0 %v223, 8
        %v2849 = vpop.permute.xlu0 %2848
        %2850 = vrot.lane.b32.xlu0 %v229, 8
        %v2851 = vpop.permute.xlu0 %2850
        %2852 = vrot.lane.b32.xlu0 %v231, 8
        %v2853 = vpop.permute.xlu0 %2852
        %2854 = vrot.lane.b32.xlu0 %v233, 8
        %v2855 = vpop.permute.xlu0 %2854
        %2856 = vrot.lane.b32.xlu0 %v235, 8
        %v2857 = vpop.permute.xlu0 %2856
        %2858 = vrot.lane.b32.xlu0 %v237, 8
        %v2859 = vpop.permute.xlu0 %2858
        %2860 = vrot.lane.b32.xlu0 %v239, 8
        %v2861 = vpop.permute.xlu0 %2860
        %2862 = vrot.lane.b32.xlu0 %v241, 8
        %v2863 = vpop.permute.xlu0 %2862
        %2864 = vrot.lane.b32.xlu0 %v243, 8
        %v2865 = vpop.permute.xlu0 %2864
        %2866 = vrot.lane.b32.xlu0 %v249, 8
        %v2867 = vpop.permute.xlu0 %2866
        %2868 = vrot.lane.b32.xlu0 %v251, 8
        %v2869 = vpop.permute.xlu0 %2868
        %2870 = vrot.lane.b32.xlu0 %v253, 8
        %v2871 = vpop.permute.xlu0 %2870
        %2872 = vrot.lane.b32.xlu0 %v255, 8
        %v2873 = vpop.permute.xlu0 %2872
        %2874 = vrot.lane.b32.xlu0 %v257, 8
        %v2875 = vpop.permute.xlu0 %2874
        %2876 = vrot.lane.b32.xlu0 %v259, 8
        %v2877 = vpop.permute.xlu0 %2876
        %2878 = vrot.lane.b32.xlu0 %v261, 8
        %v2879 = vpop.permute.xlu0 %2878
        %2880 = vrot.lane.b32.xlu0 %v263, 8
        %v2881 = vpop.permute.xlu0 %2880
        %2882 = vrot.lane.b32.xlu0 %v269, 8
        %v2883 = vpop.permute.xlu0 %2882
        %2884 = vrot.lane.b32.xlu0 %v271, 8
        %v2885 = vpop.permute.xlu0 %2884
        %2886 = vrot.lane.b32.xlu0 %v273, 8
        %v2887 = vpop.permute.xlu0 %2886
        %2888 = vrot.lane.b32.xlu0 %v275, 8
        %v2889 = vpop.permute.xlu0 %2888
        %2890 = vrot.lane.b32.xlu0 %v277, 8
        %v2891 = vpop.permute.xlu0 %2890
        %2892 = vrot.lane.b32.xlu0 %v279, 8
        %v2893 = vpop.permute.xlu0 %2892
        %2894 = vrot.lane.b32.xlu0 %v281, 8
        %v2895 = vpop.permute.xlu0 %2894
        %2896 = vrot.lane.b32.xlu0 %v283, 8
        %v2897 = vpop.permute.xlu0 %2896
        %2930 = vrot.lane.b32.xlu0 %v404, 12
        %v2931 = vpop.permute.xlu0 %2930
        %2932 = vrot.lane.b32.xlu0 %v407, 12
        %v2933 = vpop.permute.xlu0 %2932
        %2934 = vrot.lane.b32.xlu0 %v410, 12
        %v2935 = vpop.permute.xlu0 %2934
        %2936 = vrot.lane.b32.xlu0 %v413, 12
        %v2937 = vpop.permute.xlu0 %2936
        %2938 = vrot.lane.b32.xlu0 %v416, 12
        %v2939 = vpop.permute.xlu0 %2938
        %2940 = vrot.lane.b32.xlu0 %v419, 12
        %v2941 = vpop.permute.xlu0 %2940
        %2942 = vrot.lane.b32.xlu0 %v422, 12
        %v2943 = vpop.permute.xlu0 %2942
        %2944 = vrot.lane.b32.xlu0 %v425, 12
        %v2945 = vpop.permute.xlu0 %2944
        %2946 = vrot.lane.b32.xlu0 %v428, 12
        %v2947 = vpop.permute.xlu0 %2946
        %2948 = vrot.lane.b32.xlu0 %v431, 12
        %v2949 = vpop.permute.xlu0 %2948
        %2950 = vrot.lane.b32.xlu0 %v434, 12
        %v2951 = vpop.permute.xlu0 %2950
        %2952 = vrot.lane.b32.xlu0 %v437, 12
        %v2953 = vpop.permute.xlu0 %2952
        %2954 = vrot.lane.b32.xlu0 %v440, 12
        %v2955 = vpop.permute.xlu0 %2954
        %2956 = vrot.lane.b32.xlu0 %v443, 12
        %v2957 = vpop.permute.xlu0 %2956
        %2958 = vrot.lane.b32.xlu0 %v446, 12
        %v2959 = vpop.permute.xlu0 %2958
        %2960 = vrot.lane.b32.xlu0 %v449, 12
        %v2961 = vpop.permute.xlu0 %2960
        %2962 = vrot.lane.b32.xlu0 %v629, 12
        %v2963 = vpop.permute.xlu0 %2962
        %2964 = vrot.lane.b32.xlu0 %v632, 12
        %v2965 = vpop.permute.xlu0 %2964
        %2966 = vrot.lane.b32.xlu0 %v635, 12
        %v2967 = vpop.permute.xlu0 %2966
        %2968 = vrot.lane.b32.xlu0 %v638, 12
        %v2969 = vpop.permute.xlu0 %2968
        %2970 = vrot.lane.b32.xlu0 %v641, 12
        %v2971 = vpop.permute.xlu0 %2970
        %2972 = vrot.lane.b32.xlu0 %v644, 12
        %v2973 = vpop.permute.xlu0 %2972
        %2974 = vrot.lane.b32.xlu0 %v647, 12
        %v2975 = vpop.permute.xlu0 %2974
        %2976 = vrot.lane.b32.xlu0 %v650, 12
        %v2977 = vpop.permute.xlu0 %2976
        %2978 = vrot.lane.b32.xlu0 %v741, 12
        %v2979 = vpop.permute.xlu0 %2978
        %2980 = vrot.lane.b32.xlu0 %v744, 12
        %v2981 = vpop.permute.xlu0 %2980
        %2982 = vrot.lane.b32.xlu0 %v747, 12
        %v2983 = vpop.permute.xlu0 %2982
        %2984 = vrot.lane.b32.xlu0 %v750, 12
        %v2985 = vpop.permute.xlu0 %2984
        %2986 = vrot.lane.b32.xlu0 %v753, 12
        %v2987 = vpop.permute.xlu0 %2986
        %2988 = vrot.lane.b32.xlu0 %v756, 12
        %v2989 = vpop.permute.xlu0 %2988
        %2990 = vrot.lane.b32.xlu0 %v759, 12
        %v2991 = vpop.permute.xlu0 %2990
        %2992 = vrot.lane.b32.xlu0 %v762, 12
        %v2993 = vpop.permute.xlu0 %2992
        %3026 = vrot.lane.b32.xlu0 %v501, 16
        %v3027 = vpop.permute.xlu0 %3026
        %3028 = vrot.lane.b32.xlu0 %v504, 16
        %v3029 = vpop.permute.xlu0 %3028
        %3030 = vrot.lane.b32.xlu0 %v507, 16
        %v3031 = vpop.permute.xlu0 %3030
        %3032 = vrot.lane.b32.xlu0 %v510, 16
        %v3033 = vpop.permute.xlu0 %3032
        %3034 = vrot.lane.b32.xlu0 %v513, 16
        %v3035 = vpop.permute.xlu0 %3034
        %3036 = vrot.lane.b32.xlu0 %v516, 16
        %v3037 = vpop.permute.xlu0 %3036
        %3038 = vrot.lane.b32.xlu0 %v519, 16
        %v3039 = vpop.permute.xlu0 %3038
        %3040 = vrot.lane.b32.xlu0 %v522, 16
        %v3041 = vpop.permute.xlu0 %3040
        %3042 = vrot.lane.b32.xlu0 %v525, 16
        %v3043 = vpop.permute.xlu0 %3042
        %3044 = vrot.lane.b32.xlu0 %v528, 16
        %v3045 = vpop.permute.xlu0 %3044
        %3046 = vrot.lane.b32.xlu0 %v531, 16
        %v3047 = vpop.permute.xlu0 %3046
        %3048 = vrot.lane.b32.xlu0 %v534, 16
        %v3049 = vpop.permute.xlu0 %3048
        %3050 = vrot.lane.b32.xlu0 %v537, 16
        %v3051 = vpop.permute.xlu0 %3050
        %3052 = vrot.lane.b32.xlu0 %v540, 16
        %v3053 = vpop.permute.xlu0 %3052
        %3054 = vrot.lane.b32.xlu0 %v543, 16
        %v3055 = vpop.permute.xlu0 %3054
        %3056 = vrot.lane.b32.xlu0 %v546, 16
        %v3057 = vpop.permute.xlu0 %3056
        %3058 = vrot.lane.b32.xlu0 %v653, 16
        %v3059 = vpop.permute.xlu0 %3058
        %3060 = vrot.lane.b32.xlu0 %v656, 16
        %v3061 = vpop.permute.xlu0 %3060
        %3062 = vrot.lane.b32.xlu0 %v659, 16
        %v3063 = vpop.permute.xlu0 %3062
        %3064 = vrot.lane.b32.xlu0 %v662, 16
        %v3065 = vpop.permute.xlu0 %3064
        %3066 = vrot.lane.b32.xlu0 %v665, 16
        %v3067 = vpop.permute.xlu0 %3066
        %3068 = vrot.lane.b32.xlu0 %v668, 16
        %v3069 = vpop.permute.xlu0 %3068
        %3070 = vrot.lane.b32.xlu0 %v671, 16
        %v3071 = vpop.permute.xlu0 %3070
        %3072 = vrot.lane.b32.xlu0 %v674, 16
        %v3073 = vpop.permute.xlu0 %3072
        %3074 = vrot.lane.b32.xlu0 %v765, 16
        %v3075 = vpop.permute.xlu0 %3074
        %3076 = vrot.lane.b32.xlu0 %v768, 16
        %v3077 = vpop.permute.xlu0 %3076
        %3078 = vrot.lane.b32.xlu0 %v771, 16
        %v3079 = vpop.permute.xlu0 %3078
        %3080 = vrot.lane.b32.xlu0 %v774, 16
        %v3081 = vpop.permute.xlu0 %3080
        %3082 = vrot.lane.b32.xlu0 %v777, 16
        %v3083 = vpop.permute.xlu0 %3082
        %3084 = vrot.lane.b32.xlu0 %v780, 16
        %v3085 = vpop.permute.xlu0 %3084
        %3086 = vrot.lane.b32.xlu0 %v783, 16
        %v3087 = vpop.permute.xlu0 %3086
        %3088 = vrot.lane.b32.xlu0 %v786, 16
        %v3089 = vpop.permute.xlu0 %3088
        %3122 = vrot.lane.b32.xlu0 %v211, 20
        %v3123 = vpop.permute.xlu0 %3122
        %3124 = vrot.lane.b32.xlu0 %v213, 20
        %v3125 = vpop.permute.xlu0 %3124
        %3126 = vrot.lane.b32.xlu0 %v215, 20
        %v3127 = vpop.permute.xlu0 %3126
        %3128 = vrot.lane.b32.xlu0 %v217, 20
        %v3129 = vpop.permute.xlu0 %3128
        %3130 = vrot.lane.b32.xlu0 %v219, 20
        %v3131 = vpop.permute.xlu0 %3130
        %3132 = vrot.lane.b32.xlu0 %v221, 20
        %v3133 = vpop.permute.xlu0 %3132
        %3134 = vrot.lane.b32.xlu0 %v223, 20
        %v3135 = vpop.permute.xlu0 %3134
        %3136 = vrot.lane.b32.xlu0 %v225, 20
        %v3137 = vpop.permute.xlu0 %3136
        %3138 = vrot.lane.b32.xlu0 %v231, 20
        %v3139 = vpop.permute.xlu0 %3138
        %3140 = vrot.lane.b32.xlu0 %v233, 20
        %v3141 = vpop.permute.xlu0 %3140
        %3142 = vrot.lane.b32.xlu0 %v235, 20
        %v3143 = vpop.permute.xlu0 %3142
        %3144 = vrot.lane.b32.xlu0 %v237, 20
        %v3145 = vpop.permute.xlu0 %3144
        %3146 = vrot.lane.b32.xlu0 %v239, 20
        %v3147 = vpop.permute.xlu0 %3146
        %3148 = vrot.lane.b32.xlu0 %v241, 20
        %v3149 = vpop.permute.xlu0 %3148
        %3150 = vrot.lane.b32.xlu0 %v243, 20
        %v3151 = vpop.permute.xlu0 %3150
        %3152 = vrot.lane.b32.xlu0 %v245, 20
        %v3153 = vpop.permute.xlu0 %3152
        %3154 = vrot.lane.b32.xlu0 %v251, 20
        %v3155 = vpop.permute.xlu0 %3154
        %3156 = vrot.lane.b32.xlu0 %v253, 20
        %v3157 = vpop.permute.xlu0 %3156
        %3158 = vrot.lane.b32.xlu0 %v255, 20
        %v3159 = vpop.permute.xlu0 %3158
        %3160 = vrot.lane.b32.xlu0 %v257, 20
        %v3161 = vpop.permute.xlu0 %3160
        %3162 = vrot.lane.b32.xlu0 %v259, 20
        %v3163 = vpop.permute.xlu0 %3162
        %3164 = vrot.lane.b32.xlu0 %v261, 20
        %v3165 = vpop.permute.xlu0 %3164
        %3166 = vrot.lane.b32.xlu0 %v263, 20
        %v3167 = vpop.permute.xlu0 %3166
        %3168 = vrot.lane.b32.xlu0 %v265, 20
        %v3169 = vpop.permute.xlu0 %3168
        %3170 = vrot.lane.b32.xlu0 %v271, 20
        %v3171 = vpop.permute.xlu0 %3170
        %3172 = vrot.lane.b32.xlu0 %v273, 20
        %v3173 = vpop.permute.xlu0 %3172
        %3174 = vrot.lane.b32.xlu0 %v275, 20
        %v3175 = vpop.permute.xlu0 %3174
        %3176 = vrot.lane.b32.xlu0 %v277, 20
        %v3177 = vpop.permute.xlu0 %3176
        %3178 = vrot.lane.b32.xlu0 %v279, 20
        %v3179 = vpop.permute.xlu0 %3178
        %3180 = vrot.lane.b32.xlu0 %v281, 20
        %v3181 = vpop.permute.xlu0 %3180
        %3182 = vrot.lane.b32.xlu0 %v283, 20
        %v3183 = vpop.permute.xlu0 %3182
        %3184 = vrot.lane.b32.xlu0 %v285, 20
        %v3185 = vpop.permute.xlu0 %3184
        %3218 = vrot.lane.b32.xlu0 %v407, 24
        %v3219 = vpop.permute.xlu0 %3218
        %3220 = vrot.lane.b32.xlu0 %v410, 24
        %v3221 = vpop.permute.xlu0 %3220
        %3222 = vrot.lane.b32.xlu0 %v413, 24
        %v3223 = vpop.permute.xlu0 %3222
        %3224 = vrot.lane.b32.xlu0 %v416, 24
        %v3225 = vpop.permute.xlu0 %3224
        %3226 = vrot.lane.b32.xlu0 %v419, 24
        %v3227 = vpop.permute.xlu0 %3226
        %3228 = vrot.lane.b32.xlu0 %v422, 24
        %v3229 = vpop.permute.xlu0 %3228
        %3230 = vrot.lane.b32.xlu0 %v425, 24
        %v3231 = vpop.permute.xlu0 %3230
        %3232 = vrot.lane.b32.xlu0 %v563, 24
        %v3233 = vpop.permute.xlu0 %3232
        %3234 = vrot.lane.b32.xlu0 %v431, 24
        %v3235 = vpop.permute.xlu0 %3234
        %3236 = vrot.lane.b32.xlu0 %v434, 24
        %v3237 = vpop.permute.xlu0 %3236
        %3238 = vrot.lane.b32.xlu0 %v437, 24
        %v3239 = vpop.permute.xlu0 %3238
        %3240 = vrot.lane.b32.xlu0 %v440, 24
        %v3241 = vpop.permute.xlu0 %3240
        %3242 = vrot.lane.b32.xlu0 %v443, 24
        %v3243 = vpop.permute.xlu0 %3242
        %3244 = vrot.lane.b32.xlu0 %v446, 24
        %v3245 = vpop.permute.xlu0 %3244
        %3246 = vrot.lane.b32.xlu0 %v449, 24
        %v3247 = vpop.permute.xlu0 %3246
        %3248 = vrot.lane.b32.xlu0 %v566, 24
        %v3249 = vpop.permute.xlu0 %3248
        %3250 = vrot.lane.b32.xlu0 %v632, 24
        %v3251 = vpop.permute.xlu0 %3250
        %3252 = vrot.lane.b32.xlu0 %v635, 24
        %v3253 = vpop.permute.xlu0 %3252
        %3254 = vrot.lane.b32.xlu0 %v638, 24
        %v3255 = vpop.permute.xlu0 %3254
        %3256 = vrot.lane.b32.xlu0 %v641, 24
        %v3257 = vpop.permute.xlu0 %3256
        %3258 = vrot.lane.b32.xlu0 %v644, 24
        %v3259 = vpop.permute.xlu0 %3258
        %3260 = vrot.lane.b32.xlu0 %v647, 24
        %v3261 = vpop.permute.xlu0 %3260
        %3262 = vrot.lane.b32.xlu0 %v650, 24
        %v3263 = vpop.permute.xlu0 %3262
        %3264 = vrot.lane.b32.xlu0 %v679, 24
        %v3265 = vpop.permute.xlu0 %3264
        %3266 = vrot.lane.b32.xlu0 %v744, 24
        %v3267 = vpop.permute.xlu0 %3266
        %3268 = vrot.lane.b32.xlu0 %v747, 24
        %v3269 = vpop.permute.xlu0 %3268
        %3270 = vrot.lane.b32.xlu0 %v750, 24
        %v3271 = vpop.permute.xlu0 %3270
        %3272 = vrot.lane.b32.xlu0 %v753, 24
        %v3273 = vpop.permute.xlu0 %3272
        %3274 = vrot.lane.b32.xlu0 %v756, 24
        %v3275 = vpop.permute.xlu0 %3274
        %3276 = vrot.lane.b32.xlu0 %v759, 24
        %v3277 = vpop.permute.xlu0 %3276
        %3278 = vrot.lane.b32.xlu0 %v762, 24
        %v3279 = vpop.permute.xlu0 %3278
        %3280 = vrot.lane.b32.xlu0 %v791, 24
        %v3281 = vpop.permute.xlu0 %3280
        %3314 = vrot.lane.b32.xlu0 %v504, 28
        %v3315 = vpop.permute.xlu0 %3314
        %3316 = vrot.lane.b32.xlu0 %v507, 28
        %v3317 = vpop.permute.xlu0 %3316
        %3318 = vrot.lane.b32.xlu0 %v510, 28
        %v3319 = vpop.permute.xlu0 %3318
        %3320 = vrot.lane.b32.xlu0 %v513, 28
        %v3321 = vpop.permute.xlu0 %3320
        %3322 = vrot.lane.b32.xlu0 %v516, 28
        %v3323 = vpop.permute.xlu0 %3322
        %3324 = vrot.lane.b32.xlu0 %v519, 28
        %v3325 = vpop.permute.xlu0 %3324
        %3326 = vrot.lane.b32.xlu0 %v522, 28
        %v3327 = vpop.permute.xlu0 %3326
        %3328 = vrot.lane.b32.xlu0 %v575, 28
        %v3329 = vpop.permute.xlu0 %3328
        %3330 = vrot.lane.b32.xlu0 %v528, 28
        %v3331 = vpop.permute.xlu0 %3330
        %3332 = vrot.lane.b32.xlu0 %v531, 28
        %v3333 = vpop.permute.xlu0 %3332
        %3334 = vrot.lane.b32.xlu0 %v534, 28
        %v3335 = vpop.permute.xlu0 %3334
        %3336 = vrot.lane.b32.xlu0 %v537, 28
        %v3337 = vpop.permute.xlu0 %3336
        %3338 = vrot.lane.b32.xlu0 %v540, 28
        %v3339 = vpop.permute.xlu0 %3338
        %3340 = vrot.lane.b32.xlu0 %v543, 28
        %v3341 = vpop.permute.xlu0 %3340
        %3342 = vrot.lane.b32.xlu0 %v546, 28
        %v3343 = vpop.permute.xlu0 %3342
        %3344 = vrot.lane.b32.xlu0 %v578, 28
        %v3345 = vpop.permute.xlu0 %3344
        %3346 = vrot.lane.b32.xlu0 %v656, 28
        %v3347 = vpop.permute.xlu0 %3346
        %3348 = vrot.lane.b32.xlu0 %v659, 28
        %v3349 = vpop.permute.xlu0 %3348
        %3350 = vrot.lane.b32.xlu0 %v662, 28
        %v3351 = vpop.permute.xlu0 %3350
        %3352 = vrot.lane.b32.xlu0 %v665, 28
        %v3353 = vpop.permute.xlu0 %3352
        %3354 = vrot.lane.b32.xlu0 %v668, 28
        %v3355 = vpop.permute.xlu0 %3354
        %3356 = vrot.lane.b32.xlu0 %v671, 28
        %v3357 = vpop.permute.xlu0 %3356
        %3358 = vrot.lane.b32.xlu0 %v674, 28
        %v3359 = vpop.permute.xlu0 %3358
        %3360 = vrot.lane.b32.xlu0 %v682, 28
        %v3361 = vpop.permute.xlu0 %3360
        %3362 = vrot.lane.b32.xlu0 %v768, 28
        %v3363 = vpop.permute.xlu0 %3362
        %3364 = vrot.lane.b32.xlu0 %v771, 28
        %v3365 = vpop.permute.xlu0 %3364
        %3366 = vrot.lane.b32.xlu0 %v774, 28
        %v3367 = vpop.permute.xlu0 %3366
        %3368 = vrot.lane.b32.xlu0 %v777, 28
        %v3369 = vpop.permute.xlu0 %3368
        %3370 = vrot.lane.b32.xlu0 %v780, 28
        %v3371 = vpop.permute.xlu0 %3370
        %3372 = vrot.lane.b32.xlu0 %v783, 28
        %v3373 = vpop.permute.xlu0 %3372
        %3374 = vrot.lane.b32.xlu0 %v786, 28
        %v3375 = vpop.permute.xlu0 %3374
        %3376 = vrot.lane.b32.xlu0 %v794, 28
        %v3377 = vpop.permute.xlu0 %3376
        %3410 = vrot.lane.b32.xlu0 %v213, 32
        %v3411 = vpop.permute.xlu0 %3410
        %3412 = vrot.lane.b32.xlu0 %v215, 32
        %v3413 = vpop.permute.xlu0 %3412
        %3414 = vrot.lane.b32.xlu0 %v217, 32
        %v3415 = vpop.permute.xlu0 %3414
        %3416 = vrot.lane.b32.xlu0 %v219, 32
        %v3417 = vpop.permute.xlu0 %3416
        %3418 = vrot.lane.b32.xlu0 %v221, 32
        %v3419 = vpop.permute.xlu0 %3418
        %3420 = vrot.lane.b32.xlu0 %v223, 32
        %v3421 = vpop.permute.xlu0 %3420
        %3422 = vrot.lane.b32.xlu0 %v225, 32
        %v3423 = vpop.permute.xlu0 %3422
        %3424 = vrot.lane.b32.xlu0 %v227, 32
        %v3425 = vpop.permute.xlu0 %3424
        %3426 = vrot.lane.b32.xlu0 %v233, 32
        %v3427 = vpop.permute.xlu0 %3426
        %3428 = vrot.lane.b32.xlu0 %v235, 32
        %v3429 = vpop.permute.xlu0 %3428
        %3430 = vrot.lane.b32.xlu0 %v237, 32
        %v3431 = vpop.permute.xlu0 %3430
        %3432 = vrot.lane.b32.xlu0 %v239, 32
        %v3433 = vpop.permute.xlu0 %3432
        %3434 = vrot.lane.b32.xlu0 %v241, 32
        %v3435 = vpop.permute.xlu0 %3434
        %3436 = vrot.lane.b32.xlu0 %v243, 32
        %v3437 = vpop.permute.xlu0 %3436
        %3438 = vrot.lane.b32.xlu0 %v245, 32
        %v3439 = vpop.permute.xlu0 %3438
        %3440 = vrot.lane.b32.xlu0 %v247, 32
        %v3441 = vpop.permute.xlu0 %3440
        %3442 = vrot.lane.b32.xlu0 %v253, 32
        %v3443 = vpop.permute.xlu0 %3442
        %3444 = vrot.lane.b32.xlu0 %v255, 32
        %v3445 = vpop.permute.xlu0 %3444
        %3446 = vrot.lane.b32.xlu0 %v257, 32
        %v3447 = vpop.permute.xlu0 %3446
        %3448 = vrot.lane.b32.xlu0 %v259, 32
        %v3449 = vpop.permute.xlu0 %3448
        %3450 = vrot.lane.b32.xlu0 %v261, 32
        %v3451 = vpop.permute.xlu0 %3450
        %3452 = vrot.lane.b32.xlu0 %v263, 32
        %v3453 = vpop.permute.xlu0 %3452
        %3454 = vrot.lane.b32.xlu0 %v265, 32
        %v3455 = vpop.permute.xlu0 %3454
        %3456 = vrot.lane.b32.xlu0 %v267, 32
        %v3457 = vpop.permute.xlu0 %3456
        %3458 = vrot.lane.b32.xlu0 %v273, 32
        %v3459 = vpop.permute.xlu0 %3458
        %3460 = vrot.lane.b32.xlu0 %v275, 32
        %v3461 = vpop.permute.xlu0 %3460
        %3462 = vrot.lane.b32.xlu0 %v277, 32
        %v3463 = vpop.permute.xlu0 %3462
        %3464 = vrot.lane.b32.xlu0 %v279, 32
        %v3465 = vpop.permute.xlu0 %3464
        %3466 = vrot.lane.b32.xlu0 %v281, 32
        %v3467 = vpop.permute.xlu0 %3466
        %3468 = vrot.lane.b32.xlu0 %v283, 32
        %v3469 = vpop.permute.xlu0 %3468
        %3470 = vrot.lane.b32.xlu0 %v285, 32
        %v3471 = vpop.permute.xlu0 %3470
        %3472 = vrot.lane.b32.xlu0 %v287, 32
        %v3473 = vpop.permute.xlu0 %3472
        %3506 = vrot.lane.b32.xlu0 %v410, 36
        %v3507 = vpop.permute.xlu0 %3506
        %3508 = vrot.lane.b32.xlu0 %v413, 36
        %v3509 = vpop.permute.xlu0 %3508
        %3510 = vrot.lane.b32.xlu0 %v416, 36
        %v3511 = vpop.permute.xlu0 %3510
        %3512 = vrot.lane.b32.xlu0 %v419, 36
        %v3513 = vpop.permute.xlu0 %3512
        %3514 = vrot.lane.b32.xlu0 %v422, 36
        %v3515 = vpop.permute.xlu0 %3514
        %3516 = vrot.lane.b32.xlu0 %v425, 36
        %v3517 = vpop.permute.xlu0 %3516
        %3518 = vrot.lane.b32.xlu0 %v563, 36
        %v3519 = vpop.permute.xlu0 %3518
        %3520 = vrot.lane.b32.xlu0 %v595, 36
        %v3521 = vpop.permute.xlu0 %3520
        %3522 = vrot.lane.b32.xlu0 %v434, 36
        %v3523 = vpop.permute.xlu0 %3522
        %3524 = vrot.lane.b32.xlu0 %v437, 36
        %v3525 = vpop.permute.xlu0 %3524
        %3526 = vrot.lane.b32.xlu0 %v440, 36
        %v3527 = vpop.permute.xlu0 %3526
        %3528 = vrot.lane.b32.xlu0 %v443, 36
        %v3529 = vpop.permute.xlu0 %3528
        %3530 = vrot.lane.b32.xlu0 %v446, 36
        %v3531 = vpop.permute.xlu0 %3530
        %3532 = vrot.lane.b32.xlu0 %v449, 36
        %v3533 = vpop.permute.xlu0 %3532
        %3534 = vrot.lane.b32.xlu0 %v566, 36
        %v3535 = vpop.permute.xlu0 %3534
        %3536 = vrot.lane.b32.xlu0 %v598, 36
        %v3537 = vpop.permute.xlu0 %3536
        %3538 = vrot.lane.b32.xlu0 %v635, 36
        %v3539 = vpop.permute.xlu0 %3538
        %3540 = vrot.lane.b32.xlu0 %v638, 36
        %v3541 = vpop.permute.xlu0 %3540
        %3542 = vrot.lane.b32.xlu0 %v641, 36
        %v3543 = vpop.permute.xlu0 %3542
        %3544 = vrot.lane.b32.xlu0 %v644, 36
        %v3545 = vpop.permute.xlu0 %3544
        %3546 = vrot.lane.b32.xlu0 %v647, 36
        %v3547 = vpop.permute.xlu0 %3546
        %3548 = vrot.lane.b32.xlu0 %v650, 36
        %v3549 = vpop.permute.xlu0 %3548
        %3550 = vrot.lane.b32.xlu0 %v679, 36
        %v3551 = vpop.permute.xlu0 %3550
        %3552 = vrot.lane.b32.xlu0 %v687, 36
        %v3553 = vpop.permute.xlu0 %3552
        %3554 = vrot.lane.b32.xlu0 %v747, 36
        %v3555 = vpop.permute.xlu0 %3554
        %3556 = vrot.lane.b32.xlu0 %v750, 36
        %v3557 = vpop.permute.xlu0 %3556
        %3558 = vrot.lane.b32.xlu0 %v753, 36
        %v3559 = vpop.permute.xlu0 %3558
        %3560 = vrot.lane.b32.xlu0 %v756, 36
        %v3561 = vpop.permute.xlu0 %3560
        %3562 = vrot.lane.b32.xlu0 %v759, 36
        %v3563 = vpop.permute.xlu0 %3562
        %3564 = vrot.lane.b32.xlu0 %v762, 36
        %v3565 = vpop.permute.xlu0 %3564
        %3566 = vrot.lane.b32.xlu0 %v791, 36
        %v3567 = vpop.permute.xlu0 %3566
        %3568 = vrot.lane.b32.xlu0 %v799, 36
        %v3569 = vpop.permute.xlu0 %3568
        %3602 = vrot.lane.b32.xlu0 %v507, 40
        %v3603 = vpop.permute.xlu0 %3602
        %3604 = vrot.lane.b32.xlu0 %v510, 40
        %v3605 = vpop.permute.xlu0 %3604
        %3606 = vrot.lane.b32.xlu0 %v513, 40
        %v3607 = vpop.permute.xlu0 %3606
        %3608 = vrot.lane.b32.xlu0 %v516, 40
        %v3609 = vpop.permute.xlu0 %3608
        %3610 = vrot.lane.b32.xlu0 %v519, 40
        %v3611 = vpop.permute.xlu0 %3610
        %3612 = vrot.lane.b32.xlu0 %v522, 40
        %v3613 = vpop.permute.xlu0 %3612
        %3614 = vrot.lane.b32.xlu0 %v575, 40
        %v3615 = vpop.permute.xlu0 %3614
        %3616 = vrot.lane.b32.xlu0 %v607, 40
        %v3617 = vpop.permute.xlu0 %3616
        %3618 = vrot.lane.b32.xlu0 %v531, 40
        %v3619 = vpop.permute.xlu0 %3618
        %3620 = vrot.lane.b32.xlu0 %v534, 40
        %v3621 = vpop.permute.xlu0 %3620
        %3622 = vrot.lane.b32.xlu0 %v537, 40
        %v3623 = vpop.permute.xlu0 %3622
        %3624 = vrot.lane.b32.xlu0 %v540, 40
        %v3625 = vpop.permute.xlu0 %3624
        %3626 = vrot.lane.b32.xlu0 %v543, 40
        %v3627 = vpop.permute.xlu0 %3626
        %3628 = vrot.lane.b32.xlu0 %v546, 40
        %v3629 = vpop.permute.xlu0 %3628
        %3630 = vrot.lane.b32.xlu0 %v578, 40
        %v3631 = vpop.permute.xlu0 %3630
        %3632 = vrot.lane.b32.xlu0 %v610, 40
        %v3633 = vpop.permute.xlu0 %3632
        %3634 = vrot.lane.b32.xlu0 %v659, 40
        %v3635 = vpop.permute.xlu0 %3634
        %3636 = vrot.lane.b32.xlu0 %v662, 40
        %v3637 = vpop.permute.xlu0 %3636
        %3638 = vrot.lane.b32.xlu0 %v665, 40
        %v3639 = vpop.permute.xlu0 %3638
        %3640 = vrot.lane.b32.xlu0 %v668, 40
        %v3641 = vpop.permute.xlu0 %3640
        %3642 = vrot.lane.b32.xlu0 %v671, 40
        %v3643 = vpop.permute.xlu0 %3642
        %3644 = vrot.lane.b32.xlu0 %v674, 40
        %v3645 = vpop.permute.xlu0 %3644
        %3646 = vrot.lane.b32.xlu0 %v682, 40
        %v3647 = vpop.permute.xlu0 %3646
        %3648 = vrot.lane.b32.xlu0 %v722, 40
        %v3649 = vpop.permute.xlu0 %3648
        %3650 = vrot.lane.b32.xlu0 %v771, 40
        %v3651 = vpop.permute.xlu0 %3650
        %3652 = vrot.lane.b32.xlu0 %v774, 40
        %v3653 = vpop.permute.xlu0 %3652
        %3654 = vrot.lane.b32.xlu0 %v777, 40
        %v3655 = vpop.permute.xlu0 %3654
        %3656 = vrot.lane.b32.xlu0 %v780, 40
        %v3657 = vpop.permute.xlu0 %3656
        %3658 = vrot.lane.b32.xlu0 %v783, 40
        %v3659 = vpop.permute.xlu0 %3658
        %3660 = vrot.lane.b32.xlu0 %v786, 40
        %v3661 = vpop.permute.xlu0 %3660
        %3662 = vrot.lane.b32.xlu0 %v794, 40
        %v3663 = vpop.permute.xlu0 %3662
        %3664 = vrot.lane.b32.xlu0 %v802, 40
        %v3665 = vpop.permute.xlu0 %3664
        %v3698 = vsel %vm2243, %v386, %v2739
        %v3699 = vsel %vm2243, %v389, %v2741
        %v3700 = vsel %vm2243, %v392, %v2743
        %v3701 = vsel %vm2243, %v395, %v2745
        %v3702 = vsel %vm2243, %v398, %v2747
        %v3703 = vsel %vm2243, %v401, %v2749
        %v3704 = vsel %vm2243, %v560, %v2751
        %v3705 = vsel %vm2243, %v592, %v2753
        %v3706 = vsel %vm2243, %v410, %v2755
        %v3707 = vsel %vm2243, %v413, %v2757
        %v3708 = vsel %vm2243, %v416, %v2759
        %v3709 = vsel %vm2243, %v419, %v2761
        %v3710 = vsel %vm2243, %v422, %v2763
        %v3711 = vsel %vm2243, %v425, %v2765
        %v3712 = vsel %vm2243, %v563, %v2767
        %v3713 = vsel %vm2243, %v595, %v2769
        %v3714 = vsel %vm2243, %v434, %v2771
        %v3715 = vsel %vm2243, %v437, %v2773
        %v3716 = vsel %vm2243, %v440, %v2775
        %v3717 = vsel %vm2243, %v443, %v2777
        %v3718 = vsel %vm2243, %v446, %v2779
        %v3719 = vsel %vm2243, %v449, %v2781
        %v3720 = vsel %vm2243, %v566, %v2783
        %v3721 = vsel %vm2243, %v598, %v2785
        %v3722 = vsel %vm2243, %v635, %v2787
        %v3723 = vsel %vm2243, %v638, %v2789
        %v3724 = vsel %vm2243, %v641, %v2791
        %v3725 = vsel %vm2243, %v644, %v2793
        %v3726 = vsel %vm2243, %v647, %v2795
        %v3727 = vsel %vm2243, %v650, %v2797
        %v3728 = vsel %vm2243, %v679, %v2799
        %v3729 = vsel %vm2243, %v687, %v2801
        %v3730 = vsel %vm2276, %v3698, %v2835
        %v3731 = vsel %vm2276, %v3699, %v2837
        %v3732 = vsel %vm2276, %v3700, %v2839
        %v3733 = vsel %vm2276, %v3701, %v2841
        %v3734 = vsel %vm2276, %v3702, %v2843
        %v3735 = vsel %vm2276, %v3703, %v2845
        %v3736 = vsel %vm2276, %v3704, %v2847
        %v3737 = vsel %vm2276, %v3705, %v2849
        %v3738 = vsel %vm2276, %v3706, %v2851
        %v3739 = vsel %vm2276, %v3707, %v2853
        %v3740 = vsel %vm2276, %v3708, %v2855
        %v3741 = vsel %vm2276, %v3709, %v2857
        %v3742 = vsel %vm2276, %v3710, %v2859
        %v3743 = vsel %vm2276, %v3711, %v2861
        %v3744 = vsel %vm2276, %v3712, %v2863
        %v3745 = vsel %vm2276, %v3713, %v2865
        %v3746 = vsel %vm2276, %v3714, %v2867
        %v3747 = vsel %vm2276, %v3715, %v2869
        %v3748 = vsel %vm2276, %v3716, %v2871
        %v3749 = vsel %vm2276, %v3717, %v2873
        %v3750 = vsel %vm2276, %v3718, %v2875
        %v3751 = vsel %vm2276, %v3719, %v2877
        %v3752 = vsel %vm2276, %v3720, %v2879
        %v3753 = vsel %vm2276, %v3721, %v2881
        %v3754 = vsel %vm2276, %v3722, %v2883
        %v3755 = vsel %vm2276, %v3723, %v2885
        %v3756 = vsel %vm2276, %v3724, %v2887
        %v3757 = vsel %vm2276, %v3725, %v2889
        %v3758 = vsel %vm2276, %v3726, %v2891
        %v3759 = vsel %vm2276, %v3727, %v2893
        %v3760 = vsel %vm2276, %v3728, %v2895
        %v3761 = vsel %vm2276, %v3729, %v2897
        %v3762 = vsel %vm2309, %v3730, %v2931
        %v3763 = vsel %vm2309, %v3731, %v2933
        %v3764 = vsel %vm2309, %v3732, %v2935
        %v3765 = vsel %vm2309, %v3733, %v2937
        %v3766 = vsel %vm2309, %v3734, %v2939
        %v3767 = vsel %vm2309, %v3735, %v2941
        %v3768 = vsel %vm2309, %v3736, %v2943
        %v3769 = vsel %vm2309, %v3737, %v2945
        %v3770 = vsel %vm2309, %v3738, %v2947
        %v3771 = vsel %vm2309, %v3739, %v2949
        %v3772 = vsel %vm2309, %v3740, %v2951
        %v3773 = vsel %vm2309, %v3741, %v2953
        %v3774 = vsel %vm2309, %v3742, %v2955
        %v3775 = vsel %vm2309, %v3743, %v2957
        %v3776 = vsel %vm2309, %v3744, %v2959
        %v3777 = vsel %vm2309, %v3745, %v2961
        %v3778 = vsel %vm2309, %v3746, %v2963
        %v3779 = vsel %vm2309, %v3747, %v2965
        %v3780 = vsel %vm2309, %v3748, %v2967
        %v3781 = vsel %vm2309, %v3749, %v2969
        %v3782 = vsel %vm2309, %v3750, %v2971
        %v3783 = vsel %vm2309, %v3751, %v2973
        %v3784 = vsel %vm2309, %v3752, %v2975
        %v3785 = vsel %vm2309, %v3753, %v2977
        %v3786 = vsel %vm2309, %v3754, %v2979
        %v3787 = vsel %vm2309, %v3755, %v2981
        %v3788 = vsel %vm2309, %v3756, %v2983
        %v3789 = vsel %vm2309, %v3757, %v2985
        %v3790 = vsel %vm2309, %v3758, %v2987
        %v3791 = vsel %vm2309, %v3759, %v2989
        %v3792 = vsel %vm2309, %v3760, %v2991
        %v3793 = vsel %vm2309, %v3761, %v2993
        %v3794 = vsel %vm2342, %v3762, %v3027
        %v3795 = vsel %vm2342, %v3763, %v3029
        %v3796 = vsel %vm2342, %v3764, %v3031
        %v3797 = vsel %vm2342, %v3765, %v3033
        %v3798 = vsel %vm2342, %v3766, %v3035
        %v3799 = vsel %vm2342, %v3767, %v3037
        %v3800 = vsel %vm2342, %v3768, %v3039
        %v3801 = vsel %vm2342, %v3769, %v3041
        %v3802 = vsel %vm2342, %v3770, %v3043
        %v3803 = vsel %vm2342, %v3771, %v3045
        %v3804 = vsel %vm2342, %v3772, %v3047
        %v3805 = vsel %vm2342, %v3773, %v3049
        %v3806 = vsel %vm2342, %v3774, %v3051
        %v3807 = vsel %vm2342, %v3775, %v3053
        %v3808 = vsel %vm2342, %v3776, %v3055
        %v3809 = vsel %vm2342, %v3777, %v3057
        %v3810 = vsel %vm2342, %v3778, %v3059
        %v3811 = vsel %vm2342, %v3779, %v3061
        %v3812 = vsel %vm2342, %v3780, %v3063
        %v3813 = vsel %vm2342, %v3781, %v3065
        %v3814 = vsel %vm2342, %v3782, %v3067
        %v3815 = vsel %vm2342, %v3783, %v3069
        %v3816 = vsel %vm2342, %v3784, %v3071
        %v3817 = vsel %vm2342, %v3785, %v3073
        %v3818 = vsel %vm2342, %v3786, %v3075
        %v3819 = vsel %vm2342, %v3787, %v3077
        %v3820 = vsel %vm2342, %v3788, %v3079
        %v3821 = vsel %vm2342, %v3789, %v3081
        %v3822 = vsel %vm2342, %v3790, %v3083
        %v3823 = vsel %vm2342, %v3791, %v3085
        %v3824 = vsel %vm2342, %v3792, %v3087
        %v3825 = vsel %vm2342, %v3793, %v3089
        %v3826 = vsel %vm2375, %v3794, %v3123
        %v3827 = vsel %vm2375, %v3795, %v3125
        %v3828 = vsel %vm2375, %v3796, %v3127
        %v3829 = vsel %vm2375, %v3797, %v3129
        %v3830 = vsel %vm2375, %v3798, %v3131
        %v3831 = vsel %vm2375, %v3799, %v3133
        %v3832 = vsel %vm2375, %v3800, %v3135
        %v3833 = vsel %vm2375, %v3801, %v3137
        %v3834 = vsel %vm2375, %v3802, %v3139
        %v3835 = vsel %vm2375, %v3803, %v3141
        %v3836 = vsel %vm2375, %v3804, %v3143
        %v3837 = vsel %vm2375, %v3805, %v3145
        %v3838 = vsel %vm2375, %v3806, %v3147
        %v3839 = vsel %vm2375, %v3807, %v3149
        %v3840 = vsel %vm2375, %v3808, %v3151
        %v3841 = vsel %vm2375, %v3809, %v3153
        %v3842 = vsel %vm2375, %v3810, %v3155
        %v3843 = vsel %vm2375, %v3811, %v3157
        %v3844 = vsel %vm2375, %v3812, %v3159
        %v3845 = vsel %vm2375, %v3813, %v3161
        %v3846 = vsel %vm2375, %v3814, %v3163
        %v3847 = vsel %vm2375, %v3815, %v3165
        %v3848 = vsel %vm2375, %v3816, %v3167
        %v3849 = vsel %vm2375, %v3817, %v3169
        %v3850 = vsel %vm2375, %v3818, %v3171
        %v3851 = vsel %vm2375, %v3819, %v3173
        %v3852 = vsel %vm2375, %v3820, %v3175
        %v3853 = vsel %vm2375, %v3821, %v3177
        %v3854 = vsel %vm2375, %v3822, %v3179
        %v3855 = vsel %vm2375, %v3823, %v3181
        %v3856 = vsel %vm2375, %v3824, %v3183
        %v3857 = vsel %vm2375, %v3825, %v3185
        %v3858 = vsel %vm2408, %v3826, %v3219
        %v3859 = vsel %vm2408, %v3827, %v3221
        %v3860 = vsel %vm2408, %v3828, %v3223
        %v3861 = vsel %vm2408, %v3829, %v3225
        %v3862 = vsel %vm2408, %v3830, %v3227
        %v3863 = vsel %vm2408, %v3831, %v3229
        %v3864 = vsel %vm2408, %v3832, %v3231
        %v3865 = vsel %vm2408, %v3833, %v3233
        %v3866 = vsel %vm2408, %v3834, %v3235
        %v3867 = vsel %vm2408, %v3835, %v3237
        %v3868 = vsel %vm2408, %v3836, %v3239
        %v3869 = vsel %vm2408, %v3837, %v3241
        %v3870 = vsel %vm2408, %v3838, %v3243
        %v3871 = vsel %vm2408, %v3839, %v3245
        %v3872 = vsel %vm2408, %v3840, %v3247
        %v3873 = vsel %vm2408, %v3841, %v3249
        %v3874 = vsel %vm2408, %v3842, %v3251
        %v3875 = vsel %vm2408, %v3843, %v3253
        %v3876 = vsel %vm2408, %v3844, %v3255
        %v3877 = vsel %vm2408, %v3845, %v3257
        %v3878 = vsel %vm2408, %v3846, %v3259
        %v3879 = vsel %vm2408, %v3847, %v3261
        %v3880 = vsel %vm2408, %v3848, %v3263
        %v3881 = vsel %vm2408, %v3849, %v3265
        %v3882 = vsel %vm2408, %v3850, %v3267
        %v3883 = vsel %vm2408, %v3851, %v3269
        %v3884 = vsel %vm2408, %v3852, %v3271
        %v3885 = vsel %vm2408, %v3853, %v3273
        %v3886 = vsel %vm2408, %v3854, %v3275
        %v3887 = vsel %vm2408, %v3855, %v3277
        %v3888 = vsel %vm2408, %v3856, %v3279
        %v3889 = vsel %vm2408, %v3857, %v3281
        %v3890 = vsel %vm2441, %v3858, %v3315
        %v3891 = vsel %vm2441, %v3859, %v3317
        %v3892 = vsel %vm2441, %v3860, %v3319
        %v3893 = vsel %vm2441, %v3861, %v3321
        %v3894 = vsel %vm2441, %v3862, %v3323
        %v3895 = vsel %vm2441, %v3863, %v3325
        %v3896 = vsel %vm2441, %v3864, %v3327
        %v3897 = vsel %vm2441, %v3865, %v3329
        %v3898 = vsel %vm2441, %v3866, %v3331
        %v3899 = vsel %vm2441, %v3867, %v3333
        %v3900 = vsel %vm2441, %v3868, %v3335
        %v3901 = vsel %vm2441, %v3869, %v3337
        %v3902 = vsel %vm2441, %v3870, %v3339
        %v3903 = vsel %vm2441, %v3871, %v3341
        %v3904 = vsel %vm2441, %v3872, %v3343
        %v3905 = vsel %vm2441, %v3873, %v3345
        %v3906 = vsel %vm2441, %v3874, %v3347
        %v3907 = vsel %vm2441, %v3875, %v3349
        %v3908 = vsel %vm2441, %v3876, %v3351
        %v3909 = vsel %vm2441, %v3877, %v3353
        %v3910 = vsel %vm2441, %v3878, %v3355
        %v3911 = vsel %vm2441, %v3879, %v3357
        %v3912 = vsel %vm2441, %v3880, %v3359
        %v3913 = vsel %vm2441, %v3881, %v3361
        %v3914 = vsel %vm2441, %v3882, %v3363
        %v3915 = vsel %vm2441, %v3883, %v3365
        %v3916 = vsel %vm2441, %v3884, %v3367
        %v3917 = vsel %vm2441, %v3885, %v3369
        %v3918 = vsel %vm2441, %v3886, %v3371
        %v3919 = vsel %vm2441, %v3887, %v3373
        %v3920 = vsel %vm2441, %v3888, %v3375
        %v3921 = vsel %vm2441, %v3889, %v3377
        %v3922 = vsel %vm2474, %v3890, %v3411
        %v3923 = vsel %vm2474, %v3891, %v3413
        %v3924 = vsel %vm2474, %v3892, %v3415
        %v3925 = vsel %vm2474, %v3893, %v3417
        %v3926 = vsel %vm2474, %v3894, %v3419
        %v3927 = vsel %vm2474, %v3895, %v3421
        %v3928 = vsel %vm2474, %v3896, %v3423
        %v3929 = vsel %vm2474, %v3897, %v3425
        %v3930 = vsel %vm2474, %v3898, %v3427
        %v3931 = vsel %vm2474, %v3899, %v3429
        %v3932 = vsel %vm2474, %v3900, %v3431
        %v3933 = vsel %vm2474, %v3901, %v3433
        %v3934 = vsel %vm2474, %v3902, %v3435
        %v3935 = vsel %vm2474, %v3903, %v3437
        %v3936 = vsel %vm2474, %v3904, %v3439
        %v3937 = vsel %vm2474, %v3905, %v3441
        %v3938 = vsel %vm2474, %v3906, %v3443
        %v3939 = vsel %vm2474, %v3907, %v3445
        %v3940 = vsel %vm2474, %v3908, %v3447
        %v3941 = vsel %vm2474, %v3909, %v3449
        %v3942 = vsel %vm2474, %v3910, %v3451
        %v3943 = vsel %vm2474, %v3911, %v3453
        %v3944 = vsel %vm2474, %v3912, %v3455
        %v3945 = vsel %vm2474, %v3913, %v3457
        %v3946 = vsel %vm2474, %v3914, %v3459
        %v3947 = vsel %vm2474, %v3915, %v3461
        %v3948 = vsel %vm2474, %v3916, %v3463
        %v3949 = vsel %vm2474, %v3917, %v3465
        %v3950 = vsel %vm2474, %v3918, %v3467
        %v3951 = vsel %vm2474, %v3919, %v3469
        %v3952 = vsel %vm2474, %v3920, %v3471
        %v3953 = vsel %vm2474, %v3921, %v3473
        %v3954 = vsel %vm2507, %v3922, %v3507
        %v3955 = vsel %vm2507, %v3923, %v3509
        %v3956 = vsel %vm2507, %v3924, %v3511
        %v3957 = vsel %vm2507, %v3925, %v3513
        %v3958 = vsel %vm2507, %v3926, %v3515
        %v3959 = vsel %vm2507, %v3927, %v3517
        %v3960 = vsel %vm2507, %v3928, %v3519
        %v3961 = vsel %vm2507, %v3929, %v3521
        %v3962 = vsel %vm2507, %v3930, %v3523
        %v3963 = vsel %vm2507, %v3931, %v3525
        %v3964 = vsel %vm2507, %v3932, %v3527
        %v3965 = vsel %vm2507, %v3933, %v3529
        %v3966 = vsel %vm2507, %v3934, %v3531
        %v3967 = vsel %vm2507, %v3935, %v3533
        %v3968 = vsel %vm2507, %v3936, %v3535
        %v3969 = vsel %vm2507, %v3937, %v3537
        %v3970 = vsel %vm2507, %v3938, %v3539
        %v3971 = vsel %vm2507, %v3939, %v3541
        %v3972 = vsel %vm2507, %v3940, %v3543
        %v3973 = vsel %vm2507, %v3941, %v3545
        %v3974 = vsel %vm2507, %v3942, %v3547
        %v3975 = vsel %vm2507, %v3943, %v3549
        %v3976 = vsel %vm2507, %v3944, %v3551
        %v3977 = vsel %vm2507, %v3945, %v3553
        %v3978 = vsel %vm2507, %v3946, %v3555
        %v3979 = vsel %vm2507, %v3947, %v3557
        %v3980 = vsel %vm2507, %v3948, %v3559
        %v3981 = vsel %vm2507, %v3949, %v3561
        %v3982 = vsel %vm2507, %v3950, %v3563
        %v3983 = vsel %vm2507, %v3951, %v3565
        %v3984 = vsel %vm2507, %v3952, %v3567
        %v3985 = vsel %vm2507, %v3953, %v3569
        %v3986 = vsel %vm2540, %v3954, %v3603
        %v3987 = vsel %vm2540, %v3955, %v3605
        %v3988 = vsel %vm2540, %v3956, %v3607
        %v3989 = vsel %vm2540, %v3957, %v3609
        %v3990 = vsel %vm2540, %v3958, %v3611
        %v3991 = vsel %vm2540, %v3959, %v3613
        %v3992 = vsel %vm2540, %v3960, %v3615
        %v3993 = vsel %vm2540, %v3961, %v3617
        %v3994 = vsel %vm2540, %v3962, %v3619
        %v3995 = vsel %vm2540, %v3963, %v3621
        %v3996 = vsel %vm2540, %v3964, %v3623
        %v3997 = vsel %vm2540, %v3965, %v3625
        %v3998 = vsel %vm2540, %v3966, %v3627
        %v3999 = vsel %vm2540, %v3967, %v3629
        %v4000 = vsel %vm2540, %v3968, %v3631
        %v4001 = vsel %vm2540, %v3969, %v3633
        %v4002 = vsel %vm2540, %v3970, %v3635
        %v4003 = vsel %vm2540, %v3971, %v3637
        %v4004 = vsel %vm2540, %v3972, %v3639
        %v4005 = vsel %vm2540, %v3973, %v3641
        %v4006 = vsel %vm2540, %v3974, %v3643
        %v4007 = vsel %vm2540, %v3975, %v3645
        %v4008 = vsel %vm2540, %v3976, %v3647
        %v4009 = vsel %vm2540, %v3977, %v3649
        %v4010 = vsel %vm2540, %v3978, %v3651
        %v4011 = vsel %vm2540, %v3979, %v3653
        %v4012 = vsel %vm2540, %v3980, %v3655
        %v4013 = vsel %vm2540, %v3981, %v3657
        %v4014 = vsel %vm2540, %v3982, %v3659
        %v4015 = vsel %vm2540, %v3983, %v3661
        %v4016 = vsel %vm2540, %v3984, %v3663
        %v4017 = vsel %vm2540, %v3985, %v3665
        %4050 = vrot.lane.b32.xlu0 %v3986, 64
        %v4051 = vpop.permute.xlu0 %4050
        %4052 = vrot.lane.b32.xlu0 %v3987, 64
        %v4053 = vpop.permute.xlu0 %4052
        %4054 = vrot.lane.b32.xlu0 %v3988, 64
        %v4055 = vpop.permute.xlu0 %4054
        %4056 = vrot.lane.b32.xlu0 %v3989, 64
        %v4057 = vpop.permute.xlu0 %4056
        %4058 = vrot.lane.b32.xlu0 %v3990, 64
        %v4059 = vpop.permute.xlu0 %4058
        %4060 = vrot.lane.b32.xlu0 %v3991, 64
        %v4061 = vpop.permute.xlu0 %4060
        %4062 = vrot.lane.b32.xlu0 %v3992, 64
        %v4063 = vpop.permute.xlu0 %4062
        %4064 = vrot.lane.b32.xlu0 %v3993, 64
        %v4065 = vpop.permute.xlu0 %4064
        %4066 = vrot.lane.b32.xlu0 %v3994, 64
        %v4067 = vpop.permute.xlu0 %4066
        %4068 = vrot.lane.b32.xlu0 %v3995, 64
        %v4069 = vpop.permute.xlu0 %4068
        %4070 = vrot.lane.b32.xlu0 %v3996, 64
        %v4071 = vpop.permute.xlu0 %4070
        %4072 = vrot.lane.b32.xlu0 %v3997, 64
        %v4073 = vpop.permute.xlu0 %4072
        %4074 = vrot.lane.b32.xlu0 %v3998, 64
        %v4075 = vpop.permute.xlu0 %4074
        %4076 = vrot.lane.b32.xlu0 %v3999, 64
        %v4077 = vpop.permute.xlu0 %4076
        %4078 = vrot.lane.b32.xlu0 %v4000, 64
        %v4079 = vpop.permute.xlu0 %4078
        %4080 = vrot.lane.b32.xlu0 %v4001, 64
        %v4081 = vpop.permute.xlu0 %4080
        %4082 = vrot.lane.b32.xlu0 %v4002, 64
        %v4083 = vpop.permute.xlu0 %4082
        %4084 = vrot.lane.b32.xlu0 %v4003, 64
        %v4085 = vpop.permute.xlu0 %4084
        %4086 = vrot.lane.b32.xlu0 %v4004, 64
        %v4087 = vpop.permute.xlu0 %4086
        %4088 = vrot.lane.b32.xlu0 %v4005, 64
        %v4089 = vpop.permute.xlu0 %4088
        %4090 = vrot.lane.b32.xlu0 %v4006, 64
        %v4091 = vpop.permute.xlu0 %4090
        %4092 = vrot.lane.b32.xlu0 %v4007, 64
        %v4093 = vpop.permute.xlu0 %4092
        %4094 = vrot.lane.b32.xlu0 %v4008, 64
        %v4095 = vpop.permute.xlu0 %4094
        %4096 = vrot.lane.b32.xlu0 %v4009, 64
        %v4097 = vpop.permute.xlu0 %4096
        %4098 = vrot.lane.b32.xlu0 %v4010, 64
        %v4099 = vpop.permute.xlu0 %4098
        %4100 = vrot.lane.b32.xlu0 %v4011, 64
        %v4101 = vpop.permute.xlu0 %4100
        %4102 = vrot.lane.b32.xlu0 %v4012, 64
        %v4103 = vpop.permute.xlu0 %4102
        %4104 = vrot.lane.b32.xlu0 %v4013, 64
        %v4105 = vpop.permute.xlu0 %4104
        %4106 = vrot.lane.b32.xlu0 %v4014, 64
        %v4107 = vpop.permute.xlu0 %4106
        %4108 = vrot.lane.b32.xlu0 %v4015, 64
        %v4109 = vpop.permute.xlu0 %4108
        %4110 = vrot.lane.b32.xlu0 %v4016, 64
        %v4111 = vpop.permute.xlu0 %4110
        %4112 = vrot.lane.b32.xlu0 %v4017, 64
        %v4113 = vpop.permute.xlu0 %4112
        %vm4146 = vcmask 523264
        %v4147 = vsel %vm4146, %v2706, %v4051
        %v4148 = vsel %vm4146, %v2707, %v4053
        %v4149 = vsel %vm4146, %v2708, %v4055
        %v4150 = vsel %vm4146, %v2709, %v4057
        %v4151 = vsel %vm4146, %v2710, %v4059
        %v4152 = vsel %vm4146, %v2711, %v4061
        %v4153 = vsel %vm4146, %v2712, %v4063
        %v4154 = vsel %vm4146, %v2713, %v4065
        %v4155 = vsel %vm4146, %v2714, %v4067
        %v4156 = vsel %vm4146, %v2715, %v4069
        %v4157 = vsel %vm4146, %v2716, %v4071
        %v4158 = vsel %vm4146, %v2717, %v4073
        %v4159 = vsel %vm4146, %v2718, %v4075
        %v4160 = vsel %vm4146, %v2719, %v4077
        %v4161 = vsel %vm4146, %v2720, %v4079
        %v4162 = vsel %vm4146, %v2721, %v4081
        %v4163 = vsel %vm4146, %v2722, %v4083
        %v4164 = vsel %vm4146, %v2723, %v4085
        %v4165 = vsel %vm4146, %v2724, %v4087
        %v4166 = vsel %vm4146, %v2725, %v4089
        %v4167 = vsel %vm4146, %v2726, %v4091
        %v4168 = vsel %vm4146, %v2727, %v4093
        %v4169 = vsel %vm4146, %v2728, %v4095
        %v4170 = vsel %vm4146, %v2729, %v4097
        %v4171 = vsel %vm4146, %v2730, %v4099
        %v4172 = vsel %vm4146, %v2731, %v4101
        %v4173 = vsel %vm4146, %v2732, %v4103
        %v4174 = vsel %vm4146, %v2733, %v4105
        %v4175 = vsel %vm4146, %v2734, %v4107
        %v4176 = vsel %vm4146, %v2735, %v4109
        %v4177 = vsel %vm4146, %v2736, %v4111
        %v4178 = vsel %vm4146, %v2737, %v4113
        %v4179 = vld [vmem:[%s1] sm:$0xff]
        %v4180 = vld [vmem:[%s2] sm:$0xff]
        %4182 = vset.pattern.permute.xlu0 0
        %4183 = vperm.xlu0 %4182, %v4180
        %v4184 = vpop.permute.xlu0 %4183
        %vm4186 = vcmask 883712
        %v4188 = vsel %vm4186, %v4179, 0
        %v4191 = vsel %vm4186, %v4147, 0
        %v4194 = vsel %vm4186, %v4148, 0
        %v4197 = vsel %vm4186, %v4149, 0
        %v4200 = vsel %vm4186, %v4150, 0
        %v4203 = vsel %vm4186, %v4151, 0
        %v4206 = vsel %vm4186, %v4152, 0
        %v4209 = vsel %vm4186, %v4153, 0
        %v4212 = vsel %vm4186, %v4154, 0
        %v4215 = vsel %vm4186, %v4155, 0
        %v4218 = vsel %vm4186, %v4156, 0
        %v4221 = vsel %vm4186, %v4157, 0
        %v4224 = vsel %vm4186, %v4158, 0
        %v4227 = vsel %vm4186, %v4159, 0
        %v4230 = vsel %vm4186, %v4160, 0
        %v4233 = vsel %vm4186, %v4161, 0
        %v4236 = vsel %vm4186, %v4162, 0
        %v4239 = vsel %vm4186, %v4163, 0
        %v4242 = vsel %vm4186, %v4164, 0
        %v4245 = vsel %vm4186, %v4165, 0
        %v4248 = vsel %vm4186, %v4166, 0
        %v4251 = vsel %vm4186, %v4167, 0
        %v4254 = vsel %vm4186, %v4168, 0
        %v4257 = vsel %vm4186, %v4169, 0
        %v4260 = vsel %vm4186, %v4170, 0
        %v4263 = vsel %vm4186, %v4171, 0
        %v4266 = vsel %vm4186, %v4172, 0
        %v4269 = vsel %vm4186, %v4173, 0
        %v4272 = vsel %vm4186, %v4174, 0
        %v4275 = vsel %vm4186, %v4175, 0
        %v4278 = vsel %vm4186, %v4176, 0
        %v4281 = vsel %vm4186, %v4177, 0
        %v4284 = vsel %vm4186, %v4178, 0
        %4286 = vmatpush.xpose.msra.mxu0 %v4236
        %4287 = vmatpush.xpose.msra.mxu0 %v4233
        %4288 = vmatpush.xpose.msra.mxu0 %v4230
        %4289 = vmatpush.xpose.msra.mxu0 %v4227
        %4290 = vmatpush.xpose.msra.mxu0 %v4224
        %4291 = vmatpush.xpose.msra.mxu0 %v4221
        %4292 = vmatpush.xpose.msra.mxu0 %v4218
        %4293 = vmatpush.xpose.msra.mxu0 %v4215
        %4294 = vmatpush.xpose.msra.mxu0 %v4212
        %4295 = vmatpush.xpose.msra.mxu0 %v4209
        %4296 = vmatpush.xpose.msra.mxu0 %v4206
        %4297 = vmatpush.xpose.msra.mxu0 %v4203
        %4298 = vmatpush.xpose.msra.mxu0 %v4200
        %4299 = vmatpush.xpose.msra.mxu0 %v4197
        %4300 = vmatpush.xpose.msra.mxu0 %v4194
        %4301 = vmatpush.xpose.msra.mxu0 %v4191
        %4302 = vmatmul.f32.gmra.mxu0 %v4188
        %v4303 = vpop.f32.mrf.mxu0
        %v4304 = vadd.f32 %v4184, %v4303
        %4305 = vdwg.mxu0
        %4306 = vmatpush.xpose.msra.mxu0 %v4284
        %4307 = vmatpush.xpose.msra.mxu0 %v4281
        %4308 = vmatpush.xpose.msra.mxu0 %v4278
        %4309 = vmatpush.xpose.msra.mxu0 %v4275
        %4310 = vmatpush.xpose.msra.mxu0 %v4272
        %4311 = vmatpush.xpose.msra.mxu0 %v4269
        %4312 = vmatpush.xpose.msra.mxu0 %v4266
        %4313 = vmatpush.xpose.msra.mxu0 %v4263
        %4314 = vmatpush.xpose.msra.mxu0 %v4260
        %4315 = vmatpush.xpose.msra.mxu0 %v4257
        %4316 = vmatpush.xpose.msra.mxu0 %v4254
        %4317 = vmatpush.xpose.msra.mxu0 %v4251
        %4318 = vmatpush.xpose.msra.mxu0 %v4248
        %4319 = vmatpush.xpose.msra.mxu0 %v4245
        %4320 = vmatpush.xpose.msra.mxu0 %v4242
        %4321 = vmatpush.xpose.msra.mxu0 %v4239
        %4322 = vmatmul.f32.gmra.mxu0 %v4188
        %v4323 = vpop.f32.mrf.mxu0
        %v4324 = vadd.f32 %v4184, %v4323
        %4325 = vdwg.mxu0
        %4326 = vst [vmem:[%s163] sm:$0xff] %v4304
        %4327 = vst [vmem:[%s163 + $0x8] sm:$0xff] %v4324
        %s4328 = sand.u32 %s93, 1
        %s4329 = scalar_lea.sflag [#allocation3], %s4328
        %s4330 = sand.u32 %s93, 1
        %s4331 = smul.addr %s4330, 16
        %s4332 = scalar_lea.vmem [#allocation2], %s4331
        // Predicated region
        $region33: #{tpu_custom_call.1} parent=31 // pred_check
          %p4333 = pneg %p103
        $region34: #{tpu_custom_call.1} parent=31 // pred_check_branch
          %4335 = sbr.rel (%p4333) target = $region36
        $region35: #{tpu_custom_call.1} parent=31 // pred_region
          %4337 = vsyncadd %s4329, 0
          %s4338 = smul.addr %s17, 2
          %s4339 = smul.addr %s4338, 8
          %s4340 = scalar_lea.hbm %s3, %s4339
          %s4342 = sshll.u32 %s4332, 4
          %s4343 = int_to_ptr.vmem [resolvable:$true] %s4342
          %s4344 = sshll.u32 %s4340, 4
          %s4345 = int_to_ptr.hbm [resolvable:$true] %s4344
          %4347 = dma.vmem_to_hbm [thread:$0]  %s4343, 256, %s4345, %s4329
        $region36: #{tpu_custom_call.1} parent=31 // pred_fallthru
          _
      $region32: #{tpu_custom_call.1} parent=5 // pred_fallthru
        _
      %p4348 = scmp.le.s32.totalorder 2, %s12
      // Predicated region
      $region37: #{tpu_custom_call.1} parent=5 // pred_check
        %p4349 = pneg %p4348
      $region38: #{tpu_custom_call.1} parent=5 // pred_check_branch
        %4351 = sbr.rel (%p4349) target = $region40
      $region39: #{tpu_custom_call.1} parent=5 // pred_region
        %s4352 = ssub.s32 %s12, 2
        // Predicated region
        $region41: #{tpu_custom_call.1} parent=39 // pred_check
          %p4353 = pneg %p109
        $region42: #{tpu_custom_call.1} parent=39 // pred_check_branch
          %4355 = sbr.rel (%p4353) target = $region44
        $region43: #{tpu_custom_call.1} parent=39 // pred_region
          %s4356 = sand.u32 %s94, 1
          %s4357 = scalar_lea.sflag [#allocation3], %s4356
          %s4358 = sand.u32 %s94, 1
          %s4359 = smul.addr %s4358, 16
          %s4360 = scalar_lea.vmem [#allocation2], %s4359
          %4362 = dma.done %s4357, 256
        $region44: #{tpu_custom_call.1} parent=39 // pred_fallthru
          _
      $region40: #{tpu_custom_call.1} parent=5 // pred_fallthru
        _
    $region6: #{tpu_custom_call.1} parent=1 // loop_footer
      %s16 = sadd.s32 1, %s12
    $region7: #{tpu_custom_call.1} parent=1 // loop_footer_branch
      %11 = sbr.rel target = $region3
    $region8: #{tpu_custom_call.1} parent=1 // loop_exit
      _
    %4363 = vsyncpa [#allocation3], 1
    %s4364 = scalar_lea.sflag [#allocation3], 1
    %4365 = vsyncpa %s4364, 1

</llo_original>
